<compile_context>
chip_gen: v7x
topology: tpu7x:2x2x1
jax: 0.10.0
libtpu: 0.0.40
codegen_flags: <defaults>
</compile_context>

<pallas_src>
import functools

import numpy as np

import jax
import jax.numpy as jnp
from jax.experimental import pallas as pl
from jax.experimental.pallas import tpu as pltpu

EPS = 1e-5


# ---------------------------------------------------------------------------
# Fused kernel (single grid step).
# ---------------------------------------------------------------------------
def output_transition_kernel(
    x_ref,       # (N, Cin, DHW)            input, spatial volume flattened on lanes
    w1_ref,      # (Cout, 27*Cin_p + 8)     folded conv1 weights + bias column
    mask_ref,    # (27, DHW)                0/1 boundary mask per tap (shared across channels)
    gamma_ref,   # (Cout, 1)
    beta_ref,    # (Cout, 1)
    w2_ref,      # (Cout, Cout)             1x1x1 conv weights (row = output channel)
    b2_ref,      # (Cout, 1)
    o_ref,       # (N, Cout, DHW)
    xpad_ref,    # scratch VMEM (Cin_p, DHW + 2*PAD)   lane-padded input slab
    col_ref,     # scratch VMEM (27*Cin_p + 8, DHW)    staged tap columns (+ ones row)
    y1_ref,      # scratch VMEM (Cout, N*DHW)          conv1 output, resident in VMEM
    *, N, D, H, W, Cin, Cout, PAD,
):
    DHW = D * H * W
    Cin_p = xpad_ref.shape[0]
    n_taps = 27

    # One-time zeroing: halo lanes + padded channel rows of the slab, and the zero rows of
    # the bias block in the staged column, must read as 0.0.
    xpad_ref[...] = jnp.zeros_like(xpad_ref)
    col_ref[...] = jnp.zeros_like(col_ref)
    # Constant-ones row -> the bias column of w1_ref contributes b1 to every voxel.
    col_ref[n_taps * Cin_p:n_taps * Cin_p + 1, :] = jnp.ones((1, DHW), jnp.float32)

    # ---------------- 3x3x3 conv (+ folded bias) per batch element ----------------
    for n in range(N):                                   # N is tiny; static unroll.
        # Lane-aligned copy into the slab interior (rows >= Cin and the halo stay zero).
        xpad_ref[0:Cin, PAD:PAD + DHW] = x_ref[n]

        # Stage all 27 masked taps into VMEM with full-width, lane-dense stores.
        for kd in range(3):
            for kh in range(3):
                for kw in range(3):
                    t = kd * 9 + kh * 3 + kw
                    start = PAD + (kd - 1) * H * W + (kh - 1) * W + (kw - 1)
                    # Static lane-shifted view; cross-row / out-of-volume reads are killed
                    # by the broadcast 0/1 mask (padded channel rows are zero already).
                    col_ref[t * Cin_p:(t + 1) * Cin_p, :] = (
                        xpad_ref[:, start:start + DHW] * mask_ref[t:t + 1, :])

        # Single deep contraction over all taps + bias row: (Cout, K) x (K, DHW).
        y1_ref[:, n * DHW:(n + 1) * DHW] = jnp.dot(
            w1_ref[...], col_ref[...], preferred_element_type=jnp.float32)

    # ---------------- BatchNorm (training batch stats) + ReLU + 1x1x1 conv --------------
    y1 = y1_ref[...]                                     # (Cout, N*DHW)
    inv_cnt = 1.0 / float(N * DHW)
    mean = jnp.sum(y1, axis=-1, keepdims=True) * inv_cnt            # (Cout, 1)
    cent = y1 - mean
    var = jnp.sum(cent * cent, axis=-1, keepdims=True) * inv_cnt    # (Cout, 1)
    scale = gamma_ref[...] * jax.lax.rsqrt(var + EPS)
    shift = beta_ref[...] - mean * scale

    z = jnp.maximum(y1 * scale + shift, 0.0)                        # (Cout, N*DHW)
    out = jnp.dot(w2_ref[...], z, preferred_element_type=jnp.float32) + b2_ref[...]

    # Lane-dense stores (DHW is a multiple of 128), one per batch element.
    for n in range(N):
        o_ref[n] = out[:, n * DHW:(n + 1) * DHW].astype(o_ref.dtype)


# ---------------------------------------------------------------------------
# Wrapper.  x is NCDHW (same layout as the PyTorch module).
# ---------------------------------------------------------------------------
def output_transition_forward(x, params):
    """x: (N, Cin, D, H, W) float32 -> (N, Cout, D, H, W) float32."""
    N, Cin, D, H, W = x.shape
    DHW = D * H * W
    w1 = params["w1"]                          # (3, 3, 3, Cin, Cout)  (DHWIO)
    Cout = w1.shape[-1]

    # Channel padding to a sublane multiple -> aligned staging of taps.
    Cin_p = ((Cin + 7) // 8) * 8
    # Lane halo for the flattened volume, rounded up to a 128 multiple.
    PAD = ((H * W + W + 1 + 127) // 128) * 128
    K = 27 * Cin_p + 8                          # folded taps + bias block

    # ---- one-time weight plumbing: w1g[co, t*Cin_p + ci] = w1[kd,kh,kw,ci,co] ----
    w1t = jnp.transpose(w1, (4, 0, 1, 2, 3))                       # (Cout, 3, 3, 3, Cin)
    w1t = jnp.pad(w1t, ((0, 0), (0, 0), (0, 0), (0, 0), (0, Cin_p - Cin)))
    w1g = w1t.reshape(Cout, 27 * Cin_p)
    bias_block = jnp.concatenate(
        [params["b1"].reshape(Cout, 1), jnp.zeros((Cout, 7), jnp.float32)], axis=1)
    w1g = jnp.concatenate([w1g, bias_block], axis=1)               # (Cout, K)

    # ---- static 0/1 boundary masks, one row per tap (host-side numpy constants) ----
    dd = np.arange(D)[:, None, None]
    hh = np.arange(H)[None, :, None]
    ww = np.arange(W)[None, None, :]
    masks = np.zeros((27, DHW), np.float32)
    for kd in range(3):
        for kh in range(3):
            for kw in range(3):
                valid = ((dd + kd - 1 >= 0) & (dd + kd - 1 < D) &
                         (hh + kh - 1 >= 0) & (hh + kh - 1 < H) &
                         (ww + kw - 1 >= 0) & (ww + kw - 1 < W))
                masks[kd * 9 + kh * 3 + kw, :] = valid.reshape(-1).astype(np.float32)
    masks = jnp.asarray(masks)

    x_flat = x.reshape(N, Cin, DHW)                                # free reshape (NCDHW)
    gamma = params["gamma"].reshape(Cout, 1)
    beta = params["beta"].reshape(Cout, 1)
    w2 = params["w2"].T                                            # (out_ch, in_ch)
    b2 = params["b2"].reshape(Cout, 1)

    kern = functools.partial(output_transition_kernel,
                             N=N, D=D, H=H, W=W, Cin=Cin, Cout=Cout, PAD=PAD)

    out_flat = pl.pallas_call(
        kern,
        grid=(1,),   # single step: everything fits VMEM at these sizes
        in_specs=[
            pl.BlockSpec((N, Cin, DHW), lambda i: (0, 0, 0)),
            pl.BlockSpec((Cout, K), lambda i: (0, 0)),
            pl.BlockSpec((27, DHW), lambda i: (0, 0)),
            pl.BlockSpec((Cout, 1), lambda i: (0, 0)),
            pl.BlockSpec((Cout, 1), lambda i: (0, 0)),
            pl.BlockSpec((Cout, Cout), lambda i: (0, 0)),
            pl.BlockSpec((Cout, 1), lambda i: (0, 0)),
        ],
        out_specs=pl.BlockSpec((N, Cout, DHW), lambda i: (0, 0, 0)),
        out_shape=jax.ShapeDtypeStruct((N, Cout, DHW), jnp.float32),
        scratch_shapes=[
            pltpu.VMEM((Cin_p, DHW + 2 * PAD), jnp.float32),   # lane-padded input slab
            pltpu.VMEM((K, DHW), jnp.float32),                 # staged tap columns
            pltpu.VMEM((Cout, N * DHW), jnp.float32),          # conv1 output (no HBM trip)
        ],
        compiler_params=pltpu.CompilerParams(
            dimension_semantics=("arbitrary",),
            vmem_limit_bytes=32 * 1024 * 1024,
        ),
    )(x_flat, w1g, masks, gamma, beta, w2, b2)

    return out_flat.reshape(N, Cout, D, H, W)


# ---------------------------------------------------------------------------
# Pure-JAX reference (NCDHW), training-mode BatchNorm semantics.
# ---------------------------------------------------------------------------
def output_transition_reference(x, params):
    y = jax.lax.conv_general_dilated(
        x, params["w1"], window_strides=(1, 1, 1), padding="SAME",
        dimension_numbers=("NCDHW", "DHWIO", "NCDHW"),
    ) + params["b1"][None, :, None, None, None]
    mean = jnp.mean(y, axis=(0, 2, 3, 4), keepdims=True)
    var = jnp.mean((y - mean) ** 2, axis=(0, 2, 3, 4), keepdims=True)
    g = params["gamma"][None, :, None, None, None]
    b = params["beta"][None, :, None, None, None]
    z = jnp.maximum((y - mean) / jnp.sqrt(var + EPS) * g + b, 0.0)
    out = jnp.einsum("ncdhw,ck->nkdhw", z, params["w2"])
    return out + params["b2"][None, :, None, None, None]


if __name__ == "__main__":
    # Small deterministic problem: N=2, Cin=4, D=H=W=8, out_ch=9 (NCDHW like PyTorch).
    N, Cin, Cout = 2, 4, 9
    D = H = W = 8

    key = jax.random.PRNGKey(0)
    k1, k2, k3, k4, k5, k6, k7 = jax.random.split(key, 7)
    params = {
        "w1": 0.1 * jax.random.normal(k1, (3, 3, 3, Cin, Cout), jnp.float32),
        "b1": 0.1 * jax.random.normal(k2, (Cout,), jnp.float32),
        "gamma": 1.0 + 0.1 * jax.random.normal(k3, (Cout,), jnp.float32),
        "beta": 0.1 * jax.random.normal(k4, (Cout,), jnp.float32),
        "w2": 0.1 * jax.random.normal(k5, (Cout, Cout), jnp.float32),
        "b2": 0.1 * jax.random.normal(k6, (Cout,), jnp.float32),
    }
    x = jax.random.normal(k7, (N, Cin, D, H, W), jnp.float32)

    out = jax.block_until_ready(output_transition_forward(x, params))
    ref = jax.block_until_ready(output_transition_reference(x, params))

    assert out.shape == (N, Cout, D, H, W), out.shape
    max_err = float(jnp.max(jnp.abs(out - ref)))
    assert jnp.allclose(out, ref, rtol=1e-3, atol=1e-3), max_err

    print("KERNEL_OK")
</pallas_src>

<mosaic_0001>
module attributes {stable_mosaic.version = 11 : i64} {
  func.func @output_transition_kernel(%arg0: i32, %arg1: memref<2x4x512xf32, #tpu.memory_space<vmem>>, %arg2: memref<9x224xf32, #tpu.memory_space<vmem>>, %arg3: memref<27x512xf32, #tpu.memory_space<vmem>>, %arg4: memref<9x1xf32, #tpu.memory_space<vmem>>, %arg5: memref<9x1xf32, #tpu.memory_space<vmem>>, %arg6: memref<9x9xf32, #tpu.memory_space<vmem>>, %arg7: memref<9x1xf32, #tpu.memory_space<vmem>>, %arg8: memref<2x9x512xf32, #tpu.memory_space<vmem>>, %arg9: memref<8x768xf32, #tpu.memory_space<vmem>>, %arg10: memref<224x512xf32, #tpu.memory_space<vmem>>, %arg11: memref<9x1024xf32, #tpu.memory_space<vmem>>) attributes {dimension_semantics = [#tpu.dimension_semantics<arbitrary>], iteration_bounds = array<i64: 1>, scalar_prefetch = 0 : i64, scratch_operands = 3 : i64, tpu.core_type = #tpu.core_type<tc>, window_params = [{pipeline_mode = #tpu.pipeline_mode<synchronous>, transform_indices = @transform_0, window_bounds = array<i64: 2, 4, 512>}, {pipeline_mode = #tpu.pipeline_mode<synchronous>, transform_indices = @transform_1, window_bounds = array<i64: 9, 224>}, {pipeline_mode = #tpu.pipeline_mode<synchronous>, transform_indices = @transform_2, window_bounds = array<i64: 27, 512>}, {pipeline_mode = #tpu.pipeline_mode<synchronous>, transform_indices = @transform_3, window_bounds = array<i64: 9, 1>}, {pipeline_mode = #tpu.pipeline_mode<synchronous>, transform_indices = @transform_4, window_bounds = array<i64: 9, 1>}, {pipeline_mode = #tpu.pipeline_mode<synchronous>, transform_indices = @transform_5, window_bounds = array<i64: 9, 9>}, {pipeline_mode = #tpu.pipeline_mode<synchronous>, transform_indices = @transform_6, window_bounds = array<i64: 9, 1>}, {pipeline_mode = #tpu.pipeline_mode<synchronous>, transform_indices = @transform_7, window_bounds = array<i64: 2, 9, 512>}]} {
    %cst = arith.constant 0.000000e+00 : f32
    %0 = vector.broadcast %cst : f32 to vector<8x768xf32>
    %c0 = arith.constant 0 : index
    %c0_0 = arith.constant 0 : index
    %1 = vector.load %arg9[%c0, %c0_0] : memref<8x768xf32, #tpu.memory_space<vmem>>, vector<8x768xf32>
    tpu.vector_store %arg9[%c0, %c0_0], %0 {strides = array<i32>} : memref<8x768xf32, #tpu.memory_space<vmem>>, vector<8x768xf32>,
    %cst_1 = arith.constant 0.000000e+00 : f32
    %2 = vector.broadcast %cst_1 : f32 to vector<224x512xf32>
    %c0_2 = arith.constant 0 : index
    %c0_3 = arith.constant 0 : index
    %3 = vector.load %arg10[%c0_2, %c0_3] : memref<224x512xf32, #tpu.memory_space<vmem>>, vector<224x512xf32>
    tpu.vector_store %arg10[%c0_2, %c0_3], %2 {strides = array<i32>} : memref<224x512xf32, #tpu.memory_space<vmem>>, vector<224x512xf32>,
    %cst_4 = arith.constant 1.000000e+00 : f32
    %4 = vector.broadcast %cst_4 : f32 to vector<1x512xf32>
    %c216 = arith.constant 216 : index
    %c0_5 = arith.constant 0 : index
    %5 = vector.load %arg10[%c216, %c0_5] : memref<224x512xf32, #tpu.memory_space<vmem>>, vector<1x512xf32>
    tpu.vector_store %arg10[%c216, %c0_5], %4 {strides = array<i32>} : memref<224x512xf32, #tpu.memory_space<vmem>>, vector<1x512xf32>,
    %c0_6 = arith.constant 0 : index
    %c0_7 = arith.constant 0 : index
    %c0_8 = arith.constant 0 : index
    %6 = vector.load %arg1[%c0_6, %c0_7, %c0_8] : memref<2x4x512xf32, #tpu.memory_space<vmem>>, vector<1x4x512xf32>
    %7 = vector.shape_cast %6 : vector<1x4x512xf32> to vector<4x512xf32>
    %c0_9 = arith.constant 0 : index
    %c128 = arith.constant 128 : index
    %8 = vector.load %arg9[%c0_9, %c128] : memref<8x768xf32, #tpu.memory_space<vmem>>, vector<4x512xf32>
    tpu.vector_store %arg9[%c0_9, %c128], %7 {strides = array<i32>} : memref<8x768xf32, #tpu.memory_space<vmem>>, vector<4x512xf32>,
    %c0_10 = arith.constant 0 : index
    %c55 = arith.constant 55 : index
    %9 = vector.load %arg9[%c0_10, %c55] : memref<8x768xf32, #tpu.memory_space<vmem>>, vector<8x512xf32>
    %c0_11 = arith.constant 0 : index
    %c0_12 = arith.constant 0 : index
    %10 = vector.load %arg3[%c0_11, %c0_12] : memref<27x512xf32, #tpu.memory_space<vmem>>, vector<1x512xf32>
    %11 = vector.broadcast %10 : vector<1x512xf32> to vector<8x512xf32>
    %12 = arith.mulf %9, %11 : vector<8x512xf32>
    %c0_13 = arith.constant 0 : index
    %c0_14 = arith.constant 0 : index
    %13 = vector.load %arg10[%c0_13, %c0_14] : memref<224x512xf32, #tpu.memory_space<vmem>>, vector<8x512xf32>
    tpu.vector_store %arg10[%c0_13, %c0_14], %12 {strides = array<i32>} : memref<224x512xf32, #tpu.memory_space<vmem>>, vector<8x512xf32>,
    %c0_15 = arith.constant 0 : index
    %c56 = arith.constant 56 : index
    %14 = vector.load %arg9[%c0_15, %c56] : memref<8x768xf32, #tpu.memory_space<vmem>>, vector<8x512xf32>
    %c1 = arith.constant 1 : index
    %c0_16 = arith.constant 0 : index
    %15 = vector.load %arg3[%c1, %c0_16] : memref<27x512xf32, #tpu.memory_space<vmem>>, vector<1x512xf32>
    %16 = vector.broadcast %15 : vector<1x512xf32> to vector<8x512xf32>
    %17 = arith.mulf %14, %16 : vector<8x512xf32>
    %c8 = arith.constant 8 : index
    %c0_17 = arith.constant 0 : index
    %18 = vector.load %arg10[%c8, %c0_17] : memref<224x512xf32, #tpu.memory_space<vmem>>, vector<8x512xf32>
    tpu.vector_store %arg10[%c8, %c0_17], %17 {strides = array<i32>} : memref<224x512xf32, #tpu.memory_space<vmem>>, vector<8x512xf32>,
    %c0_18 = arith.constant 0 : index
    %c57 = arith.constant 57 : index
    %19 = vector.load %arg9[%c0_18, %c57] : memref<8x768xf32, #tpu.memory_space<vmem>>, vector<8x512xf32>
    %c2 = arith.constant 2 : index
    %c0_19 = arith.constant 0 : index
    %20 = vector.load %arg3[%c2, %c0_19] : memref<27x512xf32, #tpu.memory_space<vmem>>, vector<1x512xf32>
    %21 = vector.broadcast %20 : vector<1x512xf32> to vector<8x512xf32>
    %22 = arith.mulf %19, %21 : vector<8x512xf32>
    %c16 = arith.constant 16 : index
    %c0_20 = arith.constant 0 : index
    %23 = vector.load %arg10[%c16, %c0_20] : memref<224x512xf32, #tpu.memory_space<vmem>>, vector<8x512xf32>
    tpu.vector_store %arg10[%c16, %c0_20], %22 {strides = array<i32>} : memref<224x512xf32, #tpu.memory_space<vmem>>, vector<8x512xf32>,
    %c0_21 = arith.constant 0 : index
    %c63 = arith.constant 63 : index
    %24 = vector.load %arg9[%c0_21, %c63] : memref<8x768xf32, #tpu.memory_space<vmem>>, vector<8x512xf32>
    %c3 = arith.constant 3 : index
    %c0_22 = arith.constant 0 : index
    %25 = vector.load %arg3[%c3, %c0_22] : memref<27x512xf32, #tpu.memory_space<vmem>>, vector<1x512xf32>
    %26 = vector.broadcast %25 : vector<1x512xf32> to vector<8x512xf32>
    %27 = arith.mulf %24, %26 : vector<8x512xf32>
    %c24 = arith.constant 24 : index
    %c0_23 = arith.constant 0 : index
    %28 = vector.load %arg10[%c24, %c0_23] : memref<224x512xf32, #tpu.memory_space<vmem>>, vector<8x512xf32>
    tpu.vector_store %arg10[%c24, %c0_23], %27 {strides = array<i32>} : memref<224x512xf32, #tpu.memory_space<vmem>>, vector<8x512xf32>,
    %c0_24 = arith.constant 0 : index
    %c64 = arith.constant 64 : index
    %29 = vector.load %arg9[%c0_24, %c64] : memref<8x768xf32, #tpu.memory_space<vmem>>, vector<8x512xf32>
    %c4 = arith.constant 4 : index
    %c0_25 = arith.constant 0 : index
    %30 = vector.load %arg3[%c4, %c0_25] : memref<27x512xf32, #tpu.memory_space<vmem>>, vector<1x512xf32>
    %31 = vector.broadcast %30 : vector<1x512xf32> to vector<8x512xf32>
    %32 = arith.mulf %29, %31 : vector<8x512xf32>
    %c32 = arith.constant 32 : index
    %c0_26 = arith.constant 0 : index
    %33 = vector.load %arg10[%c32, %c0_26] : memref<224x512xf32, #tpu.memory_space<vmem>>, vector<8x512xf32>
    tpu.vector_store %arg10[%c32, %c0_26], %32 {strides = array<i32>} : memref<224x512xf32, #tpu.memory_space<vmem>>, vector<8x512xf32>,
    %c0_27 = arith.constant 0 : index
    %c65 = arith.constant 65 : index
    %34 = vector.load %arg9[%c0_27, %c65] : memref<8x768xf32, #tpu.memory_space<vmem>>, vector<8x512xf32>
    %c5 = arith.constant 5 : index
    %c0_28 = arith.constant 0 : index
    %35 = vector.load %arg3[%c5, %c0_28] : memref<27x512xf32, #tpu.memory_space<vmem>>, vector<1x512xf32>
    %36 = vector.broadcast %35 : vector<1x512xf32> to vector<8x512xf32>
    %37 = arith.mulf %34, %36 : vector<8x512xf32>
    %c40 = arith.constant 40 : index
    %c0_29 = arith.constant 0 : index
    %38 = vector.load %arg10[%c40, %c0_29] : memref<224x512xf32, #tpu.memory_space<vmem>>, vector<8x512xf32>
    tpu.vector_store %arg10[%c40, %c0_29], %37 {strides = array<i32>} : memref<224x512xf32, #tpu.memory_space<vmem>>, vector<8x512xf32>,
    %c0_30 = arith.constant 0 : index
    %c71 = arith.constant 71 : index
    %39 = vector.load %arg9[%c0_30, %c71] : memref<8x768xf32, #tpu.memory_space<vmem>>, vector<8x512xf32>
    %c6 = arith.constant 6 : index
    %c0_31 = arith.constant 0 : index
    %40 = vector.load %arg3[%c6, %c0_31] : memref<27x512xf32, #tpu.memory_space<vmem>>, vector<1x512xf32>
    %41 = vector.broadcast %40 : vector<1x512xf32> to vector<8x512xf32>
    %42 = arith.mulf %39, %41 : vector<8x512xf32>
    %c48 = arith.constant 48 : index
    %c0_32 = arith.constant 0 : index
    %43 = vector.load %arg10[%c48, %c0_32] : memref<224x512xf32, #tpu.memory_space<vmem>>, vector<8x512xf32>
    tpu.vector_store %arg10[%c48, %c0_32], %42 {strides = array<i32>} : memref<224x512xf32, #tpu.memory_space<vmem>>, vector<8x512xf32>,
    %c0_33 = arith.constant 0 : index
    %c72 = arith.constant 72 : index
    %44 = vector.load %arg9[%c0_33, %c72] : memref<8x768xf32, #tpu.memory_space<vmem>>, vector<8x512xf32>
    %c7 = arith.constant 7 : index
    %c0_34 = arith.constant 0 : index
    %45 = vector.load %arg3[%c7, %c0_34] : memref<27x512xf32, #tpu.memory_space<vmem>>, vector<1x512xf32>
    %46 = vector.broadcast %45 : vector<1x512xf32> to vector<8x512xf32>
    %47 = arith.mulf %44, %46 : vector<8x512xf32>
    %c56_35 = arith.constant 56 : index
    %c0_36 = arith.constant 0 : index
    %48 = vector.load %arg10[%c56_35, %c0_36] : memref<224x512xf32, #tpu.memory_space<vmem>>, vector<8x512xf32>
    tpu.vector_store %arg10[%c56_35, %c0_36], %47 {strides = array<i32>} : memref<224x512xf32, #tpu.memory_space<vmem>>, vector<8x512xf32>,
    %c0_37 = arith.constant 0 : index
    %c73 = arith.constant 73 : index
    %49 = vector.load %arg9[%c0_37, %c73] : memref<8x768xf32, #tpu.memory_space<vmem>>, vector<8x512xf32>
    %c8_38 = arith.constant 8 : index
    %c0_39 = arith.constant 0 : index
    %50 = vector.load %arg3[%c8_38, %c0_39] : memref<27x512xf32, #tpu.memory_space<vmem>>, vector<1x512xf32>
    %51 = vector.broadcast %50 : vector<1x512xf32> to vector<8x512xf32>
    %52 = arith.mulf %49, %51 : vector<8x512xf32>
    %c64_40 = arith.constant 64 : index
    %c0_41 = arith.constant 0 : index
    %53 = vector.load %arg10[%c64_40, %c0_41] : memref<224x512xf32, #tpu.memory_space<vmem>>, vector<8x512xf32>
    tpu.vector_store %arg10[%c64_40, %c0_41], %52 {strides = array<i32>} : memref<224x512xf32, #tpu.memory_space<vmem>>, vector<8x512xf32>,
    %c0_42 = arith.constant 0 : index
    %c119 = arith.constant 119 : index
    %54 = vector.load %arg9[%c0_42, %c119] : memref<8x768xf32, #tpu.memory_space<vmem>>, vector<8x512xf32>
    %c9 = arith.constant 9 : index
    %c0_43 = arith.constant 0 : index
    %55 = vector.load %arg3[%c9, %c0_43] : memref<27x512xf32, #tpu.memory_space<vmem>>, vector<1x512xf32>
    %56 = vector.broadcast %55 : vector<1x512xf32> to vector<8x512xf32>
    %57 = arith.mulf %54, %56 : vector<8x512xf32>
    %c72_44 = arith.constant 72 : index
    %c0_45 = arith.constant 0 : index
    %58 = vector.load %arg10[%c72_44, %c0_45] : memref<224x512xf32, #tpu.memory_space<vmem>>, vector<8x512xf32>
    tpu.vector_store %arg10[%c72_44, %c0_45], %57 {strides = array<i32>} : memref<224x512xf32, #tpu.memory_space<vmem>>, vector<8x512xf32>,
    %c0_46 = arith.constant 0 : index
    %c120 = arith.constant 120 : index
    %59 = vector.load %arg9[%c0_46, %c120] : memref<8x768xf32, #tpu.memory_space<vmem>>, vector<8x512xf32>
    %c10 = arith.constant 10 : index
    %c0_47 = arith.constant 0 : index
    %60 = vector.load %arg3[%c10, %c0_47] : memref<27x512xf32, #tpu.memory_space<vmem>>, vector<1x512xf32>
    %61 = vector.broadcast %60 : vector<1x512xf32> to vector<8x512xf32>
    %62 = arith.mulf %59, %61 : vector<8x512xf32>
    %c80 = arith.constant 80 : index
    %c0_48 = arith.constant 0 : index
    %63 = vector.load %arg10[%c80, %c0_48] : memref<224x512xf32, #tpu.memory_space<vmem>>, vector<8x512xf32>
    tpu.vector_store %arg10[%c80, %c0_48], %62 {strides = array<i32>} : memref<224x512xf32, #tpu.memory_space<vmem>>, vector<8x512xf32>,
    %c0_49 = arith.constant 0 : index
    %c121 = arith.constant 121 : index
    %64 = vector.load %arg9[%c0_49, %c121] : memref<8x768xf32, #tpu.memory_space<vmem>>, vector<8x512xf32>
    %c11 = arith.constant 11 : index
    %c0_50 = arith.constant 0 : index
    %65 = vector.load %arg3[%c11, %c0_50] : memref<27x512xf32, #tpu.memory_space<vmem>>, vector<1x512xf32>
    %66 = vector.broadcast %65 : vector<1x512xf32> to vector<8x512xf32>
    %67 = arith.mulf %64, %66 : vector<8x512xf32>
    %c88 = arith.constant 88 : index
    %c0_51 = arith.constant 0 : index
    %68 = vector.load %arg10[%c88, %c0_51] : memref<224x512xf32, #tpu.memory_space<vmem>>, vector<8x512xf32>
    tpu.vector_store %arg10[%c88, %c0_51], %67 {strides = array<i32>} : memref<224x512xf32, #tpu.memory_space<vmem>>, vector<8x512xf32>,
    %c0_52 = arith.constant 0 : index
    %c127 = arith.constant 127 : index
    %69 = vector.load %arg9[%c0_52, %c127] : memref<8x768xf32, #tpu.memory_space<vmem>>, vector<8x512xf32>
    %c12 = arith.constant 12 : index
    %c0_53 = arith.constant 0 : index
    %70 = vector.load %arg3[%c12, %c0_53] : memref<27x512xf32, #tpu.memory_space<vmem>>, vector<1x512xf32>
    %71 = vector.broadcast %70 : vector<1x512xf32> to vector<8x512xf32>
    %72 = arith.mulf %69, %71 : vector<8x512xf32>
    %c96 = arith.constant 96 : index
    %c0_54 = arith.constant 0 : index
    %73 = vector.load %arg10[%c96, %c0_54] : memref<224x512xf32, #tpu.memory_space<vmem>>, vector<8x512xf32>
    tpu.vector_store %arg10[%c96, %c0_54], %72 {strides = array<i32>} : memref<224x512xf32, #tpu.memory_space<vmem>>, vector<8x512xf32>,
    %c0_55 = arith.constant 0 : index
    %c128_56 = arith.constant 128 : index
    %74 = vector.load %arg9[%c0_55, %c128_56] : memref<8x768xf32, #tpu.memory_space<vmem>>, vector<8x512xf32>
    %c13 = arith.constant 13 : index
    %c0_57 = arith.constant 0 : index
    %75 = vector.load %arg3[%c13, %c0_57] : memref<27x512xf32, #tpu.memory_space<vmem>>, vector<1x512xf32>
    %76 = vector.broadcast %75 : vector<1x512xf32> to vector<8x512xf32>
    %77 = arith.mulf %74, %76 : vector<8x512xf32>
    %c104 = arith.constant 104 : index
    %c0_58 = arith.constant 0 : index
    %78 = vector.load %arg10[%c104, %c0_58] : memref<224x512xf32, #tpu.memory_space<vmem>>, vector<8x512xf32>
    tpu.vector_store %arg10[%c104, %c0_58], %77 {strides = array<i32>} : memref<224x512xf32, #tpu.memory_space<vmem>>, vector<8x512xf32>,
    %c0_59 = arith.constant 0 : index
    %c129 = arith.constant 129 : index
    %79 = vector.load %arg9[%c0_59, %c129] : memref<8x768xf32, #tpu.memory_space<vmem>>, vector<8x512xf32>
    %c14 = arith.constant 14 : index
    %c0_60 = arith.constant 0 : index
    %80 = vector.load %arg3[%c14, %c0_60] : memref<27x512xf32, #tpu.memory_space<vmem>>, vector<1x512xf32>
    %81 = vector.broadcast %80 : vector<1x512xf32> to vector<8x512xf32>
    %82 = arith.mulf %79, %81 : vector<8x512xf32>
    %c112 = arith.constant 112 : index
    %c0_61 = arith.constant 0 : index
    %83 = vector.load %arg10[%c112, %c0_61] : memref<224x512xf32, #tpu.memory_space<vmem>>, vector<8x512xf32>
    tpu.vector_store %arg10[%c112, %c0_61], %82 {strides = array<i32>} : memref<224x512xf32, #tpu.memory_space<vmem>>, vector<8x512xf32>,
    %c0_62 = arith.constant 0 : index
    %c135 = arith.constant 135 : index
    %84 = vector.load %arg9[%c0_62, %c135] : memref<8x768xf32, #tpu.memory_space<vmem>>, vector<8x512xf32>
    %c15 = arith.constant 15 : index
    %c0_63 = arith.constant 0 : index
    %85 = vector.load %arg3[%c15, %c0_63] : memref<27x512xf32, #tpu.memory_space<vmem>>, vector<1x512xf32>
    %86 = vector.broadcast %85 : vector<1x512xf32> to vector<8x512xf32>
    %87 = arith.mulf %84, %86 : vector<8x512xf32>
    %c120_64 = arith.constant 120 : index
    %c0_65 = arith.constant 0 : index
    %88 = vector.load %arg10[%c120_64, %c0_65] : memref<224x512xf32, #tpu.memory_space<vmem>>, vector<8x512xf32>
    tpu.vector_store %arg10[%c120_64, %c0_65], %87 {strides = array<i32>} : memref<224x512xf32, #tpu.memory_space<vmem>>, vector<8x512xf32>,
    %c0_66 = arith.constant 0 : index
    %c136 = arith.constant 136 : index
    %89 = vector.load %arg9[%c0_66, %c136] : memref<8x768xf32, #tpu.memory_space<vmem>>, vector<8x512xf32>
    %c16_67 = arith.constant 16 : index
    %c0_68 = arith.constant 0 : index
    %90 = vector.load %arg3[%c16_67, %c0_68] : memref<27x512xf32, #tpu.memory_space<vmem>>, vector<1x512xf32>
    %91 = vector.broadcast %90 : vector<1x512xf32> to vector<8x512xf32>
    %92 = arith.mulf %89, %91 : vector<8x512xf32>
    %c128_69 = arith.constant 128 : index
    %c0_70 = arith.constant 0 : index
    %93 = vector.load %arg10[%c128_69, %c0_70] : memref<224x512xf32, #tpu.memory_space<vmem>>, vector<8x512xf32>
    tpu.vector_store %arg10[%c128_69, %c0_70], %92 {strides = array<i32>} : memref<224x512xf32, #tpu.memory_space<vmem>>, vector<8x512xf32>,
    %c0_71 = arith.constant 0 : index
    %c137 = arith.constant 137 : index
    %94 = vector.load %arg9[%c0_71, %c137] : memref<8x768xf32, #tpu.memory_space<vmem>>, vector<8x512xf32>
    %c17 = arith.constant 17 : index
    %c0_72 = arith.constant 0 : index
    %95 = vector.load %arg3[%c17, %c0_72] : memref<27x512xf32, #tpu.memory_space<vmem>>, vector<1x512xf32>
    %96 = vector.broadcast %95 : vector<1x512xf32> to vector<8x512xf32>
    %97 = arith.mulf %94, %96 : vector<8x512xf32>
    %c136_73 = arith.constant 136 : index
    %c0_74 = arith.constant 0 : index
    %98 = vector.load %arg10[%c136_73, %c0_74] : memref<224x512xf32, #tpu.memory_space<vmem>>, vector<8x512xf32>
    tpu.vector_store %arg10[%c136_73, %c0_74], %97 {strides = array<i32>} : memref<224x512xf32, #tpu.memory_space<vmem>>, vector<8x512xf32>,
    %c0_75 = arith.constant 0 : index
    %c183 = arith.constant 183 : index
    %99 = vector.load %arg9[%c0_75, %c183] : memref<8x768xf32, #tpu.memory_space<vmem>>, vector<8x512xf32>
    %c18 = arith.constant 18 : index
    %c0_76 = arith.constant 0 : index
    %100 = vector.load %arg3[%c18, %c0_76] : memref<27x512xf32, #tpu.memory_space<vmem>>, vector<1x512xf32>
    %101 = vector.broadcast %100 : vector<1x512xf32> to vector<8x512xf32>
    %102 = arith.mulf %99, %101 : vector<8x512xf32>
    %c144 = arith.constant 144 : index
    %c0_77 = arith.constant 0 : index
    %103 = vector.load %arg10[%c144, %c0_77] : memref<224x512xf32, #tpu.memory_space<vmem>>, vector<8x512xf32>
    tpu.vector_store %arg10[%c144, %c0_77], %102 {strides = array<i32>} : memref<224x512xf32, #tpu.memory_space<vmem>>, vector<8x512xf32>,
    %c0_78 = arith.constant 0 : index
    %c184 = arith.constant 184 : index
    %104 = vector.load %arg9[%c0_78, %c184] : memref<8x768xf32, #tpu.memory_space<vmem>>, vector<8x512xf32>
    %c19 = arith.constant 19 : index
    %c0_79 = arith.constant 0 : index
    %105 = vector.load %arg3[%c19, %c0_79] : memref<27x512xf32, #tpu.memory_space<vmem>>, vector<1x512xf32>
    %106 = vector.broadcast %105 : vector<1x512xf32> to vector<8x512xf32>
    %107 = arith.mulf %104, %106 : vector<8x512xf32>
    %c152 = arith.constant 152 : index
    %c0_80 = arith.constant 0 : index
    %108 = vector.load %arg10[%c152, %c0_80] : memref<224x512xf32, #tpu.memory_space<vmem>>, vector<8x512xf32>
    tpu.vector_store %arg10[%c152, %c0_80], %107 {strides = array<i32>} : memref<224x512xf32, #tpu.memory_space<vmem>>, vector<8x512xf32>,
    %c0_81 = arith.constant 0 : index
    %c185 = arith.constant 185 : index
    %109 = vector.load %arg9[%c0_81, %c185] : memref<8x768xf32, #tpu.memory_space<vmem>>, vector<8x512xf32>
    %c20 = arith.constant 20 : index
    %c0_82 = arith.constant 0 : index
    %110 = vector.load %arg3[%c20, %c0_82] : memref<27x512xf32, #tpu.memory_space<vmem>>, vector<1x512xf32>
    %111 = vector.broadcast %110 : vector<1x512xf32> to vector<8x512xf32>
    %112 = arith.mulf %109, %111 : vector<8x512xf32>
    %c160 = arith.constant 160 : index
    %c0_83 = arith.constant 0 : index
    %113 = vector.load %arg10[%c160, %c0_83] : memref<224x512xf32, #tpu.memory_space<vmem>>, vector<8x512xf32>
    tpu.vector_store %arg10[%c160, %c0_83], %112 {strides = array<i32>} : memref<224x512xf32, #tpu.memory_space<vmem>>, vector<8x512xf32>,
    %c0_84 = arith.constant 0 : index
    %c191 = arith.constant 191 : index
    %114 = vector.load %arg9[%c0_84, %c191] : memref<8x768xf32, #tpu.memory_space<vmem>>, vector<8x512xf32>
    %c21 = arith.constant 21 : index
    %c0_85 = arith.constant 0 : index
    %115 = vector.load %arg3[%c21, %c0_85] : memref<27x512xf32, #tpu.memory_space<vmem>>, vector<1x512xf32>
    %116 = vector.broadcast %115 : vector<1x512xf32> to vector<8x512xf32>
    %117 = arith.mulf %114, %116 : vector<8x512xf32>
    %c168 = arith.constant 168 : index
    %c0_86 = arith.constant 0 : index
    %118 = vector.load %arg10[%c168, %c0_86] : memref<224x512xf32, #tpu.memory_space<vmem>>, vector<8x512xf32>
    tpu.vector_store %arg10[%c168, %c0_86], %117 {strides = array<i32>} : memref<224x512xf32, #tpu.memory_space<vmem>>, vector<8x512xf32>,
    %c0_87 = arith.constant 0 : index
    %c192 = arith.constant 192 : index
    %119 = vector.load %arg9[%c0_87, %c192] : memref<8x768xf32, #tpu.memory_space<vmem>>, vector<8x512xf32>
    %c22 = arith.constant 22 : index
    %c0_88 = arith.constant 0 : index
    %120 = vector.load %arg3[%c22, %c0_88] : memref<27x512xf32, #tpu.memory_space<vmem>>, vector<1x512xf32>
    %121 = vector.broadcast %120 : vector<1x512xf32> to vector<8x512xf32>
    %122 = arith.mulf %119, %121 : vector<8x512xf32>
    %c176 = arith.constant 176 : index
    %c0_89 = arith.constant 0 : index
    %123 = vector.load %arg10[%c176, %c0_89] : memref<224x512xf32, #tpu.memory_space<vmem>>, vector<8x512xf32>
    tpu.vector_store %arg10[%c176, %c0_89], %122 {strides = array<i32>} : memref<224x512xf32, #tpu.memory_space<vmem>>, vector<8x512xf32>,
    %c0_90 = arith.constant 0 : index
    %c193 = arith.constant 193 : index
    %124 = vector.load %arg9[%c0_90, %c193] : memref<8x768xf32, #tpu.memory_space<vmem>>, vector<8x512xf32>
    %c23 = arith.constant 23 : index
    %c0_91 = arith.constant 0 : index
    %125 = vector.load %arg3[%c23, %c0_91] : memref<27x512xf32, #tpu.memory_space<vmem>>, vector<1x512xf32>
    %126 = vector.broadcast %125 : vector<1x512xf32> to vector<8x512xf32>
    %127 = arith.mulf %124, %126 : vector<8x512xf32>
    %c184_92 = arith.constant 184 : index
    %c0_93 = arith.constant 0 : index
    %128 = vector.load %arg10[%c184_92, %c0_93] : memref<224x512xf32, #tpu.memory_space<vmem>>, vector<8x512xf32>
    tpu.vector_store %arg10[%c184_92, %c0_93], %127 {strides = array<i32>} : memref<224x512xf32, #tpu.memory_space<vmem>>, vector<8x512xf32>,
    %c0_94 = arith.constant 0 : index
    %c199 = arith.constant 199 : index
    %129 = vector.load %arg9[%c0_94, %c199] : memref<8x768xf32, #tpu.memory_space<vmem>>, vector<8x512xf32>
    %c24_95 = arith.constant 24 : index
    %c0_96 = arith.constant 0 : index
    %130 = vector.load %arg3[%c24_95, %c0_96] : memref<27x512xf32, #tpu.memory_space<vmem>>, vector<1x512xf32>
    %131 = vector.broadcast %130 : vector<1x512xf32> to vector<8x512xf32>
    %132 = arith.mulf %129, %131 : vector<8x512xf32>
    %c192_97 = arith.constant 192 : index
    %c0_98 = arith.constant 0 : index
    %133 = vector.load %arg10[%c192_97, %c0_98] : memref<224x512xf32, #tpu.memory_space<vmem>>, vector<8x512xf32>
    tpu.vector_store %arg10[%c192_97, %c0_98], %132 {strides = array<i32>} : memref<224x512xf32, #tpu.memory_space<vmem>>, vector<8x512xf32>,
    %c0_99 = arith.constant 0 : index
    %c200 = arith.constant 200 : index
    %134 = vector.load %arg9[%c0_99, %c200] : memref<8x768xf32, #tpu.memory_space<vmem>>, vector<8x512xf32>
    %c25 = arith.constant 25 : index
    %c0_100 = arith.constant 0 : index
    %135 = vector.load %arg3[%c25, %c0_100] : memref<27x512xf32, #tpu.memory_space<vmem>>, vector<1x512xf32>
    %136 = vector.broadcast %135 : vector<1x512xf32> to vector<8x512xf32>
    %137 = arith.mulf %134, %136 : vector<8x512xf32>
    %c200_101 = arith.constant 200 : index
    %c0_102 = arith.constant 0 : index
    %138 = vector.load %arg10[%c200_101, %c0_102] : memref<224x512xf32, #tpu.memory_space<vmem>>, vector<8x512xf32>
    tpu.vector_store %arg10[%c200_101, %c0_102], %137 {strides = array<i32>} : memref<224x512xf32, #tpu.memory_space<vmem>>, vector<8x512xf32>,
    %c0_103 = arith.constant 0 : index
    %c201 = arith.constant 201 : index
    %139 = vector.load %arg9[%c0_103, %c201] : memref<8x768xf32, #tpu.memory_space<vmem>>, vector<8x512xf32>
    %c26 = arith.constant 26 : index
    %c0_104 = arith.constant 0 : index
    %140 = vector.load %arg3[%c26, %c0_104] : memref<27x512xf32, #tpu.memory_space<vmem>>, vector<1x512xf32>
    %141 = vector.broadcast %140 : vector<1x512xf32> to vector<8x512xf32>
    %142 = arith.mulf %139, %141 : vector<8x512xf32>
    %c208 = arith.constant 208 : index
    %c0_105 = arith.constant 0 : index
    %143 = vector.load %arg10[%c208, %c0_105] : memref<224x512xf32, #tpu.memory_space<vmem>>, vector<8x512xf32>
    tpu.vector_store %arg10[%c208, %c0_105], %142 {strides = array<i32>} : memref<224x512xf32, #tpu.memory_space<vmem>>, vector<8x512xf32>,
    %c0_106 = arith.constant 0 : index
    %c0_107 = arith.constant 0 : index
    %144 = vector.load %arg2[%c0_106, %c0_107] : memref<9x224xf32, #tpu.memory_space<vmem>>, vector<9x224xf32>
    %c0_108 = arith.constant 0 : index
    %c0_109 = arith.constant 0 : index
    %145 = vector.load %arg10[%c0_108, %c0_109] : memref<224x512xf32, #tpu.memory_space<vmem>>, vector<224x512xf32>
    %cst_110 = arith.constant dense<0.000000e+00> : vector<9x512xf32>
    %146 = tpu.matmul %144, %145, %cst_110 {dimension_numbers = #tpu.dot_dimension_numbers<[1], [0], [0], [1], [0, 0, 1, 1], [], []>} : vector<9x224xf32>, vector<224x512xf32>, vector<9x512xf32> -> vector<9x512xf32>
    %c0_111 = arith.constant 0 : index
    %c0_112 = arith.constant 0 : index
    %147 = vector.load %arg11[%c0_111, %c0_112] : memref<9x1024xf32, #tpu.memory_space<vmem>>, vector<9x512xf32>
    tpu.vector_store %arg11[%c0_111, %c0_112], %146 {strides = array<i32>} : memref<9x1024xf32, #tpu.memory_space<vmem>>, vector<9x512xf32>,
    %c1_113 = arith.constant 1 : index
    %c0_114 = arith.constant 0 : index
    %c0_115 = arith.constant 0 : index
    %148 = vector.load %arg1[%c1_113, %c0_114, %c0_115] : memref<2x4x512xf32, #tpu.memory_space<vmem>>, vector<1x4x512xf32>
    %149 = vector.shape_cast %148 : vector<1x4x512xf32> to vector<4x512xf32>
    %c0_116 = arith.constant 0 : index
    %c128_117 = arith.constant 128 : index
    %150 = vector.load %arg9[%c0_116, %c128_117] : memref<8x768xf32, #tpu.memory_space<vmem>>, vector<4x512xf32>
    tpu.vector_store %arg9[%c0_116, %c128_117], %149 {strides = array<i32>} : memref<8x768xf32, #tpu.memory_space<vmem>>, vector<4x512xf32>,
    %c0_118 = arith.constant 0 : index
    %c55_119 = arith.constant 55 : index
    %151 = vector.load %arg9[%c0_118, %c55_119] : memref<8x768xf32, #tpu.memory_space<vmem>>, vector<8x512xf32>
    %c0_120 = arith.constant 0 : index
    %c0_121 = arith.constant 0 : index
    %152 = vector.load %arg3[%c0_120, %c0_121] : memref<27x512xf32, #tpu.memory_space<vmem>>, vector<1x512xf32>
    %153 = vector.broadcast %152 : vector<1x512xf32> to vector<8x512xf32>
    %154 = arith.mulf %151, %153 : vector<8x512xf32>
    %c0_122 = arith.constant 0 : index
    %c0_123 = arith.constant 0 : index
    %155 = vector.load %arg10[%c0_122, %c0_123] : memref<224x512xf32, #tpu.memory_space<vmem>>, vector<8x512xf32>
    tpu.vector_store %arg10[%c0_122, %c0_123], %154 {strides = array<i32>} : memref<224x512xf32, #tpu.memory_space<vmem>>, vector<8x512xf32>,
    %c0_124 = arith.constant 0 : index
    %c56_125 = arith.constant 56 : index
    %156 = vector.load %arg9[%c0_124, %c56_125] : memref<8x768xf32, #tpu.memory_space<vmem>>, vector<8x512xf32>
    %c1_126 = arith.constant 1 : index
    %c0_127 = arith.constant 0 : index
    %157 = vector.load %arg3[%c1_126, %c0_127] : memref<27x512xf32, #tpu.memory_space<vmem>>, vector<1x512xf32>
    %158 = vector.broadcast %157 : vector<1x512xf32> to vector<8x512xf32>
    %159 = arith.mulf %156, %158 : vector<8x512xf32>
    %c8_128 = arith.constant 8 : index
    %c0_129 = arith.constant 0 : index
    %160 = vector.load %arg10[%c8_128, %c0_129] : memref<224x512xf32, #tpu.memory_space<vmem>>, vector<8x512xf32>
    tpu.vector_store %arg10[%c8_128, %c0_129], %159 {strides = array<i32>} : memref<224x512xf32, #tpu.memory_space<vmem>>, vector<8x512xf32>,
    %c0_130 = arith.constant 0 : index
    %c57_131 = arith.constant 57 : index
    %161 = vector.load %arg9[%c0_130, %c57_131] : memref<8x768xf32, #tpu.memory_space<vmem>>, vector<8x512xf32>
    %c2_132 = arith.constant 2 : index
    %c0_133 = arith.constant 0 : index
    %162 = vector.load %arg3[%c2_132, %c0_133] : memref<27x512xf32, #tpu.memory_space<vmem>>, vector<1x512xf32>
    %163 = vector.broadcast %162 : vector<1x512xf32> to vector<8x512xf32>
    %164 = arith.mulf %161, %163 : vector<8x512xf32>
    %c16_134 = arith.constant 16 : index
    %c0_135 = arith.constant 0 : index
    %165 = vector.load %arg10[%c16_134, %c0_135] : memref<224x512xf32, #tpu.memory_space<vmem>>, vector<8x512xf32>
    tpu.vector_store %arg10[%c16_134, %c0_135], %164 {strides = array<i32>} : memref<224x512xf32, #tpu.memory_space<vmem>>, vector<8x512xf32>,
    %c0_136 = arith.constant 0 : index
    %c63_137 = arith.constant 63 : index
    %166 = vector.load %arg9[%c0_136, %c63_137] : memref<8x768xf32, #tpu.memory_space<vmem>>, vector<8x512xf32>
    %c3_138 = arith.constant 3 : index
    %c0_139 = arith.constant 0 : index
    %167 = vector.load %arg3[%c3_138, %c0_139] : memref<27x512xf32, #tpu.memory_space<vmem>>, vector<1x512xf32>
    %168 = vector.broadcast %167 : vector<1x512xf32> to vector<8x512xf32>
    %169 = arith.mulf %166, %168 : vector<8x512xf32>
    %c24_140 = arith.constant 24 : index
    %c0_141 = arith.constant 0 : index
    %170 = vector.load %arg10[%c24_140, %c0_141] : memref<224x512xf32, #tpu.memory_space<vmem>>, vector<8x512xf32>
    tpu.vector_store %arg10[%c24_140, %c0_141], %169 {strides = array<i32>} : memref<224x512xf32, #tpu.memory_space<vmem>>, vector<8x512xf32>,
    %c0_142 = arith.constant 0 : index
    %c64_143 = arith.constant 64 : index
    %171 = vector.load %arg9[%c0_142, %c64_143] : memref<8x768xf32, #tpu.memory_space<vmem>>, vector<8x512xf32>
    %c4_144 = arith.constant 4 : index
    %c0_145 = arith.constant 0 : index
    %172 = vector.load %arg3[%c4_144, %c0_145] : memref<27x512xf32, #tpu.memory_space<vmem>>, vector<1x512xf32>
    %173 = vector.broadcast %172 : vector<1x512xf32> to vector<8x512xf32>
    %174 = arith.mulf %171, %173 : vector<8x512xf32>
    %c32_146 = arith.constant 32 : index
    %c0_147 = arith.constant 0 : index
    %175 = vector.load %arg10[%c32_146, %c0_147] : memref<224x512xf32, #tpu.memory_space<vmem>>, vector<8x512xf32>
    tpu.vector_store %arg10[%c32_146, %c0_147], %174 {strides = array<i32>} : memref<224x512xf32, #tpu.memory_space<vmem>>, vector<8x512xf32>,
    %c0_148 = arith.constant 0 : index
    %c65_149 = arith.constant 65 : index
    %176 = vector.load %arg9[%c0_148, %c65_149] : memref<8x768xf32, #tpu.memory_space<vmem>>, vector<8x512xf32>
    %c5_150 = arith.constant 5 : index
    %c0_151 = arith.constant 0 : index
    %177 = vector.load %arg3[%c5_150, %c0_151] : memref<27x512xf32, #tpu.memory_space<vmem>>, vector<1x512xf32>
    %178 = vector.broadcast %177 : vector<1x512xf32> to vector<8x512xf32>
    %179 = arith.mulf %176, %178 : vector<8x512xf32>
    %c40_152 = arith.constant 40 : index
    %c0_153 = arith.constant 0 : index
    %180 = vector.load %arg10[%c40_152, %c0_153] : memref<224x512xf32, #tpu.memory_space<vmem>>, vector<8x512xf32>
    tpu.vector_store %arg10[%c40_152, %c0_153], %179 {strides = array<i32>} : memref<224x512xf32, #tpu.memory_space<vmem>>, vector<8x512xf32>,
    %c0_154 = arith.constant 0 : index
    %c71_155 = arith.constant 71 : index
    %181 = vector.load %arg9[%c0_154, %c71_155] : memref<8x768xf32, #tpu.memory_space<vmem>>, vector<8x512xf32>
    %c6_156 = arith.constant 6 : index
    %c0_157 = arith.constant 0 : index
    %182 = vector.load %arg3[%c6_156, %c0_157] : memref<27x512xf32, #tpu.memory_space<vmem>>, vector<1x512xf32>
    %183 = vector.broadcast %182 : vector<1x512xf32> to vector<8x512xf32>
    %184 = arith.mulf %181, %183 : vector<8x512xf32>
    %c48_158 = arith.constant 48 : index
    %c0_159 = arith.constant 0 : index
    %185 = vector.load %arg10[%c48_158, %c0_159] : memref<224x512xf32, #tpu.memory_space<vmem>>, vector<8x512xf32>
    tpu.vector_store %arg10[%c48_158, %c0_159], %184 {strides = array<i32>} : memref<224x512xf32, #tpu.memory_space<vmem>>, vector<8x512xf32>,
    %c0_160 = arith.constant 0 : index
    %c72_161 = arith.constant 72 : index
    %186 = vector.load %arg9[%c0_160, %c72_161] : memref<8x768xf32, #tpu.memory_space<vmem>>, vector<8x512xf32>
    %c7_162 = arith.constant 7 : index
    %c0_163 = arith.constant 0 : index
    %187 = vector.load %arg3[%c7_162, %c0_163] : memref<27x512xf32, #tpu.memory_space<vmem>>, vector<1x512xf32>
    %188 = vector.broadcast %187 : vector<1x512xf32> to vector<8x512xf32>
    %189 = arith.mulf %186, %188 : vector<8x512xf32>
    %c56_164 = arith.constant 56 : index
    %c0_165 = arith.constant 0 : index
    %190 = vector.load %arg10[%c56_164, %c0_165] : memref<224x512xf32, #tpu.memory_space<vmem>>, vector<8x512xf32>
    tpu.vector_store %arg10[%c56_164, %c0_165], %189 {strides = array<i32>} : memref<224x512xf32, #tpu.memory_space<vmem>>, vector<8x512xf32>,
    %c0_166 = arith.constant 0 : index
    %c73_167 = arith.constant 73 : index
    %191 = vector.load %arg9[%c0_166, %c73_167] : memref<8x768xf32, #tpu.memory_space<vmem>>, vector<8x512xf32>
    %c8_168 = arith.constant 8 : index
    %c0_169 = arith.constant 0 : index
    %192 = vector.load %arg3[%c8_168, %c0_169] : memref<27x512xf32, #tpu.memory_space<vmem>>, vector<1x512xf32>
    %193 = vector.broadcast %192 : vector<1x512xf32> to vector<8x512xf32>
    %194 = arith.mulf %191, %193 : vector<8x512xf32>
    %c64_170 = arith.constant 64 : index
    %c0_171 = arith.constant 0 : index
    %195 = vector.load %arg10[%c64_170, %c0_171] : memref<224x512xf32, #tpu.memory_space<vmem>>, vector<8x512xf32>
    tpu.vector_store %arg10[%c64_170, %c0_171], %194 {strides = array<i32>} : memref<224x512xf32, #tpu.memory_space<vmem>>, vector<8x512xf32>,
    %c0_172 = arith.constant 0 : index
    %c119_173 = arith.constant 119 : index
    %196 = vector.load %arg9[%c0_172, %c119_173] : memref<8x768xf32, #tpu.memory_space<vmem>>, vector<8x512xf32>
    %c9_174 = arith.constant 9 : index
    %c0_175 = arith.constant 0 : index
    %197 = vector.load %arg3[%c9_174, %c0_175] : memref<27x512xf32, #tpu.memory_space<vmem>>, vector<1x512xf32>
    %198 = vector.broadcast %197 : vector<1x512xf32> to vector<8x512xf32>
    %199 = arith.mulf %196, %198 : vector<8x512xf32>
    %c72_176 = arith.constant 72 : index
    %c0_177 = arith.constant 0 : index
    %200 = vector.load %arg10[%c72_176, %c0_177] : memref<224x512xf32, #tpu.memory_space<vmem>>, vector<8x512xf32>
    tpu.vector_store %arg10[%c72_176, %c0_177], %199 {strides = array<i32>} : memref<224x512xf32, #tpu.memory_space<vmem>>, vector<8x512xf32>,
    %c0_178 = arith.constant 0 : index
    %c120_179 = arith.constant 120 : index
    %201 = vector.load %arg9[%c0_178, %c120_179] : memref<8x768xf32, #tpu.memory_space<vmem>>, vector<8x512xf32>
    %c10_180 = arith.constant 10 : index
    %c0_181 = arith.constant 0 : index
    %202 = vector.load %arg3[%c10_180, %c0_181] : memref<27x512xf32, #tpu.memory_space<vmem>>, vector<1x512xf32>
    %203 = vector.broadcast %202 : vector<1x512xf32> to vector<8x512xf32>
    %204 = arith.mulf %201, %203 : vector<8x512xf32>
    %c80_182 = arith.constant 80 : index
    %c0_183 = arith.constant 0 : index
    %205 = vector.load %arg10[%c80_182, %c0_183] : memref<224x512xf32, #tpu.memory_space<vmem>>, vector<8x512xf32>
    tpu.vector_store %arg10[%c80_182, %c0_183], %204 {strides = array<i32>} : memref<224x512xf32, #tpu.memory_space<vmem>>, vector<8x512xf32>,
    %c0_184 = arith.constant 0 : index
    %c121_185 = arith.constant 121 : index
    %206 = vector.load %arg9[%c0_184, %c121_185] : memref<8x768xf32, #tpu.memory_space<vmem>>, vector<8x512xf32>
    %c11_186 = arith.constant 11 : index
    %c0_187 = arith.constant 0 : index
    %207 = vector.load %arg3[%c11_186, %c0_187] : memref<27x512xf32, #tpu.memory_space<vmem>>, vector<1x512xf32>
    %208 = vector.broadcast %207 : vector<1x512xf32> to vector<8x512xf32>
    %209 = arith.mulf %206, %208 : vector<8x512xf32>
    %c88_188 = arith.constant 88 : index
    %c0_189 = arith.constant 0 : index
    %210 = vector.load %arg10[%c88_188, %c0_189] : memref<224x512xf32, #tpu.memory_space<vmem>>, vector<8x512xf32>
    tpu.vector_store %arg10[%c88_188, %c0_189], %209 {strides = array<i32>} : memref<224x512xf32, #tpu.memory_space<vmem>>, vector<8x512xf32>,
    %c0_190 = arith.constant 0 : index
    %c127_191 = arith.constant 127 : index
    %211 = vector.load %arg9[%c0_190, %c127_191] : memref<8x768xf32, #tpu.memory_space<vmem>>, vector<8x512xf32>
    %c12_192 = arith.constant 12 : index
    %c0_193 = arith.constant 0 : index
    %212 = vector.load %arg3[%c12_192, %c0_193] : memref<27x512xf32, #tpu.memory_space<vmem>>, vector<1x512xf32>
    %213 = vector.broadcast %212 : vector<1x512xf32> to vector<8x512xf32>
    %214 = arith.mulf %211, %213 : vector<8x512xf32>
    %c96_194 = arith.constant 96 : index
    %c0_195 = arith.constant 0 : index
    %215 = vector.load %arg10[%c96_194, %c0_195] : memref<224x512xf32, #tpu.memory_space<vmem>>, vector<8x512xf32>
    tpu.vector_store %arg10[%c96_194, %c0_195], %214 {strides = array<i32>} : memref<224x512xf32, #tpu.memory_space<vmem>>, vector<8x512xf32>,
    %c0_196 = arith.constant 0 : index
    %c128_197 = arith.constant 128 : index
    %216 = vector.load %arg9[%c0_196, %c128_197] : memref<8x768xf32, #tpu.memory_space<vmem>>, vector<8x512xf32>
    %c13_198 = arith.constant 13 : index
    %c0_199 = arith.constant 0 : index
    %217 = vector.load %arg3[%c13_198, %c0_199] : memref<27x512xf32, #tpu.memory_space<vmem>>, vector<1x512xf32>
    %218 = vector.broadcast %217 : vector<1x512xf32> to vector<8x512xf32>
    %219 = arith.mulf %216, %218 : vector<8x512xf32>
    %c104_200 = arith.constant 104 : index
    %c0_201 = arith.constant 0 : index
    %220 = vector.load %arg10[%c104_200, %c0_201] : memref<224x512xf32, #tpu.memory_space<vmem>>, vector<8x512xf32>
    tpu.vector_store %arg10[%c104_200, %c0_201], %219 {strides = array<i32>} : memref<224x512xf32, #tpu.memory_space<vmem>>, vector<8x512xf32>,
    %c0_202 = arith.constant 0 : index
    %c129_203 = arith.constant 129 : index
    %221 = vector.load %arg9[%c0_202, %c129_203] : memref<8x768xf32, #tpu.memory_space<vmem>>, vector<8x512xf32>
    %c14_204 = arith.constant 14 : index
    %c0_205 = arith.constant 0 : index
    %222 = vector.load %arg3[%c14_204, %c0_205] : memref<27x512xf32, #tpu.memory_space<vmem>>, vector<1x512xf32>
    %223 = vector.broadcast %222 : vector<1x512xf32> to vector<8x512xf32>
    %224 = arith.mulf %221, %223 : vector<8x512xf32>
    %c112_206 = arith.constant 112 : index
    %c0_207 = arith.constant 0 : index
    %225 = vector.load %arg10[%c112_206, %c0_207] : memref<224x512xf32, #tpu.memory_space<vmem>>, vector<8x512xf32>
    tpu.vector_store %arg10[%c112_206, %c0_207], %224 {strides = array<i32>} : memref<224x512xf32, #tpu.memory_space<vmem>>, vector<8x512xf32>,
    %c0_208 = arith.constant 0 : index
    %c135_209 = arith.constant 135 : index
    %226 = vector.load %arg9[%c0_208, %c135_209] : memref<8x768xf32, #tpu.memory_space<vmem>>, vector<8x512xf32>
    %c15_210 = arith.constant 15 : index
    %c0_211 = arith.constant 0 : index
    %227 = vector.load %arg3[%c15_210, %c0_211] : memref<27x512xf32, #tpu.memory_space<vmem>>, vector<1x512xf32>
    %228 = vector.broadcast %227 : vector<1x512xf32> to vector<8x512xf32>
    %229 = arith.mulf %226, %228 : vector<8x512xf32>
    %c120_212 = arith.constant 120 : index
    %c0_213 = arith.constant 0 : index
    %230 = vector.load %arg10[%c120_212, %c0_213] : memref<224x512xf32, #tpu.memory_space<vmem>>, vector<8x512xf32>
    tpu.vector_store %arg10[%c120_212, %c0_213], %229 {strides = array<i32>} : memref<224x512xf32, #tpu.memory_space<vmem>>, vector<8x512xf32>,
    %c0_214 = arith.constant 0 : index
    %c136_215 = arith.constant 136 : index
    %231 = vector.load %arg9[%c0_214, %c136_215] : memref<8x768xf32, #tpu.memory_space<vmem>>, vector<8x512xf32>
    %c16_216 = arith.constant 16 : index
    %c0_217 = arith.constant 0 : index
    %232 = vector.load %arg3[%c16_216, %c0_217] : memref<27x512xf32, #tpu.memory_space<vmem>>, vector<1x512xf32>
    %233 = vector.broadcast %232 : vector<1x512xf32> to vector<8x512xf32>
    %234 = arith.mulf %231, %233 : vector<8x512xf32>
    %c128_218 = arith.constant 128 : index
    %c0_219 = arith.constant 0 : index
    %235 = vector.load %arg10[%c128_218, %c0_219] : memref<224x512xf32, #tpu.memory_space<vmem>>, vector<8x512xf32>
    tpu.vector_store %arg10[%c128_218, %c0_219], %234 {strides = array<i32>} : memref<224x512xf32, #tpu.memory_space<vmem>>, vector<8x512xf32>,
    %c0_220 = arith.constant 0 : index
    %c137_221 = arith.constant 137 : index
    %236 = vector.load %arg9[%c0_220, %c137_221] : memref<8x768xf32, #tpu.memory_space<vmem>>, vector<8x512xf32>
    %c17_222 = arith.constant 17 : index
    %c0_223 = arith.constant 0 : index
    %237 = vector.load %arg3[%c17_222, %c0_223] : memref<27x512xf32, #tpu.memory_space<vmem>>, vector<1x512xf32>
    %238 = vector.broadcast %237 : vector<1x512xf32> to vector<8x512xf32>
    %239 = arith.mulf %236, %238 : vector<8x512xf32>
    %c136_224 = arith.constant 136 : index
    %c0_225 = arith.constant 0 : index
    %240 = vector.load %arg10[%c136_224, %c0_225] : memref<224x512xf32, #tpu.memory_space<vmem>>, vector<8x512xf32>
    tpu.vector_store %arg10[%c136_224, %c0_225], %239 {strides = array<i32>} : memref<224x512xf32, #tpu.memory_space<vmem>>, vector<8x512xf32>,
    %c0_226 = arith.constant 0 : index
    %c183_227 = arith.constant 183 : index
    %241 = vector.load %arg9[%c0_226, %c183_227] : memref<8x768xf32, #tpu.memory_space<vmem>>, vector<8x512xf32>
    %c18_228 = arith.constant 18 : index
    %c0_229 = arith.constant 0 : index
    %242 = vector.load %arg3[%c18_228, %c0_229] : memref<27x512xf32, #tpu.memory_space<vmem>>, vector<1x512xf32>
    %243 = vector.broadcast %242 : vector<1x512xf32> to vector<8x512xf32>
    %244 = arith.mulf %241, %243 : vector<8x512xf32>
    %c144_230 = arith.constant 144 : index
    %c0_231 = arith.constant 0 : index
    %245 = vector.load %arg10[%c144_230, %c0_231] : memref<224x512xf32, #tpu.memory_space<vmem>>, vector<8x512xf32>
    tpu.vector_store %arg10[%c144_230, %c0_231], %244 {strides = array<i32>} : memref<224x512xf32, #tpu.memory_space<vmem>>, vector<8x512xf32>,
    %c0_232 = arith.constant 0 : index
    %c184_233 = arith.constant 184 : index
    %246 = vector.load %arg9[%c0_232, %c184_233] : memref<8x768xf32, #tpu.memory_space<vmem>>, vector<8x512xf32>
    %c19_234 = arith.constant 19 : index
    %c0_235 = arith.constant 0 : index
    %247 = vector.load %arg3[%c19_234, %c0_235] : memref<27x512xf32, #tpu.memory_space<vmem>>, vector<1x512xf32>
    %248 = vector.broadcast %247 : vector<1x512xf32> to vector<8x512xf32>
    %249 = arith.mulf %246, %248 : vector<8x512xf32>
    %c152_236 = arith.constant 152 : index
    %c0_237 = arith.constant 0 : index
    %250 = vector.load %arg10[%c152_236, %c0_237] : memref<224x512xf32, #tpu.memory_space<vmem>>, vector<8x512xf32>
    tpu.vector_store %arg10[%c152_236, %c0_237], %249 {strides = array<i32>} : memref<224x512xf32, #tpu.memory_space<vmem>>, vector<8x512xf32>,
    %c0_238 = arith.constant 0 : index
    %c185_239 = arith.constant 185 : index
    %251 = vector.load %arg9[%c0_238, %c185_239] : memref<8x768xf32, #tpu.memory_space<vmem>>, vector<8x512xf32>
    %c20_240 = arith.constant 20 : index
    %c0_241 = arith.constant 0 : index
    %252 = vector.load %arg3[%c20_240, %c0_241] : memref<27x512xf32, #tpu.memory_space<vmem>>, vector<1x512xf32>
    %253 = vector.broadcast %252 : vector<1x512xf32> to vector<8x512xf32>
    %254 = arith.mulf %251, %253 : vector<8x512xf32>
    %c160_242 = arith.constant 160 : index
    %c0_243 = arith.constant 0 : index
    %255 = vector.load %arg10[%c160_242, %c0_243] : memref<224x512xf32, #tpu.memory_space<vmem>>, vector<8x512xf32>
    tpu.vector_store %arg10[%c160_242, %c0_243], %254 {strides = array<i32>} : memref<224x512xf32, #tpu.memory_space<vmem>>, vector<8x512xf32>,
    %c0_244 = arith.constant 0 : index
    %c191_245 = arith.constant 191 : index
    %256 = vector.load %arg9[%c0_244, %c191_245] : memref<8x768xf32, #tpu.memory_space<vmem>>, vector<8x512xf32>
    %c21_246 = arith.constant 21 : index
    %c0_247 = arith.constant 0 : index
    %257 = vector.load %arg3[%c21_246, %c0_247] : memref<27x512xf32, #tpu.memory_space<vmem>>, vector<1x512xf32>
    %258 = vector.broadcast %257 : vector<1x512xf32> to vector<8x512xf32>
    %259 = arith.mulf %256, %258 : vector<8x512xf32>
    %c168_248 = arith.constant 168 : index
    %c0_249 = arith.constant 0 : index
    %260 = vector.load %arg10[%c168_248, %c0_249] : memref<224x512xf32, #tpu.memory_space<vmem>>, vector<8x512xf32>
    tpu.vector_store %arg10[%c168_248, %c0_249], %259 {strides = array<i32>} : memref<224x512xf32, #tpu.memory_space<vmem>>, vector<8x512xf32>,
    %c0_250 = arith.constant 0 : index
    %c192_251 = arith.constant 192 : index
    %261 = vector.load %arg9[%c0_250, %c192_251] : memref<8x768xf32, #tpu.memory_space<vmem>>, vector<8x512xf32>
    %c22_252 = arith.constant 22 : index
    %c0_253 = arith.constant 0 : index
    %262 = vector.load %arg3[%c22_252, %c0_253] : memref<27x512xf32, #tpu.memory_space<vmem>>, vector<1x512xf32>
    %263 = vector.broadcast %262 : vector<1x512xf32> to vector<8x512xf32>
    %264 = arith.mulf %261, %263 : vector<8x512xf32>
    %c176_254 = arith.constant 176 : index
    %c0_255 = arith.constant 0 : index
    %265 = vector.load %arg10[%c176_254, %c0_255] : memref<224x512xf32, #tpu.memory_space<vmem>>, vector<8x512xf32>
    tpu.vector_store %arg10[%c176_254, %c0_255], %264 {strides = array<i32>} : memref<224x512xf32, #tpu.memory_space<vmem>>, vector<8x512xf32>,
    %c0_256 = arith.constant 0 : index
    %c193_257 = arith.constant 193 : index
    %266 = vector.load %arg9[%c0_256, %c193_257] : memref<8x768xf32, #tpu.memory_space<vmem>>, vector<8x512xf32>
    %c23_258 = arith.constant 23 : index
    %c0_259 = arith.constant 0 : index
    %267 = vector.load %arg3[%c23_258, %c0_259] : memref<27x512xf32, #tpu.memory_space<vmem>>, vector<1x512xf32>
    %268 = vector.broadcast %267 : vector<1x512xf32> to vector<8x512xf32>
    %269 = arith.mulf %266, %268 : vector<8x512xf32>
    %c184_260 = arith.constant 184 : index
    %c0_261 = arith.constant 0 : index
    %270 = vector.load %arg10[%c184_260, %c0_261] : memref<224x512xf32, #tpu.memory_space<vmem>>, vector<8x512xf32>
    tpu.vector_store %arg10[%c184_260, %c0_261], %269 {strides = array<i32>} : memref<224x512xf32, #tpu.memory_space<vmem>>, vector<8x512xf32>,
    %c0_262 = arith.constant 0 : index
    %c199_263 = arith.constant 199 : index
    %271 = vector.load %arg9[%c0_262, %c199_263] : memref<8x768xf32, #tpu.memory_space<vmem>>, vector<8x512xf32>
    %c24_264 = arith.constant 24 : index
    %c0_265 = arith.constant 0 : index
    %272 = vector.load %arg3[%c24_264, %c0_265] : memref<27x512xf32, #tpu.memory_space<vmem>>, vector<1x512xf32>
    %273 = vector.broadcast %272 : vector<1x512xf32> to vector<8x512xf32>
    %274 = arith.mulf %271, %273 : vector<8x512xf32>
    %c192_266 = arith.constant 192 : index
    %c0_267 = arith.constant 0 : index
    %275 = vector.load %arg10[%c192_266, %c0_267] : memref<224x512xf32, #tpu.memory_space<vmem>>, vector<8x512xf32>
    tpu.vector_store %arg10[%c192_266, %c0_267], %274 {strides = array<i32>} : memref<224x512xf32, #tpu.memory_space<vmem>>, vector<8x512xf32>,
    %c0_268 = arith.constant 0 : index
    %c200_269 = arith.constant 200 : index
    %276 = vector.load %arg9[%c0_268, %c200_269] : memref<8x768xf32, #tpu.memory_space<vmem>>, vector<8x512xf32>
    %c25_270 = arith.constant 25 : index
    %c0_271 = arith.constant 0 : index
    %277 = vector.load %arg3[%c25_270, %c0_271] : memref<27x512xf32, #tpu.memory_space<vmem>>, vector<1x512xf32>
    %278 = vector.broadcast %277 : vector<1x512xf32> to vector<8x512xf32>
    %279 = arith.mulf %276, %278 : vector<8x512xf32>
    %c200_272 = arith.constant 200 : index
    %c0_273 = arith.constant 0 : index
    %280 = vector.load %arg10[%c200_272, %c0_273] : memref<224x512xf32, #tpu.memory_space<vmem>>, vector<8x512xf32>
    tpu.vector_store %arg10[%c200_272, %c0_273], %279 {strides = array<i32>} : memref<224x512xf32, #tpu.memory_space<vmem>>, vector<8x512xf32>,
    %c0_274 = arith.constant 0 : index
    %c201_275 = arith.constant 201 : index
    %281 = vector.load %arg9[%c0_274, %c201_275] : memref<8x768xf32, #tpu.memory_space<vmem>>, vector<8x512xf32>
    %c26_276 = arith.constant 26 : index
    %c0_277 = arith.constant 0 : index
    %282 = vector.load %arg3[%c26_276, %c0_277] : memref<27x512xf32, #tpu.memory_space<vmem>>, vector<1x512xf32>
    %283 = vector.broadcast %282 : vector<1x512xf32> to vector<8x512xf32>
    %284 = arith.mulf %281, %283 : vector<8x512xf32>
    %c208_278 = arith.constant 208 : index
    %c0_279 = arith.constant 0 : index
    %285 = vector.load %arg10[%c208_278, %c0_279] : memref<224x512xf32, #tpu.memory_space<vmem>>, vector<8x512xf32>
    tpu.vector_store %arg10[%c208_278, %c0_279], %284 {strides = array<i32>} : memref<224x512xf32, #tpu.memory_space<vmem>>, vector<8x512xf32>,
    %c0_280 = arith.constant 0 : index
    %c0_281 = arith.constant 0 : index
    %286 = vector.load %arg2[%c0_280, %c0_281] : memref<9x224xf32, #tpu.memory_space<vmem>>, vector<9x224xf32>
    %c0_282 = arith.constant 0 : index
    %c0_283 = arith.constant 0 : index
    %287 = vector.load %arg10[%c0_282, %c0_283] : memref<224x512xf32, #tpu.memory_space<vmem>>, vector<224x512xf32>
    %cst_284 = arith.constant dense<0.000000e+00> : vector<9x512xf32>
    %288 = tpu.matmul %286, %287, %cst_284 {dimension_numbers = #tpu.dot_dimension_numbers<[1], [0], [0], [1], [0, 0, 1, 1], [], []>} : vector<9x224xf32>, vector<224x512xf32>, vector<9x512xf32> -> vector<9x512xf32>
    %c0_285 = arith.constant 0 : index
    %c512 = arith.constant 512 : index
    %289 = vector.load %arg11[%c0_285, %c512] : memref<9x1024xf32, #tpu.memory_space<vmem>>, vector<9x512xf32>
    tpu.vector_store %arg11[%c0_285, %c512], %288 {strides = array<i32>} : memref<9x1024xf32, #tpu.memory_space<vmem>>, vector<9x512xf32>,
    %c0_286 = arith.constant 0 : index
    %c0_287 = arith.constant 0 : index
    %290 = vector.load %arg11[%c0_286, %c0_287] : memref<9x1024xf32, #tpu.memory_space<vmem>>, vector<9x1024xf32>
    %cst_288 = arith.constant dense<0.000000e+00> : vector<9xf32>
    %291 = vector.multi_reduction <add>, %290, %cst_288 [1] : vector<9x1024xf32> to vector<9xf32>
    %292 = vector.shape_cast %291 : vector<9xf32> to vector<9x1xf32>
    %cst_289 = arith.constant 9.765625E-4 : f32
    %293 = vector.broadcast %cst_289 : f32 to vector<9x1xf32>
    %294 = arith.mulf %292, %293 : vector<9x1xf32>
    %295 = vector.broadcast %294 : vector<9x1xf32> to vector<9x1024xf32>
    %296 = arith.subf %290, %295 : vector<9x1024xf32>
    %297 = arith.mulf %296, %296 : vector<9x1024xf32>
    %cst_290 = arith.constant dense<0.000000e+00> : vector<9xf32>
    %298 = vector.multi_reduction <add>, %297, %cst_290 [1] : vector<9x1024xf32> to vector<9xf32>
    %299 = vector.shape_cast %298 : vector<9xf32> to vector<9x1xf32>
    %cst_291 = arith.constant 9.765625E-4 : f32
    %300 = vector.broadcast %cst_291 : f32 to vector<9x1xf32>
    %301 = arith.mulf %299, %300 : vector<9x1xf32>
    %c0_292 = arith.constant 0 : index
    %c0_293 = arith.constant 0 : index
    %302 = vector.load %arg4[%c0_292, %c0_293] : memref<9x1xf32, #tpu.memory_space<vmem>>, vector<9x1xf32>
    %cst_294 = arith.constant 9.99999974E-6 : f32
    %303 = vector.broadcast %cst_294 : f32 to vector<9x1xf32>
    %304 = arith.addf %301, %303 : vector<9x1xf32>
    %305 = math.rsqrt %304 : vector<9x1xf32>
    %306 = arith.mulf %302, %305 : vector<9x1xf32>
    %c0_295 = arith.constant 0 : index
    %c0_296 = arith.constant 0 : index
    %307 = vector.load %arg5[%c0_295, %c0_296] : memref<9x1xf32, #tpu.memory_space<vmem>>, vector<9x1xf32>
    %308 = arith.mulf %294, %306 : vector<9x1xf32>
    %309 = arith.subf %307, %308 : vector<9x1xf32>
    %310 = vector.broadcast %306 : vector<9x1xf32> to vector<9x1024xf32>
    %311 = arith.mulf %290, %310 : vector<9x1024xf32>
    %312 = vector.broadcast %309 : vector<9x1xf32> to vector<9x1024xf32>
    %313 = arith.addf %311, %312 : vector<9x1024xf32>
    %cst_297 = arith.constant 0.000000e+00 : f32
    %314 = vector.broadcast %cst_297 : f32 to vector<9x1024xf32>
    %315 = arith.maximumf %313, %314 : vector<9x1024xf32>
    %c0_298 = arith.constant 0 : index
    %c0_299 = arith.constant 0 : index
    %316 = vector.load %arg6[%c0_298, %c0_299] : memref<9x9xf32, #tpu.memory_space<vmem>>, vector<9x9xf32>
    %cst_300 = arith.constant dense<0.000000e+00> : vector<9x1024xf32>
    %317 = tpu.matmul %316, %315, %cst_300 {dimension_numbers = #tpu.dot_dimension_numbers<[1], [0], [0], [1], [0, 0, 1, 1], [], []>} : vector<9x9xf32>, vector<9x1024xf32>, vector<9x1024xf32> -> vector<9x1024xf32>
    %c0_301 = arith.constant 0 : index
    %c0_302 = arith.constant 0 : index
    %318 = vector.load %arg7[%c0_301, %c0_302] : memref<9x1xf32, #tpu.memory_space<vmem>>, vector<9x1xf32>
    %319 = vector.broadcast %318 : vector<9x1xf32> to vector<9x1024xf32>
    %320 = arith.addf %317, %319 : vector<9x1024xf32>
    %321 = vector.extract_strided_slice %320 {offsets = [0, 0], sizes = [9, 512], strides = [1, 1]} : vector<9x1024xf32> to vector<9x512xf32>
    %c0_303 = arith.constant 0 : index
    %c0_304 = arith.constant 0 : index
    %c0_305 = arith.constant 0 : index
    %322 = vector.load %arg8[%c0_303, %c0_304, %c0_305] : memref<2x9x512xf32, #tpu.memory_space<vmem>>, vector<1x9x512xf32>
    %323 = vector.shape_cast %322 : vector<1x9x512xf32> to vector<9x512xf32>
    %324 = vector.shape_cast %321 : vector<9x512xf32> to vector<1x9x512xf32>
    tpu.vector_store %arg8[%c0_303, %c0_304, %c0_305], %324 {strides = array<i32>} : memref<2x9x512xf32, #tpu.memory_space<vmem>>, vector<1x9x512xf32>,
    %325 = vector.extract_strided_slice %320 {offsets = [0, 512], sizes = [9, 512], strides = [1, 1]} : vector<9x1024xf32> to vector<9x512xf32>
    %c1_306 = arith.constant 1 : index
    %c0_307 = arith.constant 0 : index
    %c0_308 = arith.constant 0 : index
    %326 = vector.load %arg8[%c1_306, %c0_307, %c0_308] : memref<2x9x512xf32, #tpu.memory_space<vmem>>, vector<1x9x512xf32>
    %327 = vector.shape_cast %326 : vector<1x9x512xf32> to vector<9x512xf32>
    %328 = vector.shape_cast %325 : vector<9x512xf32> to vector<1x9x512xf32>
    tpu.vector_store %arg8[%c1_306, %c0_307, %c0_308], %328 {strides = array<i32>} : memref<2x9x512xf32, #tpu.memory_space<vmem>>, vector<1x9x512xf32>,
    return
  }
  func.func @transform_0(%arg0: i32) -> (i32, i32, i32) {
    %c0_i32 = arith.constant 0 : i32
    %c0_i32_0 = arith.constant 0 : i32
    %c0_i32_1 = arith.constant 0 : i32
    %c0_i32_2 = arith.constant 0 : i32
    return %c0_i32, %c0_i32_0, %c0_i32_1 : i32, i32, i32
  }
  func.func @transform_1(%arg0: i32) -> (i32, i32) {
    %c0_i32 = arith.constant 0 : i32
    %c0_i32_0 = arith.constant 0 : i32
    %c0_i32_1 = arith.constant 0 : i32
    return %c0_i32, %c0_i32_0 : i32, i32
  }
  func.func @transform_2(%arg0: i32) -> (i32, i32) {
    %c0_i32 = arith.constant 0 : i32
    %c0_i32_0 = arith.constant 0 : i32
    %c0_i32_1 = arith.constant 0 : i32
    return %c0_i32, %c0_i32_0 : i32, i32
  }
  func.func @transform_3(%arg0: i32) -> (i32, i32) {
    %c0_i32 = arith.constant 0 : i32
    %c0_i32_0 = arith.constant 0 : i32
    %c0_i32_1 = arith.constant 0 : i32
    return %c0_i32, %c0_i32_0 : i32, i32
  }
  func.func @transform_4(%arg0: i32) -> (i32, i32) {
    %c0_i32 = arith.constant 0 : i32
    %c0_i32_0 = arith.constant 0 : i32
    %c0_i32_1 = arith.constant 0 : i32
    return %c0_i32, %c0_i32_0 : i32, i32
  }
  func.func @transform_5(%arg0: i32) -> (i32, i32) {
    %c0_i32 = arith.constant 0 : i32
    %c0_i32_0 = arith.constant 0 : i32
    %c0_i32_1 = arith.constant 0 : i32
    return %c0_i32, %c0_i32_0 : i32, i32
  }
  func.func @transform_6(%arg0: i32) -> (i32, i32) {
    %c0_i32 = arith.constant 0 : i32
    %c0_i32_0 = arith.constant 0 : i32
    %c0_i32_1 = arith.constant 0 : i32
    return %c0_i32, %c0_i32_0 : i32, i32
  }
  func.func @transform_7(%arg0: i32) -> (i32, i32, i32) {
    %c0_i32 = arith.constant 0 : i32
    %c0_i32_0 = arith.constant 0 : i32
    %c0_i32_1 = arith.constant 0 : i32
    %c0_i32_2 = arith.constant 0 : i32
    return %c0_i32, %c0_i32_0, %c0_i32_1 : i32, i32, i32
  }
}

</mosaic_0001>

<llo_original>
// kernel: tpu_custom_call.1
$region0: #{tpu_custom_call.1}
  #allocation0 [shape = 'u32[]', space=smem, size = 0x4, offset = 0x4, fixed_abs, tag = 'smem constant byte address 0x4 - core index']
  #allocation1 [shape = 'u32[144,128]{1,0:T(1,128)}', space=vmem, size = 0x12000, scoped, tag = 'internal scratch']
  #allocation2 [shape = 'f32[8,768]{1,0:T(8,128)}', space=vmem, size = 0x6000, scoped, tag = 'scratch operand']
  #allocation3 [shape = 'f32[224,512]{1,0:T(8,128)}', space=vmem, size = 0x70000, scoped, tag = 'scratch operand']
  #allocation4 [shape = 'f32[9,1024]{1,0:T(8,128)}', space=vmem, size = 0x10000, scoped, tag = 'scratch operand']
  %s0 = inlined_call_operand.vmem [shape: f32[2,4,512], index: 0, kind: input, shape index: {}]
  %s1 = inlined_call_operand.hbm [shape: f32[9,224], index: 1, kind: input, shape index: {}]
  %s2 = inlined_call_operand.hbm [shape: f32[27,512], index: 2, kind: input, shape index: {}]
  %s3 = inlined_call_operand.vmem [shape: f32[9,1], index: 3, kind: input, shape index: {}]
  %s4 = inlined_call_operand.vmem [shape: f32[9,1], index: 4, kind: input, shape index: {}]
  %s5 = inlined_call_operand.vmem [shape: f32[9,9], index: 5, kind: input, shape index: {}]
  %s6 = inlined_call_operand.vmem [shape: f32[9,1], index: 6, kind: input, shape index: {}]
  %s7 = inlined_call_operand.vmem [shape: f32[2,9,512], index: 7, kind: output, shape index: {}]
  %s8 = sld [smem:[#allocation0]]
  $region46: #{tpu_custom_call.1} parent=0
    _
  %s10 = ssub.s32 1, %s8
  %s11 = scalar_select 0, %s10, %s8
  $region1: #{tpu_custom_call.1} parent=0
    #allocation5 [shape = 'u8[16384]{0}', space=vmem, size = 0x4000, scoped, tag = 'input window, operand 1, single buffered']
    #allocation6 [shape = 's32[1]{0}', space=sflag, size = 0x4, scoped, tag = 'scoped memory for tpu_custom_call.1']
    #allocation7 [shape = 'u8[65536]{0}', space=vmem, size = 0x10000, scoped, tag = 'input window, operand 2, single buffered']
    #allocation8 [shape = 's32[1]{0}', space=sflag, size = 0x4, scoped, tag = 'scoped memory for tpu_custom_call.1']
    %12 = vsyncpa [#allocation6], 0
    %13 = vsyncpa [#allocation8], 0
    // Predicated region
    $region2: #{tpu_custom_call.1} parent=1 // pred_check
      _
    $region3: #{tpu_custom_call.1} parent=1 // pred_check_branch
      %15 = sbr.rel (0) target = $region5
    $region4: #{tpu_custom_call.1} parent=1 // pred_region
      _
    $region5: #{tpu_custom_call.1} parent=1 // pred_fallthru
      _
    // Predicated region
    $region6: #{tpu_custom_call.1} parent=1 // pred_check
      _
    $region7: #{tpu_custom_call.1} parent=1 // pred_check_branch
      %17 = sbr.rel (0) target = $region9
    $region8: #{tpu_custom_call.1} parent=1 // pred_region
      %s19 = ssub.s32 512, 512
      %20 = vsyncadd [#allocation6], %s19
      %s21 = sshll.u32 [#allocation5], 4
      %s22 = int_to_ptr.vmem [resolvable:$true] %s21
      %27 = dma.hbm_to_vmem [thread:$0]  %s1, 512, %s22, [#allocation6], 256, 256, 16
    $region9: #{tpu_custom_call.1} parent=1 // pred_fallthru
      _
    // Predicated region
    $region10: #{tpu_custom_call.1} parent=1 // pred_check
      _
    $region11: #{tpu_custom_call.1} parent=1 // pred_check_branch
      %29 = sbr.rel (0) target = $region13
    $region12: #{tpu_custom_call.1} parent=1 // pred_region
      %s31 = ssub.s32 2048, 2048
      %32 = vsyncadd [#allocation8], %s31
      %s33 = sshll.u32 [#allocation7], 4
      %s34 = int_to_ptr.vmem [resolvable:$true] %s33
      %39 = dma.hbm_to_vmem [thread:$0]  %s2, 2048, %s34, [#allocation8], 512, 512, 32
    $region13: #{tpu_custom_call.1} parent=1 // pred_fallthru
      _
    // Predicated region
    $region14: #{tpu_custom_call.1} parent=1 // pred_check
      _
    $region15: #{tpu_custom_call.1} parent=1 // pred_check_branch
      %41 = sbr.rel (0) target = $region17
    $region16: #{tpu_custom_call.1} parent=1 // pred_region
      _
    $region17: #{tpu_custom_call.1} parent=1 // pred_fallthru
      _
    // Predicated region
    $region18: #{tpu_custom_call.1} parent=1 // pred_check
      _
    $region19: #{tpu_custom_call.1} parent=1 // pred_check_branch
      %43 = sbr.rel (0) target = $region21
    $region20: #{tpu_custom_call.1} parent=1 // pred_region
      _
    $region21: #{tpu_custom_call.1} parent=1 // pred_fallthru
      _
    // Predicated region
    $region22: #{tpu_custom_call.1} parent=1 // pred_check
      _
    $region23: #{tpu_custom_call.1} parent=1 // pred_check_branch
      %45 = sbr.rel (0) target = $region25
    $region24: #{tpu_custom_call.1} parent=1 // pred_region
      _
    $region25: #{tpu_custom_call.1} parent=1 // pred_fallthru
      _
    // Predicated region
    $region26: #{tpu_custom_call.1} parent=1 // pred_check
      _
    $region27: #{tpu_custom_call.1} parent=1 // pred_check_branch
      %47 = sbr.rel (0) target = $region29
    $region28: #{tpu_custom_call.1} parent=1 // pred_region
      _
    $region29: #{tpu_custom_call.1} parent=1 // pred_fallthru
      _
    // Predicated region
    $region30: #{tpu_custom_call.1} parent=1 // pred_check
      _
    $region31: #{tpu_custom_call.1} parent=1 // pred_check_branch
      %49 = sbr.rel (0) target = $region33
    $region32: #{tpu_custom_call.1} parent=1 // pred_region
      %50 = dma.done [#allocation6], 512
    $region33: #{tpu_custom_call.1} parent=1 // pred_fallthru
      _
    // Predicated region
    $region34: #{tpu_custom_call.1} parent=1 // pred_check
      _
    $region35: #{tpu_custom_call.1} parent=1 // pred_check_branch
      %52 = sbr.rel (0) target = $region37
    $region36: #{tpu_custom_call.1} parent=1 // pred_region
      %53 = dma.done [#allocation8], 2048
    $region37: #{tpu_custom_call.1} parent=1 // pred_fallthru
      _
    %54 = vst [vmem:[#allocation2] sm:$0xff] 0.0
    %55 = vst [vmem:[#allocation2 + $0x8] sm:$0xff] 0.0
    %56 = vst [vmem:[#allocation2 + $0x10] sm:$0xff] 0.0
    %57 = vst [vmem:[#allocation2 + $0x18] sm:$0xff] 0.0
    %58 = vst [vmem:[#allocation2 + $0x20] sm:$0xff] 0.0
    %59 = vst [vmem:[#allocation2 + $0x28] sm:$0xff] 0.0
    %60 = vst [vmem:[#allocation3] sm:$0xff] 0.0
    %61 = vst [vmem:[#allocation3 + $0x8] sm:$0xff] 0.0
    %62 = vst [vmem:[#allocation3 + $0x10] sm:$0xff] 0.0
    %63 = vst [vmem:[#allocation3 + $0x18] sm:$0xff] 0.0
    %64 = vst [vmem:[#allocation3 + $0x20] sm:$0xff] 0.0
    %65 = vst [vmem:[#allocation3 + $0x28] sm:$0xff] 0.0
    %66 = vst [vmem:[#allocation3 + $0x30] sm:$0xff] 0.0
    %67 = vst [vmem:[#allocation3 + $0x38] sm:$0xff] 0.0
    %68 = vst [vmem:[#allocation3 + $0x40] sm:$0xff] 0.0
    %69 = vst [vmem:[#allocation3 + $0x48] sm:$0xff] 0.0
    %70 = vst [vmem:[#allocation3 + $0x50] sm:$0xff] 0.0
    %71 = vst [vmem:[#allocation3 + $0x58] sm:$0xff] 0.0
    %72 = vst [vmem:[#allocation3 + $0x60] sm:$0xff] 0.0
    %73 = vst [vmem:[#allocation3 + $0x68] sm:$0xff] 0.0
    %74 = vst [vmem:[#allocation3 + $0x70] sm:$0xff] 0.0
    %75 = vst [vmem:[#allocation3 + $0x78] sm:$0xff] 0.0
    %76 = vst [vmem:[#allocation3 + $0x80] sm:$0xff] 0.0
    %77 = vst [vmem:[#allocation3 + $0x88] sm:$0xff] 0.0
    %78 = vst [vmem:[#allocation3 + $0x90] sm:$0xff] 0.0
    %79 = vst [vmem:[#allocation3 + $0x98] sm:$0xff] 0.0
    %80 = vst [vmem:[#allocation3 + $0xa0] sm:$0xff] 0.0
    %81 = vst [vmem:[#allocation3 + $0xa8] sm:$0xff] 0.0
    %82 = vst [vmem:[#allocation3 + $0xb0] sm:$0xff] 0.0
    %83 = vst [vmem:[#allocation3 + $0xb8] sm:$0xff] 0.0
    %84 = vst [vmem:[#allocation3 + $0xc0] sm:$0xff] 0.0
    %85 = vst [vmem:[#allocation3 + $0xc8] sm:$0xff] 0.0
    %86 = vst [vmem:[#allocation3 + $0xd0] sm:$0xff] 0.0
    %87 = vst [vmem:[#allocation3 + $0xd8] sm:$0xff] 0.0
    %88 = vst [vmem:[#allocation3 + $0xe0] sm:$0xff] 0.0
    %89 = vst [vmem:[#allocation3 + $0xe8] sm:$0xff] 0.0
    %90 = vst [vmem:[#allocation3 + $0xf0] sm:$0xff] 0.0
    %91 = vst [vmem:[#allocation3 + $0xf8] sm:$0xff] 0.0
    %92 = vst [vmem:[#allocation3 + $0x100] sm:$0xff] 0.0
    %93 = vst [vmem:[#allocation3 + $0x108] sm:$0xff] 0.0
    %94 = vst [vmem:[#allocation3 + $0x110] sm:$0xff] 0.0
    %95 = vst [vmem:[#allocation3 + $0x118] sm:$0xff] 0.0
    %96 = vst [vmem:[#allocation3 + $0x120] sm:$0xff] 0.0
    %97 = vst [vmem:[#allocation3 + $0x128] sm:$0xff] 0.0
    %98 = vst [vmem:[#allocation3 + $0x130] sm:$0xff] 0.0
    %99 = vst [vmem:[#allocation3 + $0x138] sm:$0xff] 0.0
    %100 = vst [vmem:[#allocation3 + $0x140] sm:$0xff] 0.0
    %101 = vst [vmem:[#allocation3 + $0x148] sm:$0xff] 0.0
    %102 = vst [vmem:[#allocation3 + $0x150] sm:$0xff] 0.0
    %103 = vst [vmem:[#allocation3 + $0x158] sm:$0xff] 0.0
    %104 = vst [vmem:[#allocation3 + $0x160] sm:$0xff] 0.0
    %105 = vst [vmem:[#allocation3 + $0x168] sm:$0xff] 0.0
    %106 = vst [vmem:[#allocation3 + $0x170] sm:$0xff] 0.0
    %107 = vst [vmem:[#allocation3 + $0x178] sm:$0xff] 0.0
    %108 = vst [vmem:[#allocation3 + $0x180] sm:$0xff] 0.0
    %109 = vst [vmem:[#allocation3 + $0x188] sm:$0xff] 0.0
    %110 = vst [vmem:[#allocation3 + $0x190] sm:$0xff] 0.0
    %111 = vst [vmem:[#allocation3 + $0x198] sm:$0xff] 0.0
    %112 = vst [vmem:[#allocation3 + $0x1a0] sm:$0xff] 0.0
    %113 = vst [vmem:[#allocation3 + $0x1a8] sm:$0xff] 0.0
    %114 = vst [vmem:[#allocation3 + $0x1b0] sm:$0xff] 0.0
    %115 = vst [vmem:[#allocation3 + $0x1b8] sm:$0xff] 0.0
    %116 = vst [vmem:[#allocation3 + $0x1c0] sm:$0xff] 0.0
    %117 = vst [vmem:[#allocation3 + $0x1c8] sm:$0xff] 0.0
    %118 = vst [vmem:[#allocation3 + $0x1d0] sm:$0xff] 0.0
    %119 = vst [vmem:[#allocation3 + $0x1d8] sm:$0xff] 0.0
    %120 = vst [vmem:[#allocation3 + $0x1e0] sm:$0xff] 0.0
    %121 = vst [vmem:[#allocation3 + $0x1e8] sm:$0xff] 0.0
    %122 = vst [vmem:[#allocation3 + $0x1f0] sm:$0xff] 0.0
    %123 = vst [vmem:[#allocation3 + $0x1f8] sm:$0xff] 0.0
    %124 = vst [vmem:[#allocation3 + $0x200] sm:$0xff] 0.0
    %125 = vst [vmem:[#allocation3 + $0x208] sm:$0xff] 0.0
    %126 = vst [vmem:[#allocation3 + $0x210] sm:$0xff] 0.0
    %127 = vst [vmem:[#allocation3 + $0x218] sm:$0xff] 0.0
    %128 = vst [vmem:[#allocation3 + $0x220] sm:$0xff] 0.0
    %129 = vst [vmem:[#allocation3 + $0x228] sm:$0xff] 0.0
    %130 = vst [vmem:[#allocation3 + $0x230] sm:$0xff] 0.0
    %131 = vst [vmem:[#allocation3 + $0x238] sm:$0xff] 0.0
    %132 = vst [vmem:[#allocation3 + $0x240] sm:$0xff] 0.0
    %133 = vst [vmem:[#allocation3 + $0x248] sm:$0xff] 0.0
    %134 = vst [vmem:[#allocation3 + $0x250] sm:$0xff] 0.0
    %135 = vst [vmem:[#allocation3 + $0x258] sm:$0xff] 0.0
    %136 = vst [vmem:[#allocation3 + $0x260] sm:$0xff] 0.0
    %137 = vst [vmem:[#allocation3 + $0x268] sm:$0xff] 0.0
    %138 = vst [vmem:[#allocation3 + $0x270] sm:$0xff] 0.0
    %139 = vst [vmem:[#allocation3 + $0x278] sm:$0xff] 0.0
    %140 = vst [vmem:[#allocation3 + $0x280] sm:$0xff] 0.0
    %141 = vst [vmem:[#allocation3 + $0x288] sm:$0xff] 0.0
    %142 = vst [vmem:[#allocation3 + $0x290] sm:$0xff] 0.0
    %143 = vst [vmem:[#allocation3 + $0x298] sm:$0xff] 0.0
    %144 = vst [vmem:[#allocation3 + $0x2a0] sm:$0xff] 0.0
    %145 = vst [vmem:[#allocation3 + $0x2a8] sm:$0xff] 0.0
    %146 = vst [vmem:[#allocation3 + $0x2b0] sm:$0xff] 0.0
    %147 = vst [vmem:[#allocation3 + $0x2b8] sm:$0xff] 0.0
    %148 = vst [vmem:[#allocation3 + $0x2c0] sm:$0xff] 0.0
    %149 = vst [vmem:[#allocation3 + $0x2c8] sm:$0xff] 0.0
    %150 = vst [vmem:[#allocation3 + $0x2d0] sm:$0xff] 0.0
    %151 = vst [vmem:[#allocation3 + $0x2d8] sm:$0xff] 0.0
    %152 = vst [vmem:[#allocation3 + $0x2e0] sm:$0xff] 0.0
    %153 = vst [vmem:[#allocation3 + $0x2e8] sm:$0xff] 0.0
    %154 = vst [vmem:[#allocation3 + $0x2f0] sm:$0xff] 0.0
    %155 = vst [vmem:[#allocation3 + $0x2f8] sm:$0xff] 0.0
    %156 = vst [vmem:[#allocation3 + $0x300] sm:$0xff] 0.0
    %157 = vst [vmem:[#allocation3 + $0x308] sm:$0xff] 0.0
    %158 = vst [vmem:[#allocation3 + $0x310] sm:$0xff] 0.0
    %159 = vst [vmem:[#allocation3 + $0x318] sm:$0xff] 0.0
    %160 = vst [vmem:[#allocation3 + $0x320] sm:$0xff] 0.0
    %161 = vst [vmem:[#allocation3 + $0x328] sm:$0xff] 0.0
    %162 = vst [vmem:[#allocation3 + $0x330] sm:$0xff] 0.0
    %163 = vst [vmem:[#allocation3 + $0x338] sm:$0xff] 0.0
    %164 = vst [vmem:[#allocation3 + $0x340] sm:$0xff] 0.0
    %165 = vst [vmem:[#allocation3 + $0x348] sm:$0xff] 0.0
    %166 = vst [vmem:[#allocation3 + $0x350] sm:$0xff] 0.0
    %167 = vst [vmem:[#allocation3 + $0x358] sm:$0xff] 0.0
    %168 = vst [vmem:[#allocation3 + $0x360] sm:$0xff] 0.0
    %169 = vst [vmem:[#allocation3 + $0x368] sm:$0xff] 0.0
    %170 = vst [vmem:[#allocation3 + $0x370] sm:$0xff] 0.0
    %171 = vst [vmem:[#allocation3 + $0x378] sm:$0xff] 0.0
    %v172 = vlaneseq
    %vm173 = vcmp.ge.s32.totalorder %v172, 0
    %vm174 = vcmp.lt.s32.totalorder %v172, 512
    %vm175 = vmand %vm173, %vm174
    %s176 = scalar_lea.vmem [#allocation3], 864
    %177 = vst.msk [vmem:[%s176] ss:$8 sm:$0xf] %vm175, 1.0
    %178 = vst.msk [vmem:[%s176] ss:$8 sm:$0x0] %vm175, 1.0
    %v179 = vld [vmem:[%s0] sm:$0xff]
    %v180 = vld [vmem:[%s0 + $0x8] sm:$0xff]
    %v183 = vcombine.high %v179, %v179
    %v184 = vcombine.high %v180, %v180
    %187 = vst [vmem:[#allocation2 + $0x8] sm:$0xf] %v179
    %188 = vst [vmem:[#allocation2 + $0x10] sm:$0xf] %v183
    %189 = vst [vmem:[#allocation2 + $0x18] sm:$0xf] %v180
    %190 = vst [vmem:[#allocation2 + $0x20] sm:$0xf] %v184
    %v191 = vld [vmem:[#allocation2] sm:$0xff]
    %v192 = vld [vmem:[#allocation2 + $0x8] sm:$0xff]
    %v193 = vld [vmem:[#allocation2 + $0x10] sm:$0xff]
    %v194 = vld [vmem:[#allocation2 + $0x18] sm:$0xff]
    %v195 = vld [vmem:[#allocation2 + $0x20] sm:$0xff]
    %v196 = vld [vmem:[#allocation7] ss:$8 sm:$0xf]
    %v198 = vlaneseq
    %v199 = vshrl.u32 %v198, 7
    %v200 = vsub.s32 0, %v199
    %v201 = vrot.slane %v196, %v200
    %v202 = vlaneseq
    %v203 = vshrl.u32 %v202, 7
    %v204 = vsub.s32 1, %v203
    %v205 = vrot.slane %v196, %v204
    %v206 = vlaneseq
    %v207 = vshrl.u32 %v206, 7
    %v208 = vsub.s32 2, %v207
    %v209 = vrot.slane %v196, %v208
    %v210 = vlaneseq
    %v211 = vshrl.u32 %v210, 7
    %v212 = vsub.s32 3, %v211
    %v213 = vrot.slane %v196, %v212
    %214 = vrot.lane.b32.xlu0 %v201, 55
    %v215 = vpop.permute.xlu0 %214
    %216 = vrot.lane.b32.xlu0 %v205, 55
    %v217 = vpop.permute.xlu0 %216
    %218 = vrot.lane.b32.xlu0 %v209, 55
    %v219 = vpop.permute.xlu0 %218
    %220 = vrot.lane.b32.xlu0 %v213, 55
    %v221 = vpop.permute.xlu0 %220
    %vm222 = vcmask 449536
    %v223 = vsel %vm222, %v215, %v217
    %v224 = vsel %vm222, %v217, %v219
    %v225 = vsel %vm222, %v219, %v221
    %v231 = vmul.f32 %v191, %v215
    %v232 = vmul.f32 %v192, %v223
    %v233 = vmul.f32 %v193, %v224
    %v234 = vmul.f32 %v194, %v225
    %v235 = vmul.f32 %v195, %v221
    %241 = vrot.lane.b32.xlu0 %v231, 73
    %v242 = vpop.permute.xlu0 %241
    %243 = vrot.lane.b32.xlu0 %v232, 73
    %v244 = vpop.permute.xlu0 %243
    %245 = vrot.lane.b32.xlu0 %v233, 73
    %v246 = vpop.permute.xlu0 %245
    %247 = vrot.lane.b32.xlu0 %v234, 73
    %v248 = vpop.permute.xlu0 %247
    %249 = vrot.lane.b32.xlu0 %v235, 73
    %v250 = vpop.permute.xlu0 %249
    %vm251 = vcmask 596992
    %v252 = vsel %vm251, %v242, %v244
    %v253 = vsel %vm251, %v244, %v246
    %v254 = vsel %vm251, %v246, %v248
    %v255 = vsel %vm251, %v248, %v250
    %260 = vst [vmem:[#allocation3] sm:$0xff] %v252
    %261 = vst [vmem:[#allocation3 + $0x8] sm:$0xff] %v253
    %262 = vst [vmem:[#allocation3 + $0x10] sm:$0xff] %v254
    %263 = vst [vmem:[#allocation3 + $0x18] sm:$0xff] %v255
    %v264 = vld [vmem:[#allocation2] sm:$0xff]
    %v265 = vld [vmem:[#allocation2 + $0x8] sm:$0xff]
    %v266 = vld [vmem:[#allocation2 + $0x10] sm:$0xff]
    %v267 = vld [vmem:[#allocation2 + $0x18] sm:$0xff]
    %v268 = vld [vmem:[#allocation2 + $0x20] sm:$0xff]
    %s269 = scalar_lea.vmem [#allocation7], 1
    %v270 = vld [vmem:[%s269] ss:$8 sm:$0xf]
    %v272 = vlaneseq
    %v273 = vshrl.u32 %v272, 7
    %v274 = vsub.s32 0, %v273
    %v275 = vrot.slane %v270, %v274
    %v276 = vlaneseq
    %v277 = vshrl.u32 %v276, 7
    %v278 = vsub.s32 1, %v277
    %v279 = vrot.slane %v270, %v278
    %v280 = vlaneseq
    %v281 = vshrl.u32 %v280, 7
    %v282 = vsub.s32 2, %v281
    %v283 = vrot.slane %v270, %v282
    %v284 = vlaneseq
    %v285 = vshrl.u32 %v284, 7
    %v286 = vsub.s32 3, %v285
    %v287 = vrot.slane %v270, %v286
    %288 = vrot.lane.b32.xlu0 %v275, 56
    %v289 = vpop.permute.xlu0 %288
    %290 = vrot.lane.b32.xlu0 %v279, 56
    %v291 = vpop.permute.xlu0 %290
    %292 = vrot.lane.b32.xlu0 %v283, 56
    %v293 = vpop.permute.xlu0 %292
    %294 = vrot.lane.b32.xlu0 %v287, 56
    %v295 = vpop.permute.xlu0 %294
    %vm296 = vcmask 457728
    %v297 = vsel %vm296, %v289, %v291
    %v298 = vsel %vm296, %v291, %v293
    %v299 = vsel %vm296, %v293, %v295
    %v305 = vmul.f32 %v264, %v289
    %v306 = vmul.f32 %v265, %v297
    %v307 = vmul.f32 %v266, %v298
    %v308 = vmul.f32 %v267, %v299
    %v309 = vmul.f32 %v268, %v295
    %315 = vrot.lane.b32.xlu0 %v305, 72
    %v316 = vpop.permute.xlu0 %315
    %317 = vrot.lane.b32.xlu0 %v306, 72
    %v318 = vpop.permute.xlu0 %317
    %319 = vrot.lane.b32.xlu0 %v307, 72
    %v320 = vpop.permute.xlu0 %319
    %321 = vrot.lane.b32.xlu0 %v308, 72
    %v322 = vpop.permute.xlu0 %321
    %323 = vrot.lane.b32.xlu0 %v309, 72
    %v324 = vpop.permute.xlu0 %323
    %vm325 = vcmask 588800
    %v326 = vsel %vm325, %v316, %v318
    %v327 = vsel %vm325, %v318, %v320
    %v328 = vsel %vm325, %v320, %v322
    %v329 = vsel %vm325, %v322, %v324
    %334 = vst [vmem:[#allocation3 + $0x20] sm:$0xff] %v326
    %335 = vst [vmem:[#allocation3 + $0x28] sm:$0xff] %v327
    %336 = vst [vmem:[#allocation3 + $0x30] sm:$0xff] %v328
    %337 = vst [vmem:[#allocation3 + $0x38] sm:$0xff] %v329
    %v338 = vld [vmem:[#allocation2] sm:$0xff]
    %v339 = vld [vmem:[#allocation2 + $0x8] sm:$0xff]
    %v340 = vld [vmem:[#allocation2 + $0x10] sm:$0xff]
    %v341 = vld [vmem:[#allocation2 + $0x18] sm:$0xff]
    %v342 = vld [vmem:[#allocation2 + $0x20] sm:$0xff]
    %s343 = scalar_lea.vmem [#allocation7], 2
    %v344 = vld [vmem:[%s343] ss:$8 sm:$0xf]
    %v346 = vlaneseq
    %v347 = vshrl.u32 %v346, 7
    %v348 = vsub.s32 0, %v347
    %v349 = vrot.slane %v344, %v348
    %v350 = vlaneseq
    %v351 = vshrl.u32 %v350, 7
    %v352 = vsub.s32 1, %v351
    %v353 = vrot.slane %v344, %v352
    %v354 = vlaneseq
    %v355 = vshrl.u32 %v354, 7
    %v356 = vsub.s32 2, %v355
    %v357 = vrot.slane %v344, %v356
    %v358 = vlaneseq
    %v359 = vshrl.u32 %v358, 7
    %v360 = vsub.s32 3, %v359
    %v361 = vrot.slane %v344, %v360
    %362 = vrot.lane.b32.xlu0 %v349, 57
    %v363 = vpop.permute.xlu0 %362
    %364 = vrot.lane.b32.xlu0 %v353, 57
    %v365 = vpop.permute.xlu0 %364
    %366 = vrot.lane.b32.xlu0 %v357, 57
    %v367 = vpop.permute.xlu0 %366
    %368 = vrot.lane.b32.xlu0 %v361, 57
    %v369 = vpop.permute.xlu0 %368
    %vm370 = vcmask 465920
    %v371 = vsel %vm370, %v363, %v365
    %v372 = vsel %vm370, %v365, %v367
    %v373 = vsel %vm370, %v367, %v369
    %v379 = vmul.f32 %v338, %v363
    %v380 = vmul.f32 %v339, %v371
    %v381 = vmul.f32 %v340, %v372
    %v382 = vmul.f32 %v341, %v373
    %v383 = vmul.f32 %v342, %v369
    %389 = vrot.lane.b32.xlu0 %v379, 71
    %v390 = vpop.permute.xlu0 %389
    %391 = vrot.lane.b32.xlu0 %v380, 71
    %v392 = vpop.permute.xlu0 %391
    %393 = vrot.lane.b32.xlu0 %v381, 71
    %v394 = vpop.permute.xlu0 %393
    %395 = vrot.lane.b32.xlu0 %v382, 71
    %v396 = vpop.permute.xlu0 %395
    %397 = vrot.lane.b32.xlu0 %v383, 71
    %v398 = vpop.permute.xlu0 %397
    %vm399 = vcmask 580608
    %v400 = vsel %vm399, %v390, %v392
    %v401 = vsel %vm399, %v392, %v394
    %v402 = vsel %vm399, %v394, %v396
    %v403 = vsel %vm399, %v396, %v398
    %408 = vst [vmem:[#allocation3 + $0x40] sm:$0xff] %v400
    %409 = vst [vmem:[#allocation3 + $0x48] sm:$0xff] %v401
    %410 = vst [vmem:[#allocation3 + $0x50] sm:$0xff] %v402
    %411 = vst [vmem:[#allocation3 + $0x58] sm:$0xff] %v403
    %v412 = vld [vmem:[#allocation2] sm:$0xff]
    %v413 = vld [vmem:[#allocation2 + $0x8] sm:$0xff]
    %v414 = vld [vmem:[#allocation2 + $0x10] sm:$0xff]
    %v415 = vld [vmem:[#allocation2 + $0x18] sm:$0xff]
    %v416 = vld [vmem:[#allocation2 + $0x20] sm:$0xff]
    %s417 = scalar_lea.vmem [#allocation7], 3
    %v418 = vld [vmem:[%s417] ss:$8 sm:$0xf]
    %v420 = vlaneseq
    %v421 = vshrl.u32 %v420, 7
    %v422 = vsub.s32 0, %v421
    %v423 = vrot.slane %v418, %v422
    %v424 = vlaneseq
    %v425 = vshrl.u32 %v424, 7
    %v426 = vsub.s32 1, %v425
    %v427 = vrot.slane %v418, %v426
    %v428 = vlaneseq
    %v429 = vshrl.u32 %v428, 7
    %v430 = vsub.s32 2, %v429
    %v431 = vrot.slane %v418, %v430
    %v432 = vlaneseq
    %v433 = vshrl.u32 %v432, 7
    %v434 = vsub.s32 3, %v433
    %v435 = vrot.slane %v418, %v434
    %436 = vrot.lane.b32.xlu0 %v423, 63
    %v437 = vpop.permute.xlu0 %436
    %438 = vrot.lane.b32.xlu0 %v427, 63
    %v439 = vpop.permute.xlu0 %438
    %440 = vrot.lane.b32.xlu0 %v431, 63
    %v441 = vpop.permute.xlu0 %440
    %442 = vrot.lane.b32.xlu0 %v435, 63
    %v443 = vpop.permute.xlu0 %442
    %vm444 = vcmask 515072
    %v445 = vsel %vm444, %v437, %v439
    %v446 = vsel %vm444, %v439, %v441
    %v447 = vsel %vm444, %v441, %v443
    %v453 = vmul.f32 %v412, %v437
    %v454 = vmul.f32 %v413, %v445
    %v455 = vmul.f32 %v414, %v446
    %v456 = vmul.f32 %v415, %v447
    %v457 = vmul.f32 %v416, %v443
    %463 = vrot.lane.b32.xlu0 %v453, 65
    %v464 = vpop.permute.xlu0 %463
    %465 = vrot.lane.b32.xlu0 %v454, 65
    %v466 = vpop.permute.xlu0 %465
    %467 = vrot.lane.b32.xlu0 %v455, 65
    %v468 = vpop.permute.xlu0 %467
    %469 = vrot.lane.b32.xlu0 %v456, 65
    %v470 = vpop.permute.xlu0 %469
    %471 = vrot.lane.b32.xlu0 %v457, 65
    %v472 = vpop.permute.xlu0 %471
    %vm473 = vcmask 531456
    %v474 = vsel %vm473, %v464, %v466
    %v475 = vsel %vm473, %v466, %v468
    %v476 = vsel %vm473, %v468, %v470
    %v477 = vsel %vm473, %v470, %v472
    %482 = vst [vmem:[#allocation3 + $0x60] sm:$0xff] %v474
    %483 = vst [vmem:[#allocation3 + $0x68] sm:$0xff] %v475
    %484 = vst [vmem:[#allocation3 + $0x70] sm:$0xff] %v476
    %485 = vst [vmem:[#allocation3 + $0x78] sm:$0xff] %v477
    %v486 = vld [vmem:[#allocation2] sm:$0xff]
    %v487 = vld [vmem:[#allocation2 + $0x8] sm:$0xff]
    %v488 = vld [vmem:[#allocation2 + $0x10] sm:$0xff]
    %v489 = vld [vmem:[#allocation2 + $0x18] sm:$0xff]
    %v490 = vld [vmem:[#allocation2 + $0x20] sm:$0xff]
    %s491 = scalar_lea.vmem [#allocation7], 4
    %v492 = vld [vmem:[%s491] ss:$8 sm:$0xf]
    %v494 = vlaneseq
    %v495 = vshrl.u32 %v494, 7
    %v496 = vsub.s32 0, %v495
    %v497 = vrot.slane %v492, %v496
    %v498 = vlaneseq
    %v499 = vshrl.u32 %v498, 7
    %v500 = vsub.s32 1, %v499
    %v501 = vrot.slane %v492, %v500
    %v502 = vlaneseq
    %v503 = vshrl.u32 %v502, 7
    %v504 = vsub.s32 2, %v503
    %v505 = vrot.slane %v492, %v504
    %v506 = vlaneseq
    %v507 = vshrl.u32 %v506, 7
    %v508 = vsub.s32 3, %v507
    %v509 = vrot.slane %v492, %v508
    %510 = vrot.lane.b32.xlu0 %v497, 64
    %v511 = vpop.permute.xlu0 %510
    %512 = vrot.lane.b32.xlu0 %v501, 64
    %v513 = vpop.permute.xlu0 %512
    %514 = vrot.lane.b32.xlu0 %v505, 64
    %v515 = vpop.permute.xlu0 %514
    %516 = vrot.lane.b32.xlu0 %v509, 64
    %v517 = vpop.permute.xlu0 %516
    %vm518 = vcmask 523264
    %v519 = vsel %vm518, %v511, %v513
    %v520 = vsel %vm518, %v513, %v515
    %v521 = vsel %vm518, %v515, %v517
    %v527 = vmul.f32 %v486, %v511
    %v528 = vmul.f32 %v487, %v519
    %v529 = vmul.f32 %v488, %v520
    %v530 = vmul.f32 %v489, %v521
    %v531 = vmul.f32 %v490, %v517
    %537 = vrot.lane.b32.xlu0 %v527, 64
    %v538 = vpop.permute.xlu0 %537
    %539 = vrot.lane.b32.xlu0 %v528, 64
    %v540 = vpop.permute.xlu0 %539
    %541 = vrot.lane.b32.xlu0 %v529, 64
    %v542 = vpop.permute.xlu0 %541
    %543 = vrot.lane.b32.xlu0 %v530, 64
    %v544 = vpop.permute.xlu0 %543
    %545 = vrot.lane.b32.xlu0 %v531, 64
    %v546 = vpop.permute.xlu0 %545
    %v547 = vsel %vm518, %v538, %v540
    %v548 = vsel %vm518, %v540, %v542
    %v549 = vsel %vm518, %v542, %v544
    %v550 = vsel %vm518, %v544, %v546
    %555 = vst [vmem:[#allocation3 + $0x80] sm:$0xff] %v547
    %556 = vst [vmem:[#allocation3 + $0x88] sm:$0xff] %v548
    %557 = vst [vmem:[#allocation3 + $0x90] sm:$0xff] %v549
    %558 = vst [vmem:[#allocation3 + $0x98] sm:$0xff] %v550
    %v559 = vld [vmem:[#allocation2] sm:$0xff]
    %v560 = vld [vmem:[#allocation2 + $0x8] sm:$0xff]
    %v561 = vld [vmem:[#allocation2 + $0x10] sm:$0xff]
    %v562 = vld [vmem:[#allocation2 + $0x18] sm:$0xff]
    %v563 = vld [vmem:[#allocation2 + $0x20] sm:$0xff]
    %s564 = scalar_lea.vmem [#allocation7], 5
    %v565 = vld [vmem:[%s564] ss:$8 sm:$0xf]
    %v567 = vlaneseq
    %v568 = vshrl.u32 %v567, 7
    %v569 = vsub.s32 0, %v568
    %v570 = vrot.slane %v565, %v569
    %v571 = vlaneseq
    %v572 = vshrl.u32 %v571, 7
    %v573 = vsub.s32 1, %v572
    %v574 = vrot.slane %v565, %v573
    %v575 = vlaneseq
    %v576 = vshrl.u32 %v575, 7
    %v577 = vsub.s32 2, %v576
    %v578 = vrot.slane %v565, %v577
    %v579 = vlaneseq
    %v580 = vshrl.u32 %v579, 7
    %v581 = vsub.s32 3, %v580
    %v582 = vrot.slane %v565, %v581
    %583 = vrot.lane.b32.xlu0 %v570, 65
    %v584 = vpop.permute.xlu0 %583
    %585 = vrot.lane.b32.xlu0 %v574, 65
    %v586 = vpop.permute.xlu0 %585
    %587 = vrot.lane.b32.xlu0 %v578, 65
    %v588 = vpop.permute.xlu0 %587
    %589 = vrot.lane.b32.xlu0 %v582, 65
    %v590 = vpop.permute.xlu0 %589
    %v591 = vsel %vm473, %v584, %v586
    %v592 = vsel %vm473, %v586, %v588
    %v593 = vsel %vm473, %v588, %v590
    %v599 = vmul.f32 %v559, %v584
    %v600 = vmul.f32 %v560, %v591
    %v601 = vmul.f32 %v561, %v592
    %v602 = vmul.f32 %v562, %v593
    %v603 = vmul.f32 %v563, %v590
    %609 = vrot.lane.b32.xlu0 %v599, 63
    %v610 = vpop.permute.xlu0 %609
    %611 = vrot.lane.b32.xlu0 %v600, 63
    %v612 = vpop.permute.xlu0 %611
    %613 = vrot.lane.b32.xlu0 %v601, 63
    %v614 = vpop.permute.xlu0 %613
    %615 = vrot.lane.b32.xlu0 %v602, 63
    %v616 = vpop.permute.xlu0 %615
    %617 = vrot.lane.b32.xlu0 %v603, 63
    %v618 = vpop.permute.xlu0 %617
    %v619 = vsel %vm444, %v610, %v612
    %v620 = vsel %vm444, %v612, %v614
    %v621 = vsel %vm444, %v614, %v616
    %v622 = vsel %vm444, %v616, %v618
    %627 = vst [vmem:[#allocation3 + $0xa0] sm:$0xff] %v619
    %628 = vst [vmem:[#allocation3 + $0xa8] sm:$0xff] %v620
    %629 = vst [vmem:[#allocation3 + $0xb0] sm:$0xff] %v621
    %630 = vst [vmem:[#allocation3 + $0xb8] sm:$0xff] %v622
    %v631 = vld [vmem:[#allocation2] sm:$0xff]
    %v632 = vld [vmem:[#allocation2 + $0x8] sm:$0xff]
    %v633 = vld [vmem:[#allocation2 + $0x10] sm:$0xff]
    %v634 = vld [vmem:[#allocation2 + $0x18] sm:$0xff]
    %v635 = vld [vmem:[#allocation2 + $0x20] sm:$0xff]
    %s636 = scalar_lea.vmem [#allocation7], 6
    %v637 = vld [vmem:[%s636] ss:$8 sm:$0xf]
    %v639 = vlaneseq
    %v640 = vshrl.u32 %v639, 7
    %v641 = vsub.s32 0, %v640
    %v642 = vrot.slane %v637, %v641
    %v643 = vlaneseq
    %v644 = vshrl.u32 %v643, 7
    %v645 = vsub.s32 1, %v644
    %v646 = vrot.slane %v637, %v645
    %v647 = vlaneseq
    %v648 = vshrl.u32 %v647, 7
    %v649 = vsub.s32 2, %v648
    %v650 = vrot.slane %v637, %v649
    %v651 = vlaneseq
    %v652 = vshrl.u32 %v651, 7
    %v653 = vsub.s32 3, %v652
    %v654 = vrot.slane %v637, %v653
    %655 = vrot.lane.b32.xlu0 %v642, 71
    %v656 = vpop.permute.xlu0 %655
    %657 = vrot.lane.b32.xlu0 %v646, 71
    %v658 = vpop.permute.xlu0 %657
    %659 = vrot.lane.b32.xlu0 %v650, 71
    %v660 = vpop.permute.xlu0 %659
    %661 = vrot.lane.b32.xlu0 %v654, 71
    %v662 = vpop.permute.xlu0 %661
    %v663 = vsel %vm399, %v656, %v658
    %v664 = vsel %vm399, %v658, %v660
    %v665 = vsel %vm399, %v660, %v662
    %v671 = vmul.f32 %v631, %v656
    %v672 = vmul.f32 %v632, %v663
    %v673 = vmul.f32 %v633, %v664
    %v674 = vmul.f32 %v634, %v665
    %v675 = vmul.f32 %v635, %v662
    %681 = vrot.lane.b32.xlu0 %v671, 57
    %v682 = vpop.permute.xlu0 %681
    %683 = vrot.lane.b32.xlu0 %v672, 57
    %v684 = vpop.permute.xlu0 %683
    %685 = vrot.lane.b32.xlu0 %v673, 57
    %v686 = vpop.permute.xlu0 %685
    %687 = vrot.lane.b32.xlu0 %v674, 57
    %v688 = vpop.permute.xlu0 %687
    %689 = vrot.lane.b32.xlu0 %v675, 57
    %v690 = vpop.permute.xlu0 %689
    %v691 = vsel %vm370, %v682, %v684
    %v692 = vsel %vm370, %v684, %v686
    %v693 = vsel %vm370, %v686, %v688
    %v694 = vsel %vm370, %v688, %v690
    %699 = vst [vmem:[#allocation3 + $0xc0] sm:$0xff] %v691
    %700 = vst [vmem:[#allocation3 + $0xc8] sm:$0xff] %v692
    %701 = vst [vmem:[#allocation3 + $0xd0] sm:$0xff] %v693
    %702 = vst [vmem:[#allocation3 + $0xd8] sm:$0xff] %v694
    %v703 = vld [vmem:[#allocation2] sm:$0xff]
    %v704 = vld [vmem:[#allocation2 + $0x8] sm:$0xff]
    %v705 = vld [vmem:[#allocation2 + $0x10] sm:$0xff]
    %v706 = vld [vmem:[#allocation2 + $0x18] sm:$0xff]
    %v707 = vld [vmem:[#allocation2 + $0x20] sm:$0xff]
    %s708 = scalar_lea.vmem [#allocation7], 7
    %v709 = vld [vmem:[%s708] ss:$8 sm:$0xf]
    %v711 = vlaneseq
    %v712 = vshrl.u32 %v711, 7
    %v713 = vsub.s32 0, %v712
    %v714 = vrot.slane %v709, %v713
    %v715 = vlaneseq
    %v716 = vshrl.u32 %v715, 7
    %v717 = vsub.s32 1, %v716
    %v718 = vrot.slane %v709, %v717
    %v719 = vlaneseq
    %v720 = vshrl.u32 %v719, 7
    %v721 = vsub.s32 2, %v720
    %v722 = vrot.slane %v709, %v721
    %v723 = vlaneseq
    %v724 = vshrl.u32 %v723, 7
    %v725 = vsub.s32 3, %v724
    %v726 = vrot.slane %v709, %v725
    %727 = vrot.lane.b32.xlu0 %v714, 72
    %v728 = vpop.permute.xlu0 %727
    %729 = vrot.lane.b32.xlu0 %v718, 72
    %v730 = vpop.permute.xlu0 %729
    %731 = vrot.lane.b32.xlu0 %v722, 72
    %v732 = vpop.permute.xlu0 %731
    %733 = vrot.lane.b32.xlu0 %v726, 72
    %v734 = vpop.permute.xlu0 %733
    %v735 = vsel %vm325, %v728, %v730
    %v736 = vsel %vm325, %v730, %v732
    %v737 = vsel %vm325, %v732, %v734
    %v743 = vmul.f32 %v703, %v728
    %v744 = vmul.f32 %v704, %v735
    %v745 = vmul.f32 %v705, %v736
    %v746 = vmul.f32 %v706, %v737
    %v747 = vmul.f32 %v707, %v734
    %753 = vrot.lane.b32.xlu0 %v743, 56
    %v754 = vpop.permute.xlu0 %753
    %755 = vrot.lane.b32.xlu0 %v744, 56
    %v756 = vpop.permute.xlu0 %755
    %757 = vrot.lane.b32.xlu0 %v745, 56
    %v758 = vpop.permute.xlu0 %757
    %759 = vrot.lane.b32.xlu0 %v746, 56
    %v760 = vpop.permute.xlu0 %759
    %761 = vrot.lane.b32.xlu0 %v747, 56
    %v762 = vpop.permute.xlu0 %761
    %v763 = vsel %vm296, %v754, %v756
    %v764 = vsel %vm296, %v756, %v758
    %v765 = vsel %vm296, %v758, %v760
    %v766 = vsel %vm296, %v760, %v762
    %771 = vst [vmem:[#allocation3 + $0xe0] sm:$0xff] %v763
    %772 = vst [vmem:[#allocation3 + $0xe8] sm:$0xff] %v764
    %773 = vst [vmem:[#allocation3 + $0xf0] sm:$0xff] %v765
    %774 = vst [vmem:[#allocation3 + $0xf8] sm:$0xff] %v766
    %v775 = vld [vmem:[#allocation2] sm:$0xff]
    %v776 = vld [vmem:[#allocation2 + $0x8] sm:$0xff]
    %v777 = vld [vmem:[#allocation2 + $0x10] sm:$0xff]
    %v778 = vld [vmem:[#allocation2 + $0x18] sm:$0xff]
    %v779 = vld [vmem:[#allocation2 + $0x20] sm:$0xff]
    %s780 = scalar_lea.vmem [#allocation7], 32
    %v781 = vld [vmem:[%s780] ss:$8 sm:$0xf]
    %v783 = vlaneseq
    %v784 = vshrl.u32 %v783, 7
    %v785 = vsub.s32 0, %v784
    %v786 = vrot.slane %v781, %v785
    %v787 = vlaneseq
    %v788 = vshrl.u32 %v787, 7
    %v789 = vsub.s32 1, %v788
    %v790 = vrot.slane %v781, %v789
    %v791 = vlaneseq
    %v792 = vshrl.u32 %v791, 7
    %v793 = vsub.s32 2, %v792
    %v794 = vrot.slane %v781, %v793
    %v795 = vlaneseq
    %v796 = vshrl.u32 %v795, 7
    %v797 = vsub.s32 3, %v796
    %v798 = vrot.slane %v781, %v797
    %799 = vrot.lane.b32.xlu0 %v786, 73
    %v800 = vpop.permute.xlu0 %799
    %801 = vrot.lane.b32.xlu0 %v790, 73
    %v802 = vpop.permute.xlu0 %801
    %803 = vrot.lane.b32.xlu0 %v794, 73
    %v804 = vpop.permute.xlu0 %803
    %805 = vrot.lane.b32.xlu0 %v798, 73
    %v806 = vpop.permute.xlu0 %805
    %v807 = vsel %vm251, %v800, %v802
    %v808 = vsel %vm251, %v802, %v804
    %v809 = vsel %vm251, %v804, %v806
    %v815 = vmul.f32 %v775, %v800
    %v816 = vmul.f32 %v776, %v807
    %v817 = vmul.f32 %v777, %v808
    %v818 = vmul.f32 %v778, %v809
    %v819 = vmul.f32 %v779, %v806
    %825 = vrot.lane.b32.xlu0 %v815, 55
    %v826 = vpop.permute.xlu0 %825
    %827 = vrot.lane.b32.xlu0 %v816, 55
    %v828 = vpop.permute.xlu0 %827
    %829 = vrot.lane.b32.xlu0 %v817, 55
    %v830 = vpop.permute.xlu0 %829
    %831 = vrot.lane.b32.xlu0 %v818, 55
    %v832 = vpop.permute.xlu0 %831
    %833 = vrot.lane.b32.xlu0 %v819, 55
    %v834 = vpop.permute.xlu0 %833
    %v835 = vsel %vm222, %v826, %v828
    %v836 = vsel %vm222, %v828, %v830
    %v837 = vsel %vm222, %v830, %v832
    %v838 = vsel %vm222, %v832, %v834
    %843 = vst [vmem:[#allocation3 + $0x100] sm:$0xff] %v835
    %844 = vst [vmem:[#allocation3 + $0x108] sm:$0xff] %v836
    %845 = vst [vmem:[#allocation3 + $0x110] sm:$0xff] %v837
    %846 = vst [vmem:[#allocation3 + $0x118] sm:$0xff] %v838
    %v847 = vld [vmem:[#allocation2] sm:$0xff]
    %v848 = vld [vmem:[#allocation2 + $0x8] sm:$0xff]
    %v849 = vld [vmem:[#allocation2 + $0x10] sm:$0xff]
    %v850 = vld [vmem:[#allocation2 + $0x18] sm:$0xff]
    %v851 = vld [vmem:[#allocation2 + $0x20] sm:$0xff]
    %s852 = scalar_lea.vmem [#allocation7], 33
    %v853 = vld [vmem:[%s852] ss:$8 sm:$0xf]
    %v855 = vlaneseq
    %v856 = vshrl.u32 %v855, 7
    %v857 = vsub.s32 0, %v856
    %v858 = vrot.slane %v853, %v857
    %v859 = vlaneseq
    %v860 = vshrl.u32 %v859, 7
    %v861 = vsub.s32 1, %v860
    %v862 = vrot.slane %v853, %v861
    %v863 = vlaneseq
    %v864 = vshrl.u32 %v863, 7
    %v865 = vsub.s32 2, %v864
    %v866 = vrot.slane %v853, %v865
    %v867 = vlaneseq
    %v868 = vshrl.u32 %v867, 7
    %v869 = vsub.s32 3, %v868
    %v870 = vrot.slane %v853, %v869
    %871 = vrot.lane.b32.xlu0 %v858, 119
    %v872 = vpop.permute.xlu0 %871
    %873 = vrot.lane.b32.xlu0 %v862, 119
    %v874 = vpop.permute.xlu0 %873
    %875 = vrot.lane.b32.xlu0 %v866, 119
    %v876 = vpop.permute.xlu0 %875
    %877 = vrot.lane.b32.xlu0 %v870, 119
    %v878 = vpop.permute.xlu0 %877
    %vm879 = vcmask 973824
    %v880 = vsel %vm879, %v872, %v874
    %v881 = vsel %vm879, %v874, %v876
    %v882 = vsel %vm879, %v876, %v878
    %v888 = vmul.f32 %v847, %v872
    %v889 = vmul.f32 %v848, %v880
    %v890 = vmul.f32 %v849, %v881
    %v891 = vmul.f32 %v850, %v882
    %v892 = vmul.f32 %v851, %v878
    %898 = vrot.lane.b32.xlu0 %v888, 9
    %v899 = vpop.permute.xlu0 %898
    %900 = vrot.lane.b32.xlu0 %v889, 9
    %v901 = vpop.permute.xlu0 %900
    %902 = vrot.lane.b32.xlu0 %v890, 9
    %v903 = vpop.permute.xlu0 %902
    %904 = vrot.lane.b32.xlu0 %v891, 9
    %v905 = vpop.permute.xlu0 %904
    %906 = vrot.lane.b32.xlu0 %v892, 9
    %v907 = vpop.permute.xlu0 %906
    %vm908 = vcmask 72704
    %v909 = vsel %vm908, %v899, %v901
    %v910 = vsel %vm908, %v901, %v903
    %v911 = vsel %vm908, %v903, %v905
    %v912 = vsel %vm908, %v905, %v907
    %917 = vst [vmem:[#allocation3 + $0x120] sm:$0xff] %v909
    %918 = vst [vmem:[#allocation3 + $0x128] sm:$0xff] %v910
    %919 = vst [vmem:[#allocation3 + $0x130] sm:$0xff] %v911
    %920 = vst [vmem:[#allocation3 + $0x138] sm:$0xff] %v912
    %v921 = vld [vmem:[#allocation2] sm:$0xff]
    %v922 = vld [vmem:[#allocation2 + $0x8] sm:$0xff]
    %v923 = vld [vmem:[#allocation2 + $0x10] sm:$0xff]
    %v924 = vld [vmem:[#allocation2 + $0x18] sm:$0xff]
    %v925 = vld [vmem:[#allocation2 + $0x20] sm:$0xff]
    %s926 = scalar_lea.vmem [#allocation7], 34
    %v927 = vld [vmem:[%s926] ss:$8 sm:$0xf]
    %v929 = vlaneseq
    %v930 = vshrl.u32 %v929, 7
    %v931 = vsub.s32 0, %v930
    %v932 = vrot.slane %v927, %v931
    %v933 = vlaneseq
    %v934 = vshrl.u32 %v933, 7
    %v935 = vsub.s32 1, %v934
    %v936 = vrot.slane %v927, %v935
    %v937 = vlaneseq
    %v938 = vshrl.u32 %v937, 7
    %v939 = vsub.s32 2, %v938
    %v940 = vrot.slane %v927, %v939
    %v941 = vlaneseq
    %v942 = vshrl.u32 %v941, 7
    %v943 = vsub.s32 3, %v942
    %v944 = vrot.slane %v927, %v943
    %945 = vrot.lane.b32.xlu0 %v932, 120
    %v946 = vpop.permute.xlu0 %945
    %947 = vrot.lane.b32.xlu0 %v936, 120
    %v948 = vpop.permute.xlu0 %947
    %949 = vrot.lane.b32.xlu0 %v940, 120
    %v950 = vpop.permute.xlu0 %949
    %951 = vrot.lane.b32.xlu0 %v944, 120
    %v952 = vpop.permute.xlu0 %951
    %vm953 = vcmask 982016
    %v954 = vsel %vm953, %v946, %v948
    %v955 = vsel %vm953, %v948, %v950
    %v956 = vsel %vm953, %v950, %v952
    %v962 = vmul.f32 %v921, %v946
    %v963 = vmul.f32 %v922, %v954
    %v964 = vmul.f32 %v923, %v955
    %v965 = vmul.f32 %v924, %v956
    %v966 = vmul.f32 %v925, %v952
    %972 = vrot.lane.b32.xlu0 %v962, 8
    %v973 = vpop.permute.xlu0 %972
    %974 = vrot.lane.b32.xlu0 %v963, 8
    %v975 = vpop.permute.xlu0 %974
    %976 = vrot.lane.b32.xlu0 %v964, 8
    %v977 = vpop.permute.xlu0 %976
    %978 = vrot.lane.b32.xlu0 %v965, 8
    %v979 = vpop.permute.xlu0 %978
    %980 = vrot.lane.b32.xlu0 %v966, 8
    %v981 = vpop.permute.xlu0 %980
    %vm982 = vcmask 64512
    %v983 = vsel %vm982, %v973, %v975
    %v984 = vsel %vm982, %v975, %v977
    %v985 = vsel %vm982, %v977, %v979
    %v986 = vsel %vm982, %v979, %v981
    %991 = vst [vmem:[#allocation3 + $0x140] sm:$0xff] %v983
    %992 = vst [vmem:[#allocation3 + $0x148] sm:$0xff] %v984
    %993 = vst [vmem:[#allocation3 + $0x150] sm:$0xff] %v985
    %994 = vst [vmem:[#allocation3 + $0x158] sm:$0xff] %v986
    %v995 = vld [vmem:[#allocation2] sm:$0xff]
    %v996 = vld [vmem:[#allocation2 + $0x8] sm:$0xff]
    %v997 = vld [vmem:[#allocation2 + $0x10] sm:$0xff]
    %v998 = vld [vmem:[#allocation2 + $0x18] sm:$0xff]
    %v999 = vld [vmem:[#allocation2 + $0x20] sm:$0xff]
    %s1000 = scalar_lea.vmem [#allocation7], 35
    %v1001 = vld [vmem:[%s1000] ss:$8 sm:$0xf]
    %v1003 = vlaneseq
    %v1004 = vshrl.u32 %v1003, 7
    %v1005 = vsub.s32 0, %v1004
    %v1006 = vrot.slane %v1001, %v1005
    %v1007 = vlaneseq
    %v1008 = vshrl.u32 %v1007, 7
    %v1009 = vsub.s32 1, %v1008
    %v1010 = vrot.slane %v1001, %v1009
    %v1011 = vlaneseq
    %v1012 = vshrl.u32 %v1011, 7
    %v1013 = vsub.s32 2, %v1012
    %v1014 = vrot.slane %v1001, %v1013
    %v1015 = vlaneseq
    %v1016 = vshrl.u32 %v1015, 7
    %v1017 = vsub.s32 3, %v1016
    %v1018 = vrot.slane %v1001, %v1017
    %1019 = vrot.lane.b32.xlu0 %v1006, 121
    %v1020 = vpop.permute.xlu0 %1019
    %1021 = vrot.lane.b32.xlu0 %v1010, 121
    %v1022 = vpop.permute.xlu0 %1021
    %1023 = vrot.lane.b32.xlu0 %v1014, 121
    %v1024 = vpop.permute.xlu0 %1023
    %1025 = vrot.lane.b32.xlu0 %v1018, 121
    %v1026 = vpop.permute.xlu0 %1025
    %vm1027 = vcmask 990208
    %v1028 = vsel %vm1027, %v1020, %v1022
    %v1029 = vsel %vm1027, %v1022, %v1024
    %v1030 = vsel %vm1027, %v1024, %v1026
    %v1036 = vmul.f32 %v995, %v1020
    %v1037 = vmul.f32 %v996, %v1028
    %v1038 = vmul.f32 %v997, %v1029
    %v1039 = vmul.f32 %v998, %v1030
    %v1040 = vmul.f32 %v999, %v1026
    %1046 = vrot.lane.b32.xlu0 %v1036, 7
    %v1047 = vpop.permute.xlu0 %1046
    %1048 = vrot.lane.b32.xlu0 %v1037, 7
    %v1049 = vpop.permute.xlu0 %1048
    %1050 = vrot.lane.b32.xlu0 %v1038, 7
    %v1051 = vpop.permute.xlu0 %1050
    %1052 = vrot.lane.b32.xlu0 %v1039, 7
    %v1053 = vpop.permute.xlu0 %1052
    %1054 = vrot.lane.b32.xlu0 %v1040, 7
    %v1055 = vpop.permute.xlu0 %1054
    %vm1056 = vcmask 56320
    %v1057 = vsel %vm1056, %v1047, %v1049
    %v1058 = vsel %vm1056, %v1049, %v1051
    %v1059 = vsel %vm1056, %v1051, %v1053
    %v1060 = vsel %vm1056, %v1053, %v1055
    %1065 = vst [vmem:[#allocation3 + $0x160] sm:$0xff] %v1057
    %1066 = vst [vmem:[#allocation3 + $0x168] sm:$0xff] %v1058
    %1067 = vst [vmem:[#allocation3 + $0x170] sm:$0xff] %v1059
    %1068 = vst [vmem:[#allocation3 + $0x178] sm:$0xff] %v1060
    %v1069 = vld [vmem:[#allocation2] sm:$0xff]
    %v1070 = vld [vmem:[#allocation2 + $0x8] sm:$0xff]
    %v1071 = vld [vmem:[#allocation2 + $0x10] sm:$0xff]
    %v1072 = vld [vmem:[#allocation2 + $0x18] sm:$0xff]
    %v1073 = vld [vmem:[#allocation2 + $0x20] sm:$0xff]
    %s1074 = scalar_lea.vmem [#allocation7], 36
    %v1075 = vld [vmem:[%s1074] ss:$8 sm:$0xf]
    %v1077 = vlaneseq
    %v1078 = vshrl.u32 %v1077, 7
    %v1079 = vsub.s32 0, %v1078
    %v1080 = vrot.slane %v1075, %v1079
    %v1081 = vlaneseq
    %v1082 = vshrl.u32 %v1081, 7
    %v1083 = vsub.s32 1, %v1082
    %v1084 = vrot.slane %v1075, %v1083
    %v1085 = vlaneseq
    %v1086 = vshrl.u32 %v1085, 7
    %v1087 = vsub.s32 2, %v1086
    %v1088 = vrot.slane %v1075, %v1087
    %v1089 = vlaneseq
    %v1090 = vshrl.u32 %v1089, 7
    %v1091 = vsub.s32 3, %v1090
    %v1092 = vrot.slane %v1075, %v1091
    %1093 = vrot.lane.b32.xlu0 %v1080, 127
    %v1094 = vpop.permute.xlu0 %1093
    %1095 = vrot.lane.b32.xlu0 %v1084, 127
    %v1096 = vpop.permute.xlu0 %1095
    %1097 = vrot.lane.b32.xlu0 %v1088, 127
    %v1098 = vpop.permute.xlu0 %1097
    %1099 = vrot.lane.b32.xlu0 %v1092, 127
    %v1100 = vpop.permute.xlu0 %1099
    %vm1101 = vcmask 1039360
    %v1102 = vsel %vm1101, %v1094, %v1096
    %v1103 = vsel %vm1101, %v1096, %v1098
    %v1104 = vsel %vm1101, %v1098, %v1100
    %v1110 = vmul.f32 %v1069, %v1094
    %v1111 = vmul.f32 %v1070, %v1102
    %v1112 = vmul.f32 %v1071, %v1103
    %v1113 = vmul.f32 %v1072, %v1104
    %v1114 = vmul.f32 %v1073, %v1100
    %1120 = vrot.lane.b32.xlu0 %v1110, 1
    %v1121 = vpop.permute.xlu0 %1120
    %1122 = vrot.lane.b32.xlu0 %v1111, 1
    %v1123 = vpop.permute.xlu0 %1122
    %1124 = vrot.lane.b32.xlu0 %v1112, 1
    %v1125 = vpop.permute.xlu0 %1124
    %1126 = vrot.lane.b32.xlu0 %v1113, 1
    %v1127 = vpop.permute.xlu0 %1126
    %1128 = vrot.lane.b32.xlu0 %v1114, 1
    %v1129 = vpop.permute.xlu0 %1128
    %vm1130 = vcmask 7168
    %v1131 = vsel %vm1130, %v1121, %v1123
    %v1132 = vsel %vm1130, %v1123, %v1125
    %v1133 = vsel %vm1130, %v1125, %v1127
    %v1134 = vsel %vm1130, %v1127, %v1129
    %1139 = vst [vmem:[#allocation3 + $0x180] sm:$0xff] %v1131
    %1140 = vst [vmem:[#allocation3 + $0x188] sm:$0xff] %v1132
    %1141 = vst [vmem:[#allocation3 + $0x190] sm:$0xff] %v1133
    %1142 = vst [vmem:[#allocation3 + $0x198] sm:$0xff] %v1134
    %v1143 = vld [vmem:[#allocation2 + $0x8] sm:$0xff]
    %v1144 = vld [vmem:[#allocation2 + $0x10] sm:$0xff]
    %v1145 = vld [vmem:[#allocation2 + $0x18] sm:$0xff]
    %v1146 = vld [vmem:[#allocation2 + $0x20] sm:$0xff]
    %s1147 = scalar_lea.vmem [#allocation7], 37
    %v1148 = vld [vmem:[%s1147] ss:$8 sm:$0xf]
    %v1150 = vlaneseq
    %v1151 = vshrl.u32 %v1150, 7
    %v1152 = vsub.s32 0, %v1151
    %v1153 = vrot.slane %v1148, %v1152
    %v1154 = vlaneseq
    %v1155 = vshrl.u32 %v1154, 7
    %v1156 = vsub.s32 1, %v1155
    %v1157 = vrot.slane %v1148, %v1156
    %v1158 = vlaneseq
    %v1159 = vshrl.u32 %v1158, 7
    %v1160 = vsub.s32 2, %v1159
    %v1161 = vrot.slane %v1148, %v1160
    %v1162 = vlaneseq
    %v1163 = vshrl.u32 %v1162, 7
    %v1164 = vsub.s32 3, %v1163
    %v1165 = vrot.slane %v1148, %v1164
    %v1170 = vmul.f32 %v1143, %v1153
    %v1171 = vmul.f32 %v1144, %v1157
    %v1172 = vmul.f32 %v1145, %v1161
    %v1173 = vmul.f32 %v1146, %v1165
    %1174 = vst [vmem:[#allocation3 + $0x1a0] sm:$0xff] %v1170
    %1175 = vst [vmem:[#allocation3 + $0x1a8] sm:$0xff] %v1171
    %1176 = vst [vmem:[#allocation3 + $0x1b0] sm:$0xff] %v1172
    %1177 = vst [vmem:[#allocation3 + $0x1b8] sm:$0xff] %v1173
    %v1178 = vld [vmem:[#allocation2 + $0x8] sm:$0xff]
    %v1179 = vld [vmem:[#allocation2 + $0x10] sm:$0xff]
    %v1180 = vld [vmem:[#allocation2 + $0x18] sm:$0xff]
    %v1181 = vld [vmem:[#allocation2 + $0x20] sm:$0xff]
    %v1182 = vld [vmem:[#allocation2 + $0x28] sm:$0xff]
    %s1183 = scalar_lea.vmem [#allocation7], 38
    %v1184 = vld [vmem:[%s1183] ss:$8 sm:$0xf]
    %v1186 = vlaneseq
    %v1187 = vshrl.u32 %v1186, 7
    %v1188 = vsub.s32 0, %v1187
    %v1189 = vrot.slane %v1184, %v1188
    %v1190 = vlaneseq
    %v1191 = vshrl.u32 %v1190, 7
    %v1192 = vsub.s32 1, %v1191
    %v1193 = vrot.slane %v1184, %v1192
    %v1194 = vlaneseq
    %v1195 = vshrl.u32 %v1194, 7
    %v1196 = vsub.s32 2, %v1195
    %v1197 = vrot.slane %v1184, %v1196
    %v1198 = vlaneseq
    %v1199 = vshrl.u32 %v1198, 7
    %v1200 = vsub.s32 3, %v1199
    %v1201 = vrot.slane %v1184, %v1200
    %1202 = vrot.lane.b32.xlu0 %v1189, 1
    %v1203 = vpop.permute.xlu0 %1202
    %1204 = vrot.lane.b32.xlu0 %v1193, 1
    %v1205 = vpop.permute.xlu0 %1204
    %1206 = vrot.lane.b32.xlu0 %v1197, 1
    %v1207 = vpop.permute.xlu0 %1206
    %1208 = vrot.lane.b32.xlu0 %v1201, 1
    %v1209 = vpop.permute.xlu0 %1208
    %v1210 = vsel %vm1130, %v1203, %v1205
    %v1211 = vsel %vm1130, %v1205, %v1207
    %v1212 = vsel %vm1130, %v1207, %v1209
    %v1218 = vmul.f32 %v1178, %v1203
    %v1219 = vmul.f32 %v1179, %v1210
    %v1220 = vmul.f32 %v1180, %v1211
    %v1221 = vmul.f32 %v1181, %v1212
    %v1222 = vmul.f32 %v1182, %v1209
    %1228 = vrot.lane.b32.xlu0 %v1218, 127
    %v1229 = vpop.permute.xlu0 %1228
    %1230 = vrot.lane.b32.xlu0 %v1219, 127
    %v1231 = vpop.permute.xlu0 %1230
    %1232 = vrot.lane.b32.xlu0 %v1220, 127
    %v1233 = vpop.permute.xlu0 %1232
    %1234 = vrot.lane.b32.xlu0 %v1221, 127
    %v1235 = vpop.permute.xlu0 %1234
    %1236 = vrot.lane.b32.xlu0 %v1222, 127
    %v1237 = vpop.permute.xlu0 %1236
    %v1238 = vsel %vm1101, %v1229, %v1231
    %v1239 = vsel %vm1101, %v1231, %v1233
    %v1240 = vsel %vm1101, %v1233, %v1235
    %v1241 = vsel %vm1101, %v1235, %v1237
    %1246 = vst [vmem:[#allocation3 + $0x1c0] sm:$0xff] %v1238
    %1247 = vst [vmem:[#allocation3 + $0x1c8] sm:$0xff] %v1239
    %1248 = vst [vmem:[#allocation3 + $0x1d0] sm:$0xff] %v1240
    %1249 = vst [vmem:[#allocation3 + $0x1d8] sm:$0xff] %v1241
    %v1250 = vld [vmem:[#allocation2 + $0x8] sm:$0xff]
    %v1251 = vld [vmem:[#allocation2 + $0x10] sm:$0xff]
    %v1252 = vld [vmem:[#allocation2 + $0x18] sm:$0xff]
    %v1253 = vld [vmem:[#allocation2 + $0x20] sm:$0xff]
    %v1254 = vld [vmem:[#allocation2 + $0x28] sm:$0xff]
    %s1255 = scalar_lea.vmem [#allocation7], 39
    %v1256 = vld [vmem:[%s1255] ss:$8 sm:$0xf]
    %v1258 = vlaneseq
    %v1259 = vshrl.u32 %v1258, 7
    %v1260 = vsub.s32 0, %v1259
    %v1261 = vrot.slane %v1256, %v1260
    %v1262 = vlaneseq
    %v1263 = vshrl.u32 %v1262, 7
    %v1264 = vsub.s32 1, %v1263
    %v1265 = vrot.slane %v1256, %v1264
    %v1266 = vlaneseq
    %v1267 = vshrl.u32 %v1266, 7
    %v1268 = vsub.s32 2, %v1267
    %v1269 = vrot.slane %v1256, %v1268
    %v1270 = vlaneseq
    %v1271 = vshrl.u32 %v1270, 7
    %v1272 = vsub.s32 3, %v1271
    %v1273 = vrot.slane %v1256, %v1272
    %1274 = vrot.lane.b32.xlu0 %v1261, 7
    %v1275 = vpop.permute.xlu0 %1274
    %1276 = vrot.lane.b32.xlu0 %v1265, 7
    %v1277 = vpop.permute.xlu0 %1276
    %1278 = vrot.lane.b32.xlu0 %v1269, 7
    %v1279 = vpop.permute.xlu0 %1278
    %1280 = vrot.lane.b32.xlu0 %v1273, 7
    %v1281 = vpop.permute.xlu0 %1280
    %v1282 = vsel %vm1056, %v1275, %v1277
    %v1283 = vsel %vm1056, %v1277, %v1279
    %v1284 = vsel %vm1056, %v1279, %v1281
    %v1290 = vmul.f32 %v1250, %v1275
    %v1291 = vmul.f32 %v1251, %v1282
    %v1292 = vmul.f32 %v1252, %v1283
    %v1293 = vmul.f32 %v1253, %v1284
    %v1294 = vmul.f32 %v1254, %v1281
    %1300 = vrot.lane.b32.xlu0 %v1290, 121
    %v1301 = vpop.permute.xlu0 %1300
    %1302 = vrot.lane.b32.xlu0 %v1291, 121
    %v1303 = vpop.permute.xlu0 %1302
    %1304 = vrot.lane.b32.xlu0 %v1292, 121
    %v1305 = vpop.permute.xlu0 %1304
    %1306 = vrot.lane.b32.xlu0 %v1293, 121
    %v1307 = vpop.permute.xlu0 %1306
    %1308 = vrot.lane.b32.xlu0 %v1294, 121
    %v1309 = vpop.permute.xlu0 %1308
    %v1310 = vsel %vm1027, %v1301, %v1303
    %v1311 = vsel %vm1027, %v1303, %v1305
    %v1312 = vsel %vm1027, %v1305, %v1307
    %v1313 = vsel %vm1027, %v1307, %v1309
    %1318 = vst [vmem:[#allocation3 + $0x1e0] sm:$0xff] %v1310
    %1319 = vst [vmem:[#allocation3 + $0x1e8] sm:$0xff] %v1311
    %1320 = vst [vmem:[#allocation3 + $0x1f0] sm:$0xff] %v1312
    %1321 = vst [vmem:[#allocation3 + $0x1f8] sm:$0xff] %v1313
    %v1322 = vld [vmem:[#allocation2 + $0x8] sm:$0xff]
    %v1323 = vld [vmem:[#allocation2 + $0x10] sm:$0xff]
    %v1324 = vld [vmem:[#allocation2 + $0x18] sm:$0xff]
    %v1325 = vld [vmem:[#allocation2 + $0x20] sm:$0xff]
    %v1326 = vld [vmem:[#allocation2 + $0x28] sm:$0xff]
    %s1327 = scalar_lea.vmem [#allocation7], 64
    %v1328 = vld [vmem:[%s1327] ss:$8 sm:$0xf]
    %v1330 = vlaneseq
    %v1331 = vshrl.u32 %v1330, 7
    %v1332 = vsub.s32 0, %v1331
    %v1333 = vrot.slane %v1328, %v1332
    %v1334 = vlaneseq
    %v1335 = vshrl.u32 %v1334, 7
    %v1336 = vsub.s32 1, %v1335
    %v1337 = vrot.slane %v1328, %v1336
    %v1338 = vlaneseq
    %v1339 = vshrl.u32 %v1338, 7
    %v1340 = vsub.s32 2, %v1339
    %v1341 = vrot.slane %v1328, %v1340
    %v1342 = vlaneseq
    %v1343 = vshrl.u32 %v1342, 7
    %v1344 = vsub.s32 3, %v1343
    %v1345 = vrot.slane %v1328, %v1344
    %1346 = vrot.lane.b32.xlu0 %v1333, 8
    %v1347 = vpop.permute.xlu0 %1346
    %1348 = vrot.lane.b32.xlu0 %v1337, 8
    %v1349 = vpop.permute.xlu0 %1348
    %1350 = vrot.lane.b32.xlu0 %v1341, 8
    %v1351 = vpop.permute.xlu0 %1350
    %1352 = vrot.lane.b32.xlu0 %v1345, 8
    %v1353 = vpop.permute.xlu0 %1352
    %v1354 = vsel %vm982, %v1347, %v1349
    %v1355 = vsel %vm982, %v1349, %v1351
    %v1356 = vsel %vm982, %v1351, %v1353
    %v1362 = vmul.f32 %v1322, %v1347
    %v1363 = vmul.f32 %v1323, %v1354
    %v1364 = vmul.f32 %v1324, %v1355
    %v1365 = vmul.f32 %v1325, %v1356
    %v1366 = vmul.f32 %v1326, %v1353
    %1372 = vrot.lane.b32.xlu0 %v1362, 120
    %v1373 = vpop.permute.xlu0 %1372
    %1374 = vrot.lane.b32.xlu0 %v1363, 120
    %v1375 = vpop.permute.xlu0 %1374
    %1376 = vrot.lane.b32.xlu0 %v1364, 120
    %v1377 = vpop.permute.xlu0 %1376
    %1378 = vrot.lane.b32.xlu0 %v1365, 120
    %v1379 = vpop.permute.xlu0 %1378
    %1380 = vrot.lane.b32.xlu0 %v1366, 120
    %v1381 = vpop.permute.xlu0 %1380
    %v1382 = vsel %vm953, %v1373, %v1375
    %v1383 = vsel %vm953, %v1375, %v1377
    %v1384 = vsel %vm953, %v1377, %v1379
    %v1385 = vsel %vm953, %v1379, %v1381
    %1390 = vst [vmem:[#allocation3 + $0x200] sm:$0xff] %v1382
    %1391 = vst [vmem:[#allocation3 + $0x208] sm:$0xff] %v1383
    %1392 = vst [vmem:[#allocation3 + $0x210] sm:$0xff] %v1384
    %1393 = vst [vmem:[#allocation3 + $0x218] sm:$0xff] %v1385
    %v1394 = vld [vmem:[#allocation2 + $0x8] sm:$0xff]
    %v1395 = vld [vmem:[#allocation2 + $0x10] sm:$0xff]
    %v1396 = vld [vmem:[#allocation2 + $0x18] sm:$0xff]
    %v1397 = vld [vmem:[#allocation2 + $0x20] sm:$0xff]
    %v1398 = vld [vmem:[#allocation2 + $0x28] sm:$0xff]
    %s1399 = scalar_lea.vmem [#allocation7], 65
    %v1400 = vld [vmem:[%s1399] ss:$8 sm:$0xf]
    %v1402 = vlaneseq
    %v1403 = vshrl.u32 %v1402, 7
    %v1404 = vsub.s32 0, %v1403
    %v1405 = vrot.slane %v1400, %v1404
    %v1406 = vlaneseq
    %v1407 = vshrl.u32 %v1406, 7
    %v1408 = vsub.s32 1, %v1407
    %v1409 = vrot.slane %v1400, %v1408
    %v1410 = vlaneseq
    %v1411 = vshrl.u32 %v1410, 7
    %v1412 = vsub.s32 2, %v1411
    %v1413 = vrot.slane %v1400, %v1412
    %v1414 = vlaneseq
    %v1415 = vshrl.u32 %v1414, 7
    %v1416 = vsub.s32 3, %v1415
    %v1417 = vrot.slane %v1400, %v1416
    %1418 = vrot.lane.b32.xlu0 %v1405, 9
    %v1419 = vpop.permute.xlu0 %1418
    %1420 = vrot.lane.b32.xlu0 %v1409, 9
    %v1421 = vpop.permute.xlu0 %1420
    %1422 = vrot.lane.b32.xlu0 %v1413, 9
    %v1423 = vpop.permute.xlu0 %1422
    %1424 = vrot.lane.b32.xlu0 %v1417, 9
    %v1425 = vpop.permute.xlu0 %1424
    %v1426 = vsel %vm908, %v1419, %v1421
    %v1427 = vsel %vm908, %v1421, %v1423
    %v1428 = vsel %vm908, %v1423, %v1425
    %v1434 = vmul.f32 %v1394, %v1419
    %v1435 = vmul.f32 %v1395, %v1426
    %v1436 = vmul.f32 %v1396, %v1427
    %v1437 = vmul.f32 %v1397, %v1428
    %v1438 = vmul.f32 %v1398, %v1425
    %1444 = vrot.lane.b32.xlu0 %v1434, 119
    %v1445 = vpop.permute.xlu0 %1444
    %1446 = vrot.lane.b32.xlu0 %v1435, 119
    %v1447 = vpop.permute.xlu0 %1446
    %1448 = vrot.lane.b32.xlu0 %v1436, 119
    %v1449 = vpop.permute.xlu0 %1448
    %1450 = vrot.lane.b32.xlu0 %v1437, 119
    %v1451 = vpop.permute.xlu0 %1450
    %1452 = vrot.lane.b32.xlu0 %v1438, 119
    %v1453 = vpop.permute.xlu0 %1452
    %v1454 = vsel %vm879, %v1445, %v1447
    %v1455 = vsel %vm879, %v1447, %v1449
    %v1456 = vsel %vm879, %v1449, %v1451
    %v1457 = vsel %vm879, %v1451, %v1453
    %1462 = vst [vmem:[#allocation3 + $0x220] sm:$0xff] %v1454
    %1463 = vst [vmem:[#allocation3 + $0x228] sm:$0xff] %v1455
    %1464 = vst [vmem:[#allocation3 + $0x230] sm:$0xff] %v1456
    %1465 = vst [vmem:[#allocation3 + $0x238] sm:$0xff] %v1457
    %v1466 = vld [vmem:[#allocation2 + $0x8] sm:$0xff]
    %v1467 = vld [vmem:[#allocation2 + $0x10] sm:$0xff]
    %v1468 = vld [vmem:[#allocation2 + $0x18] sm:$0xff]
    %v1469 = vld [vmem:[#allocation2 + $0x20] sm:$0xff]
    %v1470 = vld [vmem:[#allocation2 + $0x28] sm:$0xff]
    %s1471 = scalar_lea.vmem [#allocation7], 66
    %v1472 = vld [vmem:[%s1471] ss:$8 sm:$0xf]
    %v1474 = vlaneseq
    %v1475 = vshrl.u32 %v1474, 7
    %v1476 = vsub.s32 0, %v1475
    %v1477 = vrot.slane %v1472, %v1476
    %v1478 = vlaneseq
    %v1479 = vshrl.u32 %v1478, 7
    %v1480 = vsub.s32 1, %v1479
    %v1481 = vrot.slane %v1472, %v1480
    %v1482 = vlaneseq
    %v1483 = vshrl.u32 %v1482, 7
    %v1484 = vsub.s32 2, %v1483
    %v1485 = vrot.slane %v1472, %v1484
    %v1486 = vlaneseq
    %v1487 = vshrl.u32 %v1486, 7
    %v1488 = vsub.s32 3, %v1487
    %v1489 = vrot.slane %v1472, %v1488
    %1490 = vrot.lane.b32.xlu0 %v1477, 55
    %v1491 = vpop.permute.xlu0 %1490
    %1492 = vrot.lane.b32.xlu0 %v1481, 55
    %v1493 = vpop.permute.xlu0 %1492
    %1494 = vrot.lane.b32.xlu0 %v1485, 55
    %v1495 = vpop.permute.xlu0 %1494
    %1496 = vrot.lane.b32.xlu0 %v1489, 55
    %v1497 = vpop.permute.xlu0 %1496
    %v1498 = vsel %vm222, %v1491, %v1493
    %v1499 = vsel %vm222, %v1493, %v1495
    %v1500 = vsel %vm222, %v1495, %v1497
    %v1506 = vmul.f32 %v1466, %v1491
    %v1507 = vmul.f32 %v1467, %v1498
    %v1508 = vmul.f32 %v1468, %v1499
    %v1509 = vmul.f32 %v1469, %v1500
    %v1510 = vmul.f32 %v1470, %v1497
    %1516 = vrot.lane.b32.xlu0 %v1506, 73
    %v1517 = vpop.permute.xlu0 %1516
    %1518 = vrot.lane.b32.xlu0 %v1507, 73
    %v1519 = vpop.permute.xlu0 %1518
    %1520 = vrot.lane.b32.xlu0 %v1508, 73
    %v1521 = vpop.permute.xlu0 %1520
    %1522 = vrot.lane.b32.xlu0 %v1509, 73
    %v1523 = vpop.permute.xlu0 %1522
    %1524 = vrot.lane.b32.xlu0 %v1510, 73
    %v1525 = vpop.permute.xlu0 %1524
    %v1526 = vsel %vm251, %v1517, %v1519
    %v1527 = vsel %vm251, %v1519, %v1521
    %v1528 = vsel %vm251, %v1521, %v1523
    %v1529 = vsel %vm251, %v1523, %v1525
    %1534 = vst [vmem:[#allocation3 + $0x240] sm:$0xff] %v1526
    %1535 = vst [vmem:[#allocation3 + $0x248] sm:$0xff] %v1527
    %1536 = vst [vmem:[#allocation3 + $0x250] sm:$0xff] %v1528
    %1537 = vst [vmem:[#allocation3 + $0x258] sm:$0xff] %v1529
    %v1538 = vld [vmem:[#allocation2 + $0x8] sm:$0xff]
    %v1539 = vld [vmem:[#allocation2 + $0x10] sm:$0xff]
    %v1540 = vld [vmem:[#allocation2 + $0x18] sm:$0xff]
    %v1541 = vld [vmem:[#allocation2 + $0x20] sm:$0xff]
    %v1542 = vld [vmem:[#allocation2 + $0x28] sm:$0xff]
    %s1543 = scalar_lea.vmem [#allocation7], 67
    %v1544 = vld [vmem:[%s1543] ss:$8 sm:$0xf]
    %v1546 = vlaneseq
    %v1547 = vshrl.u32 %v1546, 7
    %v1548 = vsub.s32 0, %v1547
    %v1549 = vrot.slane %v1544, %v1548
    %v1550 = vlaneseq
    %v1551 = vshrl.u32 %v1550, 7
    %v1552 = vsub.s32 1, %v1551
    %v1553 = vrot.slane %v1544, %v1552
    %v1554 = vlaneseq
    %v1555 = vshrl.u32 %v1554, 7
    %v1556 = vsub.s32 2, %v1555
    %v1557 = vrot.slane %v1544, %v1556
    %v1558 = vlaneseq
    %v1559 = vshrl.u32 %v1558, 7
    %v1560 = vsub.s32 3, %v1559
    %v1561 = vrot.slane %v1544, %v1560
    %1562 = vrot.lane.b32.xlu0 %v1549, 56
    %v1563 = vpop.permute.xlu0 %1562
    %1564 = vrot.lane.b32.xlu0 %v1553, 56
    %v1565 = vpop.permute.xlu0 %1564
    %1566 = vrot.lane.b32.xlu0 %v1557, 56
    %v1567 = vpop.permute.xlu0 %1566
    %1568 = vrot.lane.b32.xlu0 %v1561, 56
    %v1569 = vpop.permute.xlu0 %1568
    %v1570 = vsel %vm296, %v1563, %v1565
    %v1571 = vsel %vm296, %v1565, %v1567
    %v1572 = vsel %vm296, %v1567, %v1569
    %v1578 = vmul.f32 %v1538, %v1563
    %v1579 = vmul.f32 %v1539, %v1570
    %v1580 = vmul.f32 %v1540, %v1571
    %v1581 = vmul.f32 %v1541, %v1572
    %v1582 = vmul.f32 %v1542, %v1569
    %1588 = vrot.lane.b32.xlu0 %v1578, 72
    %v1589 = vpop.permute.xlu0 %1588
    %1590 = vrot.lane.b32.xlu0 %v1579, 72
    %v1591 = vpop.permute.xlu0 %1590
    %1592 = vrot.lane.b32.xlu0 %v1580, 72
    %v1593 = vpop.permute.xlu0 %1592
    %1594 = vrot.lane.b32.xlu0 %v1581, 72
    %v1595 = vpop.permute.xlu0 %1594
    %1596 = vrot.lane.b32.xlu0 %v1582, 72
    %v1597 = vpop.permute.xlu0 %1596
    %v1598 = vsel %vm325, %v1589, %v1591
    %v1599 = vsel %vm325, %v1591, %v1593
    %v1600 = vsel %vm325, %v1593, %v1595
    %v1601 = vsel %vm325, %v1595, %v1597
    %1606 = vst [vmem:[#allocation3 + $0x260] sm:$0xff] %v1598
    %1607 = vst [vmem:[#allocation3 + $0x268] sm:$0xff] %v1599
    %1608 = vst [vmem:[#allocation3 + $0x270] sm:$0xff] %v1600
    %1609 = vst [vmem:[#allocation3 + $0x278] sm:$0xff] %v1601
    %v1610 = vld [vmem:[#allocation2 + $0x8] sm:$0xff]
    %v1611 = vld [vmem:[#allocation2 + $0x10] sm:$0xff]
    %v1612 = vld [vmem:[#allocation2 + $0x18] sm:$0xff]
    %v1613 = vld [vmem:[#allocation2 + $0x20] sm:$0xff]
    %v1614 = vld [vmem:[#allocation2 + $0x28] sm:$0xff]
    %s1615 = scalar_lea.vmem [#allocation7], 68
    %v1616 = vld [vmem:[%s1615] ss:$8 sm:$0xf]
    %v1618 = vlaneseq
    %v1619 = vshrl.u32 %v1618, 7
    %v1620 = vsub.s32 0, %v1619
    %v1621 = vrot.slane %v1616, %v1620
    %v1622 = vlaneseq
    %v1623 = vshrl.u32 %v1622, 7
    %v1624 = vsub.s32 1, %v1623
    %v1625 = vrot.slane %v1616, %v1624
    %v1626 = vlaneseq
    %v1627 = vshrl.u32 %v1626, 7
    %v1628 = vsub.s32 2, %v1627
    %v1629 = vrot.slane %v1616, %v1628
    %v1630 = vlaneseq
    %v1631 = vshrl.u32 %v1630, 7
    %v1632 = vsub.s32 3, %v1631
    %v1633 = vrot.slane %v1616, %v1632
    %1634 = vrot.lane.b32.xlu0 %v1621, 57
    %v1635 = vpop.permute.xlu0 %1634
    %1636 = vrot.lane.b32.xlu0 %v1625, 57
    %v1637 = vpop.permute.xlu0 %1636
    %1638 = vrot.lane.b32.xlu0 %v1629, 57
    %v1639 = vpop.permute.xlu0 %1638
    %1640 = vrot.lane.b32.xlu0 %v1633, 57
    %v1641 = vpop.permute.xlu0 %1640
    %v1642 = vsel %vm370, %v1635, %v1637
    %v1643 = vsel %vm370, %v1637, %v1639
    %v1644 = vsel %vm370, %v1639, %v1641
    %v1650 = vmul.f32 %v1610, %v1635
    %v1651 = vmul.f32 %v1611, %v1642
    %v1652 = vmul.f32 %v1612, %v1643
    %v1653 = vmul.f32 %v1613, %v1644
    %v1654 = vmul.f32 %v1614, %v1641
    %1660 = vrot.lane.b32.xlu0 %v1650, 71
    %v1661 = vpop.permute.xlu0 %1660
    %1662 = vrot.lane.b32.xlu0 %v1651, 71
    %v1663 = vpop.permute.xlu0 %1662
    %1664 = vrot.lane.b32.xlu0 %v1652, 71
    %v1665 = vpop.permute.xlu0 %1664
    %1666 = vrot.lane.b32.xlu0 %v1653, 71
    %v1667 = vpop.permute.xlu0 %1666
    %1668 = vrot.lane.b32.xlu0 %v1654, 71
    %v1669 = vpop.permute.xlu0 %1668
    %v1670 = vsel %vm399, %v1661, %v1663
    %v1671 = vsel %vm399, %v1663, %v1665
    %v1672 = vsel %vm399, %v1665, %v1667
    %v1673 = vsel %vm399, %v1667, %v1669
    %1678 = vst [vmem:[#allocation3 + $0x280] sm:$0xff] %v1670
    %1679 = vst [vmem:[#allocation3 + $0x288] sm:$0xff] %v1671
    %1680 = vst [vmem:[#allocation3 + $0x290] sm:$0xff] %v1672
    %1681 = vst [vmem:[#allocation3 + $0x298] sm:$0xff] %v1673
    %v1682 = vld [vmem:[#allocation2 + $0x8] sm:$0xff]
    %v1683 = vld [vmem:[#allocation2 + $0x10] sm:$0xff]
    %v1684 = vld [vmem:[#allocation2 + $0x18] sm:$0xff]
    %v1685 = vld [vmem:[#allocation2 + $0x20] sm:$0xff]
    %v1686 = vld [vmem:[#allocation2 + $0x28] sm:$0xff]
    %s1687 = scalar_lea.vmem [#allocation7], 69
    %v1688 = vld [vmem:[%s1687] ss:$8 sm:$0xf]
    %v1690 = vlaneseq
    %v1691 = vshrl.u32 %v1690, 7
    %v1692 = vsub.s32 0, %v1691
    %v1693 = vrot.slane %v1688, %v1692
    %v1694 = vlaneseq
    %v1695 = vshrl.u32 %v1694, 7
    %v1696 = vsub.s32 1, %v1695
    %v1697 = vrot.slane %v1688, %v1696
    %v1698 = vlaneseq
    %v1699 = vshrl.u32 %v1698, 7
    %v1700 = vsub.s32 2, %v1699
    %v1701 = vrot.slane %v1688, %v1700
    %v1702 = vlaneseq
    %v1703 = vshrl.u32 %v1702, 7
    %v1704 = vsub.s32 3, %v1703
    %v1705 = vrot.slane %v1688, %v1704
    %1706 = vrot.lane.b32.xlu0 %v1693, 63
    %v1707 = vpop.permute.xlu0 %1706
    %1708 = vrot.lane.b32.xlu0 %v1697, 63
    %v1709 = vpop.permute.xlu0 %1708
    %1710 = vrot.lane.b32.xlu0 %v1701, 63
    %v1711 = vpop.permute.xlu0 %1710
    %1712 = vrot.lane.b32.xlu0 %v1705, 63
    %v1713 = vpop.permute.xlu0 %1712
    %v1714 = vsel %vm444, %v1707, %v1709
    %v1715 = vsel %vm444, %v1709, %v1711
    %v1716 = vsel %vm444, %v1711, %v1713
    %v1722 = vmul.f32 %v1682, %v1707
    %v1723 = vmul.f32 %v1683, %v1714
    %v1724 = vmul.f32 %v1684, %v1715
    %v1725 = vmul.f32 %v1685, %v1716
    %v1726 = vmul.f32 %v1686, %v1713
    %1732 = vrot.lane.b32.xlu0 %v1722, 65
    %v1733 = vpop.permute.xlu0 %1732
    %1734 = vrot.lane.b32.xlu0 %v1723, 65
    %v1735 = vpop.permute.xlu0 %1734
    %1736 = vrot.lane.b32.xlu0 %v1724, 65
    %v1737 = vpop.permute.xlu0 %1736
    %1738 = vrot.lane.b32.xlu0 %v1725, 65
    %v1739 = vpop.permute.xlu0 %1738
    %1740 = vrot.lane.b32.xlu0 %v1726, 65
    %v1741 = vpop.permute.xlu0 %1740
    %v1742 = vsel %vm473, %v1733, %v1735
    %v1743 = vsel %vm473, %v1735, %v1737
    %v1744 = vsel %vm473, %v1737, %v1739
    %v1745 = vsel %vm473, %v1739, %v1741
    %1750 = vst [vmem:[#allocation3 + $0x2a0] sm:$0xff] %v1742
    %1751 = vst [vmem:[#allocation3 + $0x2a8] sm:$0xff] %v1743
    %1752 = vst [vmem:[#allocation3 + $0x2b0] sm:$0xff] %v1744
    %1753 = vst [vmem:[#allocation3 + $0x2b8] sm:$0xff] %v1745
    %v1754 = vld [vmem:[#allocation2 + $0x8] sm:$0xff]
    %v1755 = vld [vmem:[#allocation2 + $0x10] sm:$0xff]
    %v1756 = vld [vmem:[#allocation2 + $0x18] sm:$0xff]
    %v1757 = vld [vmem:[#allocation2 + $0x20] sm:$0xff]
    %v1758 = vld [vmem:[#allocation2 + $0x28] sm:$0xff]
    %s1759 = scalar_lea.vmem [#allocation7], 70
    %v1760 = vld [vmem:[%s1759] ss:$8 sm:$0xf]
    %v1762 = vlaneseq
    %v1763 = vshrl.u32 %v1762, 7
    %v1764 = vsub.s32 0, %v1763
    %v1765 = vrot.slane %v1760, %v1764
    %v1766 = vlaneseq
    %v1767 = vshrl.u32 %v1766, 7
    %v1768 = vsub.s32 1, %v1767
    %v1769 = vrot.slane %v1760, %v1768
    %v1770 = vlaneseq
    %v1771 = vshrl.u32 %v1770, 7
    %v1772 = vsub.s32 2, %v1771
    %v1773 = vrot.slane %v1760, %v1772
    %v1774 = vlaneseq
    %v1775 = vshrl.u32 %v1774, 7
    %v1776 = vsub.s32 3, %v1775
    %v1777 = vrot.slane %v1760, %v1776
    %1778 = vrot.lane.b32.xlu0 %v1765, 64
    %v1779 = vpop.permute.xlu0 %1778
    %1780 = vrot.lane.b32.xlu0 %v1769, 64
    %v1781 = vpop.permute.xlu0 %1780
    %1782 = vrot.lane.b32.xlu0 %v1773, 64
    %v1783 = vpop.permute.xlu0 %1782
    %1784 = vrot.lane.b32.xlu0 %v1777, 64
    %v1785 = vpop.permute.xlu0 %1784
    %v1786 = vsel %vm518, %v1779, %v1781
    %v1787 = vsel %vm518, %v1781, %v1783
    %v1788 = vsel %vm518, %v1783, %v1785
    %v1794 = vmul.f32 %v1754, %v1779
    %v1795 = vmul.f32 %v1755, %v1786
    %v1796 = vmul.f32 %v1756, %v1787
    %v1797 = vmul.f32 %v1757, %v1788
    %v1798 = vmul.f32 %v1758, %v1785
    %1804 = vrot.lane.b32.xlu0 %v1794, 64
    %v1805 = vpop.permute.xlu0 %1804
    %1806 = vrot.lane.b32.xlu0 %v1795, 64
    %v1807 = vpop.permute.xlu0 %1806
    %1808 = vrot.lane.b32.xlu0 %v1796, 64
    %v1809 = vpop.permute.xlu0 %1808
    %1810 = vrot.lane.b32.xlu0 %v1797, 64
    %v1811 = vpop.permute.xlu0 %1810
    %1812 = vrot.lane.b32.xlu0 %v1798, 64
    %v1813 = vpop.permute.xlu0 %1812
    %v1814 = vsel %vm518, %v1805, %v1807
    %v1815 = vsel %vm518, %v1807, %v1809
    %v1816 = vsel %vm518, %v1809, %v1811
    %v1817 = vsel %vm518, %v1811, %v1813
    %1822 = vst [vmem:[#allocation3 + $0x2c0] sm:$0xff] %v1814
    %1823 = vst [vmem:[#allocation3 + $0x2c8] sm:$0xff] %v1815
    %1824 = vst [vmem:[#allocation3 + $0x2d0] sm:$0xff] %v1816
    %1825 = vst [vmem:[#allocation3 + $0x2d8] sm:$0xff] %v1817
    %v1826 = vld [vmem:[#allocation2 + $0x8] sm:$0xff]
    %v1827 = vld [vmem:[#allocation2 + $0x10] sm:$0xff]
    %v1828 = vld [vmem:[#allocation2 + $0x18] sm:$0xff]
    %v1829 = vld [vmem:[#allocation2 + $0x20] sm:$0xff]
    %v1830 = vld [vmem:[#allocation2 + $0x28] sm:$0xff]
    %s1831 = scalar_lea.vmem [#allocation7], 71
    %v1832 = vld [vmem:[%s1831] ss:$8 sm:$0xf]
    %v1834 = vlaneseq
    %v1835 = vshrl.u32 %v1834, 7
    %v1836 = vsub.s32 0, %v1835
    %v1837 = vrot.slane %v1832, %v1836
    %v1838 = vlaneseq
    %v1839 = vshrl.u32 %v1838, 7
    %v1840 = vsub.s32 1, %v1839
    %v1841 = vrot.slane %v1832, %v1840
    %v1842 = vlaneseq
    %v1843 = vshrl.u32 %v1842, 7
    %v1844 = vsub.s32 2, %v1843
    %v1845 = vrot.slane %v1832, %v1844
    %v1846 = vlaneseq
    %v1847 = vshrl.u32 %v1846, 7
    %v1848 = vsub.s32 3, %v1847
    %v1849 = vrot.slane %v1832, %v1848
    %1850 = vrot.lane.b32.xlu0 %v1837, 65
    %v1851 = vpop.permute.xlu0 %1850
    %1852 = vrot.lane.b32.xlu0 %v1841, 65
    %v1853 = vpop.permute.xlu0 %1852
    %1854 = vrot.lane.b32.xlu0 %v1845, 65
    %v1855 = vpop.permute.xlu0 %1854
    %1856 = vrot.lane.b32.xlu0 %v1849, 65
    %v1857 = vpop.permute.xlu0 %1856
    %v1858 = vsel %vm473, %v1851, %v1853
    %v1859 = vsel %vm473, %v1853, %v1855
    %v1860 = vsel %vm473, %v1855, %v1857
    %v1866 = vmul.f32 %v1826, %v1851
    %v1867 = vmul.f32 %v1827, %v1858
    %v1868 = vmul.f32 %v1828, %v1859
    %v1869 = vmul.f32 %v1829, %v1860
    %v1870 = vmul.f32 %v1830, %v1857
    %1876 = vrot.lane.b32.xlu0 %v1866, 63
    %v1877 = vpop.permute.xlu0 %1876
    %1878 = vrot.lane.b32.xlu0 %v1867, 63
    %v1879 = vpop.permute.xlu0 %1878
    %1880 = vrot.lane.b32.xlu0 %v1868, 63
    %v1881 = vpop.permute.xlu0 %1880
    %1882 = vrot.lane.b32.xlu0 %v1869, 63
    %v1883 = vpop.permute.xlu0 %1882
    %1884 = vrot.lane.b32.xlu0 %v1870, 63
    %v1885 = vpop.permute.xlu0 %1884
    %v1886 = vsel %vm444, %v1877, %v1879
    %v1887 = vsel %vm444, %v1879, %v1881
    %v1888 = vsel %vm444, %v1881, %v1883
    %v1889 = vsel %vm444, %v1883, %v1885
    %1894 = vst [vmem:[#allocation3 + $0x2e0] sm:$0xff] %v1886
    %1895 = vst [vmem:[#allocation3 + $0x2e8] sm:$0xff] %v1887
    %1896 = vst [vmem:[#allocation3 + $0x2f0] sm:$0xff] %v1888
    %1897 = vst [vmem:[#allocation3 + $0x2f8] sm:$0xff] %v1889
    %v1898 = vld [vmem:[#allocation2 + $0x8] sm:$0xff]
    %v1899 = vld [vmem:[#allocation2 + $0x10] sm:$0xff]
    %v1900 = vld [vmem:[#allocation2 + $0x18] sm:$0xff]
    %v1901 = vld [vmem:[#allocation2 + $0x20] sm:$0xff]
    %v1902 = vld [vmem:[#allocation2 + $0x28] sm:$0xff]
    %s1903 = scalar_lea.vmem [#allocation7], 96
    %v1904 = vld [vmem:[%s1903] ss:$8 sm:$0xf]
    %v1906 = vlaneseq
    %v1907 = vshrl.u32 %v1906, 7
    %v1908 = vsub.s32 0, %v1907
    %v1909 = vrot.slane %v1904, %v1908
    %v1910 = vlaneseq
    %v1911 = vshrl.u32 %v1910, 7
    %v1912 = vsub.s32 1, %v1911
    %v1913 = vrot.slane %v1904, %v1912
    %v1914 = vlaneseq
    %v1915 = vshrl.u32 %v1914, 7
    %v1916 = vsub.s32 2, %v1915
    %v1917 = vrot.slane %v1904, %v1916
    %v1918 = vlaneseq
    %v1919 = vshrl.u32 %v1918, 7
    %v1920 = vsub.s32 3, %v1919
    %v1921 = vrot.slane %v1904, %v1920
    %1922 = vrot.lane.b32.xlu0 %v1909, 71
    %v1923 = vpop.permute.xlu0 %1922
    %1924 = vrot.lane.b32.xlu0 %v1913, 71
    %v1925 = vpop.permute.xlu0 %1924
    %1926 = vrot.lane.b32.xlu0 %v1917, 71
    %v1927 = vpop.permute.xlu0 %1926
    %1928 = vrot.lane.b32.xlu0 %v1921, 71
    %v1929 = vpop.permute.xlu0 %1928
    %v1930 = vsel %vm399, %v1923, %v1925
    %v1931 = vsel %vm399, %v1925, %v1927
    %v1932 = vsel %vm399, %v1927, %v1929
    %v1938 = vmul.f32 %v1898, %v1923
    %v1939 = vmul.f32 %v1899, %v1930
    %v1940 = vmul.f32 %v1900, %v1931
    %v1941 = vmul.f32 %v1901, %v1932
    %v1942 = vmul.f32 %v1902, %v1929
    %1948 = vrot.lane.b32.xlu0 %v1938, 57
    %v1949 = vpop.permute.xlu0 %1948
    %1950 = vrot.lane.b32.xlu0 %v1939, 57
    %v1951 = vpop.permute.xlu0 %1950
    %1952 = vrot.lane.b32.xlu0 %v1940, 57
    %v1953 = vpop.permute.xlu0 %1952
    %1954 = vrot.lane.b32.xlu0 %v1941, 57
    %v1955 = vpop.permute.xlu0 %1954
    %1956 = vrot.lane.b32.xlu0 %v1942, 57
    %v1957 = vpop.permute.xlu0 %1956
    %v1958 = vsel %vm370, %v1949, %v1951
    %v1959 = vsel %vm370, %v1951, %v1953
    %v1960 = vsel %vm370, %v1953, %v1955
    %v1961 = vsel %vm370, %v1955, %v1957
    %1966 = vst [vmem:[#allocation3 + $0x300] sm:$0xff] %v1958
    %1967 = vst [vmem:[#allocation3 + $0x308] sm:$0xff] %v1959
    %1968 = vst [vmem:[#allocation3 + $0x310] sm:$0xff] %v1960
    %1969 = vst [vmem:[#allocation3 + $0x318] sm:$0xff] %v1961
    %v1970 = vld [vmem:[#allocation2 + $0x8] sm:$0xff]
    %v1971 = vld [vmem:[#allocation2 + $0x10] sm:$0xff]
    %v1972 = vld [vmem:[#allocation2 + $0x18] sm:$0xff]
    %v1973 = vld [vmem:[#allocation2 + $0x20] sm:$0xff]
    %v1974 = vld [vmem:[#allocation2 + $0x28] sm:$0xff]
    %s1975 = scalar_lea.vmem [#allocation7], 97
    %v1976 = vld [vmem:[%s1975] ss:$8 sm:$0xf]
    %v1978 = vlaneseq
    %v1979 = vshrl.u32 %v1978, 7
    %v1980 = vsub.s32 0, %v1979
    %v1981 = vrot.slane %v1976, %v1980
    %v1982 = vlaneseq
    %v1983 = vshrl.u32 %v1982, 7
    %v1984 = vsub.s32 1, %v1983
    %v1985 = vrot.slane %v1976, %v1984
    %v1986 = vlaneseq
    %v1987 = vshrl.u32 %v1986, 7
    %v1988 = vsub.s32 2, %v1987
    %v1989 = vrot.slane %v1976, %v1988
    %v1990 = vlaneseq
    %v1991 = vshrl.u32 %v1990, 7
    %v1992 = vsub.s32 3, %v1991
    %v1993 = vrot.slane %v1976, %v1992
    %1994 = vrot.lane.b32.xlu0 %v1981, 72
    %v1995 = vpop.permute.xlu0 %1994
    %1996 = vrot.lane.b32.xlu0 %v1985, 72
    %v1997 = vpop.permute.xlu0 %1996
    %1998 = vrot.lane.b32.xlu0 %v1989, 72
    %v1999 = vpop.permute.xlu0 %1998
    %2000 = vrot.lane.b32.xlu0 %v1993, 72
    %v2001 = vpop.permute.xlu0 %2000
    %v2002 = vsel %vm325, %v1995, %v1997
    %v2003 = vsel %vm325, %v1997, %v1999
    %v2004 = vsel %vm325, %v1999, %v2001
    %v2010 = vmul.f32 %v1970, %v1995
    %v2011 = vmul.f32 %v1971, %v2002
    %v2012 = vmul.f32 %v1972, %v2003
    %v2013 = vmul.f32 %v1973, %v2004
    %v2014 = vmul.f32 %v1974, %v2001
    %2020 = vrot.lane.b32.xlu0 %v2010, 56
    %v2021 = vpop.permute.xlu0 %2020
    %2022 = vrot.lane.b32.xlu0 %v2011, 56
    %v2023 = vpop.permute.xlu0 %2022
    %2024 = vrot.lane.b32.xlu0 %v2012, 56
    %v2025 = vpop.permute.xlu0 %2024
    %2026 = vrot.lane.b32.xlu0 %v2013, 56
    %v2027 = vpop.permute.xlu0 %2026
    %2028 = vrot.lane.b32.xlu0 %v2014, 56
    %v2029 = vpop.permute.xlu0 %2028
    %v2030 = vsel %vm296, %v2021, %v2023
    %v2031 = vsel %vm296, %v2023, %v2025
    %v2032 = vsel %vm296, %v2025, %v2027
    %v2033 = vsel %vm296, %v2027, %v2029
    %2038 = vst [vmem:[#allocation3 + $0x320] sm:$0xff] %v2030
    %2039 = vst [vmem:[#allocation3 + $0x328] sm:$0xff] %v2031
    %2040 = vst [vmem:[#allocation3 + $0x330] sm:$0xff] %v2032
    %2041 = vst [vmem:[#allocation3 + $0x338] sm:$0xff] %v2033
    %v2042 = vld [vmem:[#allocation2 + $0x8] sm:$0xff]
    %v2043 = vld [vmem:[#allocation2 + $0x10] sm:$0xff]
    %v2044 = vld [vmem:[#allocation2 + $0x18] sm:$0xff]
    %v2045 = vld [vmem:[#allocation2 + $0x20] sm:$0xff]
    %v2046 = vld [vmem:[#allocation2 + $0x28] sm:$0xff]
    %s2047 = scalar_lea.vmem [#allocation7], 98
    %v2048 = vld [vmem:[%s2047] ss:$8 sm:$0xf]
    %v2050 = vlaneseq
    %v2051 = vshrl.u32 %v2050, 7
    %v2052 = vsub.s32 0, %v2051
    %v2053 = vrot.slane %v2048, %v2052
    %v2054 = vlaneseq
    %v2055 = vshrl.u32 %v2054, 7
    %v2056 = vsub.s32 1, %v2055
    %v2057 = vrot.slane %v2048, %v2056
    %v2058 = vlaneseq
    %v2059 = vshrl.u32 %v2058, 7
    %v2060 = vsub.s32 2, %v2059
    %v2061 = vrot.slane %v2048, %v2060
    %v2062 = vlaneseq
    %v2063 = vshrl.u32 %v2062, 7
    %v2064 = vsub.s32 3, %v2063
    %v2065 = vrot.slane %v2048, %v2064
    %2066 = vrot.lane.b32.xlu0 %v2053, 73
    %v2067 = vpop.permute.xlu0 %2066
    %2068 = vrot.lane.b32.xlu0 %v2057, 73
    %v2069 = vpop.permute.xlu0 %2068
    %2070 = vrot.lane.b32.xlu0 %v2061, 73
    %v2071 = vpop.permute.xlu0 %2070
    %2072 = vrot.lane.b32.xlu0 %v2065, 73
    %v2073 = vpop.permute.xlu0 %2072
    %v2074 = vsel %vm251, %v2067, %v2069
    %v2075 = vsel %vm251, %v2069, %v2071
    %v2076 = vsel %vm251, %v2071, %v2073
    %v2082 = vmul.f32 %v2042, %v2067
    %v2083 = vmul.f32 %v2043, %v2074
    %v2084 = vmul.f32 %v2044, %v2075
    %v2085 = vmul.f32 %v2045, %v2076
    %v2086 = vmul.f32 %v2046, %v2073
    %2092 = vrot.lane.b32.xlu0 %v2082, 55
    %v2093 = vpop.permute.xlu0 %2092
    %2094 = vrot.lane.b32.xlu0 %v2083, 55
    %v2095 = vpop.permute.xlu0 %2094
    %2096 = vrot.lane.b32.xlu0 %v2084, 55
    %v2097 = vpop.permute.xlu0 %2096
    %2098 = vrot.lane.b32.xlu0 %v2085, 55
    %v2099 = vpop.permute.xlu0 %2098
    %2100 = vrot.lane.b32.xlu0 %v2086, 55
    %v2101 = vpop.permute.xlu0 %2100
    %v2102 = vsel %vm222, %v2093, %v2095
    %v2103 = vsel %vm222, %v2095, %v2097
    %v2104 = vsel %vm222, %v2097, %v2099
    %v2105 = vsel %vm222, %v2099, %v2101
    %2110 = vst [vmem:[#allocation3 + $0x340] sm:$0xff] %v2102
    %2111 = vst [vmem:[#allocation3 + $0x348] sm:$0xff] %v2103
    %2112 = vst [vmem:[#allocation3 + $0x350] sm:$0xff] %v2104
    %2113 = vst [vmem:[#allocation3 + $0x358] sm:$0xff] %v2105
    %v2114 = vld [vmem:[#allocation5] sm:$0xff]
    %v2115 = vld [vmem:[#allocation5 + $0x8] sm:$0xff]
    %v2116 = vld [vmem:[#allocation5 + $0x10] sm:$0x1]
    %v2117 = vld [vmem:[#allocation5 + $0x18] sm:$0x1]
    %v2118 = vld [vmem:[#allocation3] sm:$0xff]
    %v2119 = vld [vmem:[#allocation3 + $0x8] sm:$0xff]
    %v2120 = vld [vmem:[#allocation3 + $0x10] sm:$0xff]
    %v2121 = vld [vmem:[#allocation3 + $0x18] sm:$0xff]
    %v2122 = vld [vmem:[#allocation3 + $0x20] sm:$0xff]
    %v2123 = vld [vmem:[#allocation3 + $0x28] sm:$0xff]
    %v2124 = vld [vmem:[#allocation3 + $0x30] sm:$0xff]
    %v2125 = vld [vmem:[#allocation3 + $0x38] sm:$0xff]
    %v2126 = vld [vmem:[#allocation3 + $0x40] sm:$0xff]
    %v2127 = vld [vmem:[#allocation3 + $0x48] sm:$0xff]
    %v2128 = vld [vmem:[#allocation3 + $0x50] sm:$0xff]
    %v2129 = vld [vmem:[#allocation3 + $0x58] sm:$0xff]
    %v2130 = vld [vmem:[#allocation3 + $0x60] sm:$0xff]
    %v2131 = vld [vmem:[#allocation3 + $0x68] sm:$0xff]
    %v2132 = vld [vmem:[#allocation3 + $0x70] sm:$0xff]
    %v2133 = vld [vmem:[#allocation3 + $0x78] sm:$0xff]
    %v2134 = vld [vmem:[#allocation3 + $0x80] sm:$0xff]
    %v2135 = vld [vmem:[#allocation3 + $0x88] sm:$0xff]
    %v2136 = vld [vmem:[#allocation3 + $0x90] sm:$0xff]
    %v2137 = vld [vmem:[#allocation3 + $0x98] sm:$0xff]
    %v2138 = vld [vmem:[#allocation3 + $0xa0] sm:$0xff]
    %v2139 = vld [vmem:[#allocation3 + $0xa8] sm:$0xff]
    %v2140 = vld [vmem:[#allocation3 + $0xb0] sm:$0xff]
    %v2141 = vld [vmem:[#allocation3 + $0xb8] sm:$0xff]
    %v2142 = vld [vmem:[#allocation3 + $0xc0] sm:$0xff]
    %v2143 = vld [vmem:[#allocation3 + $0xc8] sm:$0xff]
    %v2144 = vld [vmem:[#allocation3 + $0xd0] sm:$0xff]
    %v2145 = vld [vmem:[#allocation3 + $0xd8] sm:$0xff]
    %v2146 = vld [vmem:[#allocation3 + $0xe0] sm:$0xff]
    %v2147 = vld [vmem:[#allocation3 + $0xe8] sm:$0xff]
    %v2148 = vld [vmem:[#allocation3 + $0xf0] sm:$0xff]
    %v2149 = vld [vmem:[#allocation3 + $0xf8] sm:$0xff]
    %v2150 = vld [vmem:[#allocation3 + $0x100] sm:$0xff]
    %v2151 = vld [vmem:[#allocation3 + $0x108] sm:$0xff]
    %v2152 = vld [vmem:[#allocation3 + $0x110] sm:$0xff]
    %v2153 = vld [vmem:[#allocation3 + $0x118] sm:$0xff]
    %v2154 = vld [vmem:[#allocation3 + $0x120] sm:$0xff]
    %v2155 = vld [vmem:[#allocation3 + $0x128] sm:$0xff]
    %v2156 = vld [vmem:[#allocation3 + $0x130] sm:$0xff]
    %v2157 = vld [vmem:[#allocation3 + $0x138] sm:$0xff]
    %v2158 = vld [vmem:[#allocation3 + $0x140] sm:$0xff]
    %v2159 = vld [vmem:[#allocation3 + $0x148] sm:$0xff]
    %v2160 = vld [vmem:[#allocation3 + $0x150] sm:$0xff]
    %v2161 = vld [vmem:[#allocation3 + $0x158] sm:$0xff]
    %v2162 = vld [vmem:[#allocation3 + $0x160] sm:$0xff]
    %v2163 = vld [vmem:[#allocation3 + $0x168] sm:$0xff]
    %v2164 = vld [vmem:[#allocation3 + $0x170] sm:$0xff]
    %v2165 = vld [vmem:[#allocation3 + $0x178] sm:$0xff]
    %v2166 = vld [vmem:[#allocation3 + $0x180] sm:$0xff]
    %v2167 = vld [vmem:[#allocation3 + $0x188] sm:$0xff]
    %v2168 = vld [vmem:[#allocation3 + $0x190] sm:$0xff]
    %v2169 = vld [vmem:[#allocation3 + $0x198] sm:$0xff]
    %v2170 = vld [vmem:[#allocation3 + $0x1a0] sm:$0xff]
    %v2171 = vld [vmem:[#allocation3 + $0x1a8] sm:$0xff]
    %v2172 = vld [vmem:[#allocation3 + $0x1b0] sm:$0xff]
    %v2173 = vld [vmem:[#allocation3 + $0x1b8] sm:$0xff]
    %v2174 = vld [vmem:[#allocation3 + $0x1c0] sm:$0xff]
    %v2175 = vld [vmem:[#allocation3 + $0x1c8] sm:$0xff]
    %v2176 = vld [vmem:[#allocation3 + $0x1d0] sm:$0xff]
    %v2177 = vld [vmem:[#allocation3 + $0x1d8] sm:$0xff]
    %v2178 = vld [vmem:[#allocation3 + $0x1e0] sm:$0xff]
    %v2179 = vld [vmem:[#allocation3 + $0x1e8] sm:$0xff]
    %v2180 = vld [vmem:[#allocation3 + $0x1f0] sm:$0xff]
    %v2181 = vld [vmem:[#allocation3 + $0x1f8] sm:$0xff]
    %v2182 = vld [vmem:[#allocation3 + $0x200] sm:$0xff]
    %v2183 = vld [vmem:[#allocation3 + $0x208] sm:$0xff]
    %v2184 = vld [vmem:[#allocation3 + $0x210] sm:$0xff]
    %v2185 = vld [vmem:[#allocation3 + $0x218] sm:$0xff]
    %v2186 = vld [vmem:[#allocation3 + $0x220] sm:$0xff]
    %v2187 = vld [vmem:[#allocation3 + $0x228] sm:$0xff]
    %v2188 = vld [vmem:[#allocation3 + $0x230] sm:$0xff]
    %v2189 = vld [vmem:[#allocation3 + $0x238] sm:$0xff]
    %v2190 = vld [vmem:[#allocation3 + $0x240] sm:$0xff]
    %v2191 = vld [vmem:[#allocation3 + $0x248] sm:$0xff]
    %v2192 = vld [vmem:[#allocation3 + $0x250] sm:$0xff]
    %v2193 = vld [vmem:[#allocation3 + $0x258] sm:$0xff]
    %v2194 = vld [vmem:[#allocation3 + $0x260] sm:$0xff]
    %v2195 = vld [vmem:[#allocation3 + $0x268] sm:$0xff]
    %v2196 = vld [vmem:[#allocation3 + $0x270] sm:$0xff]
    %v2197 = vld [vmem:[#allocation3 + $0x278] sm:$0xff]
    %v2198 = vld [vmem:[#allocation3 + $0x280] sm:$0xff]
    %v2199 = vld [vmem:[#allocation3 + $0x288] sm:$0xff]
    %v2200 = vld [vmem:[#allocation3 + $0x290] sm:$0xff]
    %v2201 = vld [vmem:[#allocation3 + $0x298] sm:$0xff]
    %v2202 = vld [vmem:[#allocation3 + $0x2a0] sm:$0xff]
    %v2203 = vld [vmem:[#allocation3 + $0x2a8] sm:$0xff]
    %v2204 = vld [vmem:[#allocation3 + $0x2b0] sm:$0xff]
    %v2205 = vld [vmem:[#allocation3 + $0x2b8] sm:$0xff]
    %v2206 = vld [vmem:[#allocation3 + $0x2c0] sm:$0xff]
    %v2207 = vld [vmem:[#allocation3 + $0x2c8] sm:$0xff]
    %v2208 = vld [vmem:[#allocation3 + $0x2d0] sm:$0xff]
    %v2209 = vld [vmem:[#allocation3 + $0x2d8] sm:$0xff]
    %v2210 = vld [vmem:[#allocation3 + $0x2e0] sm:$0xff]
    %v2211 = vld [vmem:[#allocation3 + $0x2e8] sm:$0xff]
    %v2212 = vld [vmem:[#allocation3 + $0x2f0] sm:$0xff]
    %v2213 = vld [vmem:[#allocation3 + $0x2f8] sm:$0xff]
    %v2214 = vld [vmem:[#allocation3 + $0x300] sm:$0xff]
    %v2215 = vld [vmem:[#allocation3 + $0x308] sm:$0xff]
    %v2216 = vld [vmem:[#allocation3 + $0x310] sm:$0xff]
    %v2217 = vld [vmem:[#allocation3 + $0x318] sm:$0xff]
    %v2218 = vld [vmem:[#allocation3 + $0x320] sm:$0xff]
    %v2219 = vld [vmem:[#allocation3 + $0x328] sm:$0xff]
    %v2220 = vld [vmem:[#allocation3 + $0x330] sm:$0xff]
    %v2221 = vld [vmem:[#allocation3 + $0x338] sm:$0xff]
    %v2222 = vld [vmem:[#allocation3 + $0x340] sm:$0xff]
    %v2223 = vld [vmem:[#allocation3 + $0x348] sm:$0xff]
    %v2224 = vld [vmem:[#allocation3 + $0x350] sm:$0xff]
    %v2225 = vld [vmem:[#allocation3 + $0x358] sm:$0xff]
    %v2226 = vld [vmem:[#allocation3 + $0x360] sm:$0xff]
    %v2227 = vld [vmem:[#allocation3 + $0x368] sm:$0xff]
    %v2228 = vld [vmem:[#allocation3 + $0x370] sm:$0xff]
    %v2229 = vld [vmem:[#allocation3 + $0x378] sm:$0xff]
    %vm2230 = vcmask 785408
    %v2232 = vsel %vm2230, %v2115, 0
    %v2235 = vsel %vm2230, %v2117, 0
    %2237 = vmatprep.subr.mxu0 %v2119
    %2238 = vmatpush1.msra.mxu0 %v2118
    %2239 = vmatprep.subr.mxu0 %v2123
    %2240 = vmatpush1.msra.mxu0 %v2122
    %2241 = vmatprep.subr.mxu0 %v2127
    %2242 = vmatpush1.msra.mxu0 %v2126
    %2243 = vmatprep.subr.mxu0 %v2131
    %2244 = vmatpush1.msra.mxu0 %v2130
    %2245 = vmatprep.subr.mxu0 %v2135
    %2246 = vmatpush1.msra.mxu0 %v2134
    %2247 = vmatprep.subr.mxu0 %v2139
    %2248 = vmatpush1.msra.mxu0 %v2138
    %2249 = vmatprep.subr.mxu0 %v2143
    %2250 = vmatpush1.msra.mxu0 %v2142
    %2251 = vmatprep.subr.mxu0 %v2147
    %2252 = vmatpush1.msra.mxu0 %v2146
    %2253 = vmatprep.subr.mxu0 %v2151
    %2254 = vmatpush1.msra.mxu0 %v2150
    %2255 = vmatprep.subr.mxu0 %v2155
    %2256 = vmatpush1.msra.mxu0 %v2154
    %2257 = vmatprep.subr.mxu0 %v2159
    %2258 = vmatpush1.msra.mxu0 %v2158
    %2259 = vmatprep.subr.mxu0 %v2163
    %2260 = vmatpush1.msra.mxu0 %v2162
    %2261 = vmatprep.subr.mxu0 %v2167
    %2262 = vmatpush1.msra.mxu0 %v2166
    %2263 = vmatprep.subr.mxu0 %v2171
    %2264 = vmatpush1.msra.mxu0 %v2170
    %2265 = vmatprep.subr.mxu0 %v2175
    %2266 = vmatpush1.msra.mxu0 %v2174
    %2267 = vmatprep.subr.mxu0 %v2179
    %2268 = vmatpush1.msra.mxu0 %v2178
    %2269 = vmatprep.subr.mxu0 %v2183
    %2270 = vmatpush1.msra.mxu0 %v2182
    %2271 = vmatprep.subr.mxu0 %v2187
    %2272 = vmatpush1.msra.mxu0 %v2186
    %2273 = vmatprep.subr.mxu0 %v2191
    %2274 = vmatpush1.msra.mxu0 %v2190
    %2275 = vmatprep.subr.mxu0 %v2195
    %2276 = vmatpush1.msra.mxu0 %v2194
    %2277 = vmatprep.subr.mxu0 %v2199
    %2278 = vmatpush1.msra.mxu0 %v2198
    %2279 = vmatprep.subr.mxu0 %v2203
    %2280 = vmatpush1.msra.mxu0 %v2202
    %2281 = vmatprep.subr.mxu0 %v2207
    %2282 = vmatpush1.msra.mxu0 %v2206
    %2283 = vmatprep.subr.mxu0 %v2211
    %2284 = vmatpush1.msra.mxu0 %v2210
    %2285 = vmatprep.subr.mxu0 %v2215
    %2286 = vmatpush1.msra.mxu0 %v2214
    %2287 = vmatprep.subr.mxu0 %v2219
    %2288 = vmatpush1.msra.mxu0 %v2218
    %2289 = vmatprep.subr.mxu0 %v2223
    %2290 = vmatpush1.msra.mxu0 %v2222
    %2291 = vmatprep.subr.mxu0 %v2227
    %2292 = vmatpush1.msra.mxu0 %v2226
    %2293 = vmatprep.subr.mxu0 0.0
    %2294 = vmatpush1.msra.mxu0 0.0
    %2295 = vmatprep.subr.mxu0 0.0
    %2296 = vmatpush1.msra.mxu0 0.0
    %2297 = vmatprep.subr.mxu0 0.0
    %2298 = vmatpush1.msra.mxu0 0.0
    %2299 = vmatprep.subr.mxu0 0.0
    %2300 = vmatpush1.msra.mxu0 0.0
    %2301 = vmatprep.mubr.f32.mxu0 %v2232
    %2302 = vmatmul.mubr.f32.gmra.mrb[0].mxu0 %v2114
    %v2303 = vpop.f32.mrb[0].mxu0
    %v2304 = vadd.f32 0.0, %v2303
    %v2305 = vpop.f32.mrb[0].mxu0
    %v2306 = vadd.f32 0.0, %v2305
    %2307 = vmatprep.mubr.f32.mxu0 %v2235
    %2308 = vmatmul.mubr.f32.gmra.mrb[0].mxu0 %v2116
    %v2309 = vpop.f32.mrb[0].mxu0
    %v2310 = vadd.f32 0.0, %v2309
    %v2311 = vpop.f32.mrb[0].mxu0
    %v2312 = vadd.f32 0.0, %v2311
    %2313 = vdwg.mxu0
    %2314 = vmatprep.subr.mxu0 %v2121
    %2315 = vmatpush1.msra.mxu0 %v2120
    %2316 = vmatprep.subr.mxu0 %v2125
    %2317 = vmatpush1.msra.mxu0 %v2124
    %2318 = vmatprep.subr.mxu0 %v2129
    %2319 = vmatpush1.msra.mxu0 %v2128
    %2320 = vmatprep.subr.mxu0 %v2133
    %2321 = vmatpush1.msra.mxu0 %v2132
    %2322 = vmatprep.subr.mxu0 %v2137
    %2323 = vmatpush1.msra.mxu0 %v2136
    %2324 = vmatprep.subr.mxu0 %v2141
    %2325 = vmatpush1.msra.mxu0 %v2140
    %2326 = vmatprep.subr.mxu0 %v2145
    %2327 = vmatpush1.msra.mxu0 %v2144
    %2328 = vmatprep.subr.mxu0 %v2149
    %2329 = vmatpush1.msra.mxu0 %v2148
    %2330 = vmatprep.subr.mxu0 %v2153
    %2331 = vmatpush1.msra.mxu0 %v2152
    %2332 = vmatprep.subr.mxu0 %v2157
    %2333 = vmatpush1.msra.mxu0 %v2156
    %2334 = vmatprep.subr.mxu0 %v2161
    %2335 = vmatpush1.msra.mxu0 %v2160
    %2336 = vmatprep.subr.mxu0 %v2165
    %2337 = vmatpush1.msra.mxu0 %v2164
    %2338 = vmatprep.subr.mxu0 %v2169
    %2339 = vmatpush1.msra.mxu0 %v2168
    %2340 = vmatprep.subr.mxu0 %v2173
    %2341 = vmatpush1.msra.mxu0 %v2172
    %2342 = vmatprep.subr.mxu0 %v2177
    %2343 = vmatpush1.msra.mxu0 %v2176
    %2344 = vmatprep.subr.mxu0 %v2181
    %2345 = vmatpush1.msra.mxu0 %v2180
    %2346 = vmatprep.subr.mxu0 %v2185
    %2347 = vmatpush1.msra.mxu0 %v2184
    %2348 = vmatprep.subr.mxu0 %v2189
    %2349 = vmatpush1.msra.mxu0 %v2188
    %2350 = vmatprep.subr.mxu0 %v2193
    %2351 = vmatpush1.msra.mxu0 %v2192
    %2352 = vmatprep.subr.mxu0 %v2197
    %2353 = vmatpush1.msra.mxu0 %v2196
    %2354 = vmatprep.subr.mxu0 %v2201
    %2355 = vmatpush1.msra.mxu0 %v2200
    %2356 = vmatprep.subr.mxu0 %v2205
    %2357 = vmatpush1.msra.mxu0 %v2204
    %2358 = vmatprep.subr.mxu0 %v2209
    %2359 = vmatpush1.msra.mxu0 %v2208
    %2360 = vmatprep.subr.mxu0 %v2213
    %2361 = vmatpush1.msra.mxu0 %v2212
    %2362 = vmatprep.subr.mxu0 %v2217
    %2363 = vmatpush1.msra.mxu0 %v2216
    %2364 = vmatprep.subr.mxu0 %v2221
    %2365 = vmatpush1.msra.mxu0 %v2220
    %2366 = vmatprep.subr.mxu0 %v2225
    %2367 = vmatpush1.msra.mxu0 %v2224
    %2368 = vmatprep.subr.mxu0 %v2229
    %2369 = vmatpush1.msra.mxu0 %v2228
    %2370 = vmatprep.subr.mxu0 0.0
    %2371 = vmatpush1.msra.mxu0 0.0
    %2372 = vmatprep.subr.mxu0 0.0
    %2373 = vmatpush1.msra.mxu0 0.0
    %2374 = vmatprep.subr.mxu0 0.0
    %2375 = vmatpush1.msra.mxu0 0.0
    %2376 = vmatprep.subr.mxu0 0.0
    %2377 = vmatpush1.msra.mxu0 0.0
    %2378 = vmatprep.mubr.f32.mxu0 %v2232
    %2379 = vmatmul.mubr.f32.gmra.mrb[0].mxu0 %v2114
    %v2380 = vpop.f32.mrb[0].mxu0
    %v2381 = vadd.f32 0.0, %v2380
    %v2382 = vpop.f32.mrb[0].mxu0
    %v2383 = vadd.f32 0.0, %v2382
    %2384 = vmatprep.mubr.f32.mxu0 %v2235
    %2385 = vmatmul.mubr.f32.gmra.mrb[0].mxu0 %v2116
    %v2386 = vpop.f32.mrb[0].mxu0
    %v2387 = vadd.f32 0.0, %v2386
    %v2388 = vpop.f32.mrb[0].mxu0
    %v2389 = vadd.f32 0.0, %v2388
    %2390 = vdwg.mxu0
    %2391 = vst [vmem:[#allocation4] sm:$0xff] %v2304
    %2392 = vst [vmem:[#allocation4 + $0x8] sm:$0xff] %v2306
    %2393 = vst [vmem:[#allocation4 + $0x10] sm:$0xff] %v2381
    %2394 = vst [vmem:[#allocation4 + $0x18] sm:$0xff] %v2383
    %2395 = vst [vmem:[#allocation4 + $0x40] sm:$0x1] %v2310
    %2396 = vst [vmem:[#allocation4 + $0x48] sm:$0x1] %v2312
    %2397 = vst [vmem:[#allocation4 + $0x50] sm:$0x1] %v2387
    %2398 = vst [vmem:[#allocation4 + $0x58] sm:$0x1] %v2389
    %s2399 = scalar_lea.vmem %s0, 16
    %v2400 = vld [vmem:[%s2399] sm:$0xff]
    %v2401 = vld [vmem:[%s2399 + $0x8] sm:$0xff]
    %v2404 = vcombine.high %v2400, %v2400
    %v2405 = vcombine.high %v2401, %v2401
    %2408 = vst [vmem:[#allocation2 + $0x8] sm:$0xf] %v2400
    %2409 = vst [vmem:[#allocation2 + $0x10] sm:$0xf] %v2404
    %2410 = vst [vmem:[#allocation2 + $0x18] sm:$0xf] %v2401
    %2411 = vst [vmem:[#allocation2 + $0x20] sm:$0xf] %v2405
    %v2412 = vld [vmem:[#allocation2] sm:$0xff]
    %v2413 = vld [vmem:[#allocation2 + $0x8] sm:$0xff]
    %v2414 = vld [vmem:[#allocation2 + $0x10] sm:$0xff]
    %v2415 = vld [vmem:[#allocation2 + $0x18] sm:$0xff]
    %v2416 = vld [vmem:[#allocation2 + $0x20] sm:$0xff]
    %v2417 = vld [vmem:[#allocation7] ss:$8 sm:$0xf]
    %v2419 = vlaneseq
    %v2420 = vshrl.u32 %v2419, 7
    %v2421 = vsub.s32 0, %v2420
    %v2422 = vrot.slane %v2417, %v2421
    %v2423 = vlaneseq
    %v2424 = vshrl.u32 %v2423, 7
    %v2425 = vsub.s32 1, %v2424
    %v2426 = vrot.slane %v2417, %v2425
    %v2427 = vlaneseq
    %v2428 = vshrl.u32 %v2427, 7
    %v2429 = vsub.s32 2, %v2428
    %v2430 = vrot.slane %v2417, %v2429
    %v2431 = vlaneseq
    %v2432 = vshrl.u32 %v2431, 7
    %v2433 = vsub.s32 3, %v2432
    %v2434 = vrot.slane %v2417, %v2433
    %2435 = vrot.lane.b32.xlu0 %v2422, 55
    %v2436 = vpop.permute.xlu0 %2435
    %2437 = vrot.lane.b32.xlu0 %v2426, 55
    %v2438 = vpop.permute.xlu0 %2437
    %2439 = vrot.lane.b32.xlu0 %v2430, 55
    %v2440 = vpop.permute.xlu0 %2439
    %2441 = vrot.lane.b32.xlu0 %v2434, 55
    %v2442 = vpop.permute.xlu0 %2441
    %v2443 = vsel %vm222, %v2436, %v2438
    %v2444 = vsel %vm222, %v2438, %v2440
    %v2445 = vsel %vm222, %v2440, %v2442
    %v2451 = vmul.f32 %v2412, %v2436
    %v2452 = vmul.f32 %v2413, %v2443
    %v2453 = vmul.f32 %v2414, %v2444
    %v2454 = vmul.f32 %v2415, %v2445
    %v2455 = vmul.f32 %v2416, %v2442
    %2461 = vrot.lane.b32.xlu0 %v2451, 73
    %v2462 = vpop.permute.xlu0 %2461
    %2463 = vrot.lane.b32.xlu0 %v2452, 73
    %v2464 = vpop.permute.xlu0 %2463
    %2465 = vrot.lane.b32.xlu0 %v2453, 73
    %v2466 = vpop.permute.xlu0 %2465
    %2467 = vrot.lane.b32.xlu0 %v2454, 73
    %v2468 = vpop.permute.xlu0 %2467
    %2469 = vrot.lane.b32.xlu0 %v2455, 73
    %v2470 = vpop.permute.xlu0 %2469
    %v2471 = vsel %vm251, %v2462, %v2464
    %v2472 = vsel %vm251, %v2464, %v2466
    %v2473 = vsel %vm251, %v2466, %v2468
    %v2474 = vsel %vm251, %v2468, %v2470
    %2479 = vst [vmem:[#allocation3] sm:$0xff] %v2471
    %2480 = vst [vmem:[#allocation3 + $0x8] sm:$0xff] %v2472
    %2481 = vst [vmem:[#allocation3 + $0x10] sm:$0xff] %v2473
    %2482 = vst [vmem:[#allocation3 + $0x18] sm:$0xff] %v2474
    %v2483 = vld [vmem:[#allocation2] sm:$0xff]
    %v2484 = vld [vmem:[#allocation2 + $0x8] sm:$0xff]
    %v2485 = vld [vmem:[#allocation2 + $0x10] sm:$0xff]
    %v2486 = vld [vmem:[#allocation2 + $0x18] sm:$0xff]
    %v2487 = vld [vmem:[#allocation2 + $0x20] sm:$0xff]
    %v2488 = vld [vmem:[%s269] ss:$8 sm:$0xf]
    %v2490 = vlaneseq
    %v2491 = vshrl.u32 %v2490, 7
    %v2492 = vsub.s32 0, %v2491
    %v2493 = vrot.slane %v2488, %v2492
    %v2494 = vlaneseq
    %v2495 = vshrl.u32 %v2494, 7
    %v2496 = vsub.s32 1, %v2495
    %v2497 = vrot.slane %v2488, %v2496
    %v2498 = vlaneseq
    %v2499 = vshrl.u32 %v2498, 7
    %v2500 = vsub.s32 2, %v2499
    %v2501 = vrot.slane %v2488, %v2500
    %v2502 = vlaneseq
    %v2503 = vshrl.u32 %v2502, 7
    %v2504 = vsub.s32 3, %v2503
    %v2505 = vrot.slane %v2488, %v2504
    %2506 = vrot.lane.b32.xlu0 %v2493, 56
    %v2507 = vpop.permute.xlu0 %2506
    %2508 = vrot.lane.b32.xlu0 %v2497, 56
    %v2509 = vpop.permute.xlu0 %2508
    %2510 = vrot.lane.b32.xlu0 %v2501, 56
    %v2511 = vpop.permute.xlu0 %2510
    %2512 = vrot.lane.b32.xlu0 %v2505, 56
    %v2513 = vpop.permute.xlu0 %2512
    %v2514 = vsel %vm296, %v2507, %v2509
    %v2515 = vsel %vm296, %v2509, %v2511
    %v2516 = vsel %vm296, %v2511, %v2513
    %v2522 = vmul.f32 %v2483, %v2507
    %v2523 = vmul.f32 %v2484, %v2514
    %v2524 = vmul.f32 %v2485, %v2515
    %v2525 = vmul.f32 %v2486, %v2516
    %v2526 = vmul.f32 %v2487, %v2513
    %2532 = vrot.lane.b32.xlu0 %v2522, 72
    %v2533 = vpop.permute.xlu0 %2532
    %2534 = vrot.lane.b32.xlu0 %v2523, 72
    %v2535 = vpop.permute.xlu0 %2534
    %2536 = vrot.lane.b32.xlu0 %v2524, 72
    %v2537 = vpop.permute.xlu0 %2536
    %2538 = vrot.lane.b32.xlu0 %v2525, 72
    %v2539 = vpop.permute.xlu0 %2538
    %2540 = vrot.lane.b32.xlu0 %v2526, 72
    %v2541 = vpop.permute.xlu0 %2540
    %v2542 = vsel %vm325, %v2533, %v2535
    %v2543 = vsel %vm325, %v2535, %v2537
    %v2544 = vsel %vm325, %v2537, %v2539
    %v2545 = vsel %vm325, %v2539, %v2541
    %2550 = vst [vmem:[#allocation3 + $0x20] sm:$0xff] %v2542
    %2551 = vst [vmem:[#allocation3 + $0x28] sm:$0xff] %v2543
    %2552 = vst [vmem:[#allocation3 + $0x30] sm:$0xff] %v2544
    %2553 = vst [vmem:[#allocation3 + $0x38] sm:$0xff] %v2545
    %v2554 = vld [vmem:[#allocation2] sm:$0xff]
    %v2555 = vld [vmem:[#allocation2 + $0x8] sm:$0xff]
    %v2556 = vld [vmem:[#allocation2 + $0x10] sm:$0xff]
    %v2557 = vld [vmem:[#allocation2 + $0x18] sm:$0xff]
    %v2558 = vld [vmem:[#allocation2 + $0x20] sm:$0xff]
    %v2559 = vld [vmem:[%s343] ss:$8 sm:$0xf]
    %v2561 = vlaneseq
    %v2562 = vshrl.u32 %v2561, 7
    %v2563 = vsub.s32 0, %v2562
    %v2564 = vrot.slane %v2559, %v2563
    %v2565 = vlaneseq
    %v2566 = vshrl.u32 %v2565, 7
    %v2567 = vsub.s32 1, %v2566
    %v2568 = vrot.slane %v2559, %v2567
    %v2569 = vlaneseq
    %v2570 = vshrl.u32 %v2569, 7
    %v2571 = vsub.s32 2, %v2570
    %v2572 = vrot.slane %v2559, %v2571
    %v2573 = vlaneseq
    %v2574 = vshrl.u32 %v2573, 7
    %v2575 = vsub.s32 3, %v2574
    %v2576 = vrot.slane %v2559, %v2575
    %2577 = vrot.lane.b32.xlu0 %v2564, 57
    %v2578 = vpop.permute.xlu0 %2577
    %2579 = vrot.lane.b32.xlu0 %v2568, 57
    %v2580 = vpop.permute.xlu0 %2579
    %2581 = vrot.lane.b32.xlu0 %v2572, 57
    %v2582 = vpop.permute.xlu0 %2581
    %2583 = vrot.lane.b32.xlu0 %v2576, 57
    %v2584 = vpop.permute.xlu0 %2583
    %v2585 = vsel %vm370, %v2578, %v2580
    %v2586 = vsel %vm370, %v2580, %v2582
    %v2587 = vsel %vm370, %v2582, %v2584
    %v2593 = vmul.f32 %v2554, %v2578
    %v2594 = vmul.f32 %v2555, %v2585
    %v2595 = vmul.f32 %v2556, %v2586
    %v2596 = vmul.f32 %v2557, %v2587
    %v2597 = vmul.f32 %v2558, %v2584
    %2603 = vrot.lane.b32.xlu0 %v2593, 71
    %v2604 = vpop.permute.xlu0 %2603
    %2605 = vrot.lane.b32.xlu0 %v2594, 71
    %v2606 = vpop.permute.xlu0 %2605
    %2607 = vrot.lane.b32.xlu0 %v2595, 71
    %v2608 = vpop.permute.xlu0 %2607
    %2609 = vrot.lane.b32.xlu0 %v2596, 71
    %v2610 = vpop.permute.xlu0 %2609
    %2611 = vrot.lane.b32.xlu0 %v2597, 71
    %v2612 = vpop.permute.xlu0 %2611
    %v2613 = vsel %vm399, %v2604, %v2606
    %v2614 = vsel %vm399, %v2606, %v2608
    %v2615 = vsel %vm399, %v2608, %v2610
    %v2616 = vsel %vm399, %v2610, %v2612
    %2621 = vst [vmem:[#allocation3 + $0x40] sm:$0xff] %v2613
    %2622 = vst [vmem:[#allocation3 + $0x48] sm:$0xff] %v2614
    %2623 = vst [vmem:[#allocation3 + $0x50] sm:$0xff] %v2615
    %2624 = vst [vmem:[#allocation3 + $0x58] sm:$0xff] %v2616
    %v2625 = vld [vmem:[#allocation2] sm:$0xff]
    %v2626 = vld [vmem:[#allocation2 + $0x8] sm:$0xff]
    %v2627 = vld [vmem:[#allocation2 + $0x10] sm:$0xff]
    %v2628 = vld [vmem:[#allocation2 + $0x18] sm:$0xff]
    %v2629 = vld [vmem:[#allocation2 + $0x20] sm:$0xff]
    %v2630 = vld [vmem:[%s417] ss:$8 sm:$0xf]
    %v2632 = vlaneseq
    %v2633 = vshrl.u32 %v2632, 7
    %v2634 = vsub.s32 0, %v2633
    %v2635 = vrot.slane %v2630, %v2634
    %v2636 = vlaneseq
    %v2637 = vshrl.u32 %v2636, 7
    %v2638 = vsub.s32 1, %v2637
    %v2639 = vrot.slane %v2630, %v2638
    %v2640 = vlaneseq
    %v2641 = vshrl.u32 %v2640, 7
    %v2642 = vsub.s32 2, %v2641
    %v2643 = vrot.slane %v2630, %v2642
    %v2644 = vlaneseq
    %v2645 = vshrl.u32 %v2644, 7
    %v2646 = vsub.s32 3, %v2645
    %v2647 = vrot.slane %v2630, %v2646
    %2648 = vrot.lane.b32.xlu0 %v2635, 63
    %v2649 = vpop.permute.xlu0 %2648
    %2650 = vrot.lane.b32.xlu0 %v2639, 63
    %v2651 = vpop.permute.xlu0 %2650
    %2652 = vrot.lane.b32.xlu0 %v2643, 63
    %v2653 = vpop.permute.xlu0 %2652
    %2654 = vrot.lane.b32.xlu0 %v2647, 63
    %v2655 = vpop.permute.xlu0 %2654
    %v2656 = vsel %vm444, %v2649, %v2651
    %v2657 = vsel %vm444, %v2651, %v2653
    %v2658 = vsel %vm444, %v2653, %v2655
    %v2664 = vmul.f32 %v2625, %v2649
    %v2665 = vmul.f32 %v2626, %v2656
    %v2666 = vmul.f32 %v2627, %v2657
    %v2667 = vmul.f32 %v2628, %v2658
    %v2668 = vmul.f32 %v2629, %v2655
    %2674 = vrot.lane.b32.xlu0 %v2664, 65
    %v2675 = vpop.permute.xlu0 %2674
    %2676 = vrot.lane.b32.xlu0 %v2665, 65
    %v2677 = vpop.permute.xlu0 %2676
    %2678 = vrot.lane.b32.xlu0 %v2666, 65
    %v2679 = vpop.permute.xlu0 %2678
    %2680 = vrot.lane.b32.xlu0 %v2667, 65
    %v2681 = vpop.permute.xlu0 %2680
    %2682 = vrot.lane.b32.xlu0 %v2668, 65
    %v2683 = vpop.permute.xlu0 %2682
    %v2684 = vsel %vm473, %v2675, %v2677
    %v2685 = vsel %vm473, %v2677, %v2679
    %v2686 = vsel %vm473, %v2679, %v2681
    %v2687 = vsel %vm473, %v2681, %v2683
    %2692 = vst [vmem:[#allocation3 + $0x60] sm:$0xff] %v2684
    %2693 = vst [vmem:[#allocation3 + $0x68] sm:$0xff] %v2685
    %2694 = vst [vmem:[#allocation3 + $0x70] sm:$0xff] %v2686
    %2695 = vst [vmem:[#allocation3 + $0x78] sm:$0xff] %v2687
    %v2696 = vld [vmem:[#allocation2] sm:$0xff]
    %v2697 = vld [vmem:[#allocation2 + $0x8] sm:$0xff]
    %v2698 = vld [vmem:[#allocation2 + $0x10] sm:$0xff]
    %v2699 = vld [vmem:[#allocation2 + $0x18] sm:$0xff]
    %v2700 = vld [vmem:[#allocation2 + $0x20] sm:$0xff]
    %v2701 = vld [vmem:[%s491] ss:$8 sm:$0xf]
    %v2703 = vlaneseq
    %v2704 = vshrl.u32 %v2703, 7
    %v2705 = vsub.s32 0, %v2704
    %v2706 = vrot.slane %v2701, %v2705
    %v2707 = vlaneseq
    %v2708 = vshrl.u32 %v2707, 7
    %v2709 = vsub.s32 1, %v2708
    %v2710 = vrot.slane %v2701, %v2709
    %v2711 = vlaneseq
    %v2712 = vshrl.u32 %v2711, 7
    %v2713 = vsub.s32 2, %v2712
    %v2714 = vrot.slane %v2701, %v2713
    %v2715 = vlaneseq
    %v2716 = vshrl.u32 %v2715, 7
    %v2717 = vsub.s32 3, %v2716
    %v2718 = vrot.slane %v2701, %v2717
    %2719 = vrot.lane.b32.xlu0 %v2706, 64
    %v2720 = vpop.permute.xlu0 %2719
    %2721 = vrot.lane.b32.xlu0 %v2710, 64
    %v2722 = vpop.permute.xlu0 %2721
    %2723 = vrot.lane.b32.xlu0 %v2714, 64
    %v2724 = vpop.permute.xlu0 %2723
    %2725 = vrot.lane.b32.xlu0 %v2718, 64
    %v2726 = vpop.permute.xlu0 %2725
    %v2727 = vsel %vm518, %v2720, %v2722
    %v2728 = vsel %vm518, %v2722, %v2724
    %v2729 = vsel %vm518, %v2724, %v2726
    %v2735 = vmul.f32 %v2696, %v2720
    %v2736 = vmul.f32 %v2697, %v2727
    %v2737 = vmul.f32 %v2698, %v2728
    %v2738 = vmul.f32 %v2699, %v2729
    %v2739 = vmul.f32 %v2700, %v2726
    %2745 = vrot.lane.b32.xlu0 %v2735, 64
    %v2746 = vpop.permute.xlu0 %2745
    %2747 = vrot.lane.b32.xlu0 %v2736, 64
    %v2748 = vpop.permute.xlu0 %2747
    %2749 = vrot.lane.b32.xlu0 %v2737, 64
    %v2750 = vpop.permute.xlu0 %2749
    %2751 = vrot.lane.b32.xlu0 %v2738, 64
    %v2752 = vpop.permute.xlu0 %2751
    %2753 = vrot.lane.b32.xlu0 %v2739, 64
    %v2754 = vpop.permute.xlu0 %2753
    %v2755 = vsel %vm518, %v2746, %v2748
    %v2756 = vsel %vm518, %v2748, %v2750
    %v2757 = vsel %vm518, %v2750, %v2752
    %v2758 = vsel %vm518, %v2752, %v2754
    %2763 = vst [vmem:[#allocation3 + $0x80] sm:$0xff] %v2755
    %2764 = vst [vmem:[#allocation3 + $0x88] sm:$0xff] %v2756
    %2765 = vst [vmem:[#allocation3 + $0x90] sm:$0xff] %v2757
    %2766 = vst [vmem:[#allocation3 + $0x98] sm:$0xff] %v2758
    %v2767 = vld [vmem:[#allocation2] sm:$0xff]
    %v2768 = vld [vmem:[#allocation2 + $0x8] sm:$0xff]
    %v2769 = vld [vmem:[#allocation2 + $0x10] sm:$0xff]
    %v2770 = vld [vmem:[#allocation2 + $0x18] sm:$0xff]
    %v2771 = vld [vmem:[#allocation2 + $0x20] sm:$0xff]
    %v2772 = vld [vmem:[%s564] ss:$8 sm:$0xf]
    %v2774 = vlaneseq
    %v2775 = vshrl.u32 %v2774, 7
    %v2776 = vsub.s32 0, %v2775
    %v2777 = vrot.slane %v2772, %v2776
    %v2778 = vlaneseq
    %v2779 = vshrl.u32 %v2778, 7
    %v2780 = vsub.s32 1, %v2779
    %v2781 = vrot.slane %v2772, %v2780
    %v2782 = vlaneseq
    %v2783 = vshrl.u32 %v2782, 7
    %v2784 = vsub.s32 2, %v2783
    %v2785 = vrot.slane %v2772, %v2784
    %v2786 = vlaneseq
    %v2787 = vshrl.u32 %v2786, 7
    %v2788 = vsub.s32 3, %v2787
    %v2789 = vrot.slane %v2772, %v2788
    %2790 = vrot.lane.b32.xlu0 %v2777, 65
    %v2791 = vpop.permute.xlu0 %2790
    %2792 = vrot.lane.b32.xlu0 %v2781, 65
    %v2793 = vpop.permute.xlu0 %2792
    %2794 = vrot.lane.b32.xlu0 %v2785, 65
    %v2795 = vpop.permute.xlu0 %2794
    %2796 = vrot.lane.b32.xlu0 %v2789, 65
    %v2797 = vpop.permute.xlu0 %2796
    %v2798 = vsel %vm473, %v2791, %v2793
    %v2799 = vsel %vm473, %v2793, %v2795
    %v2800 = vsel %vm473, %v2795, %v2797
    %v2806 = vmul.f32 %v2767, %v2791
    %v2807 = vmul.f32 %v2768, %v2798
    %v2808 = vmul.f32 %v2769, %v2799
    %v2809 = vmul.f32 %v2770, %v2800
    %v2810 = vmul.f32 %v2771, %v2797
    %2816 = vrot.lane.b32.xlu0 %v2806, 63
    %v2817 = vpop.permute.xlu0 %2816
    %2818 = vrot.lane.b32.xlu0 %v2807, 63
    %v2819 = vpop.permute.xlu0 %2818
    %2820 = vrot.lane.b32.xlu0 %v2808, 63
    %v2821 = vpop.permute.xlu0 %2820
    %2822 = vrot.lane.b32.xlu0 %v2809, 63
    %v2823 = vpop.permute.xlu0 %2822
    %2824 = vrot.lane.b32.xlu0 %v2810, 63
    %v2825 = vpop.permute.xlu0 %2824
    %v2826 = vsel %vm444, %v2817, %v2819
    %v2827 = vsel %vm444, %v2819, %v2821
    %v2828 = vsel %vm444, %v2821, %v2823
    %v2829 = vsel %vm444, %v2823, %v2825
    %2834 = vst [vmem:[#allocation3 + $0xa0] sm:$0xff] %v2826
    %2835 = vst [vmem:[#allocation3 + $0xa8] sm:$0xff] %v2827
    %2836 = vst [vmem:[#allocation3 + $0xb0] sm:$0xff] %v2828
    %2837 = vst [vmem:[#allocation3 + $0xb8] sm:$0xff] %v2829
    %v2838 = vld [vmem:[#allocation2] sm:$0xff]
    %v2839 = vld [vmem:[#allocation2 + $0x8] sm:$0xff]
    %v2840 = vld [vmem:[#allocation2 + $0x10] sm:$0xff]
    %v2841 = vld [vmem:[#allocation2 + $0x18] sm:$0xff]
    %v2842 = vld [vmem:[#allocation2 + $0x20] sm:$0xff]
    %v2843 = vld [vmem:[%s636] ss:$8 sm:$0xf]
    %v2845 = vlaneseq
    %v2846 = vshrl.u32 %v2845, 7
    %v2847 = vsub.s32 0, %v2846
    %v2848 = vrot.slane %v2843, %v2847
    %v2849 = vlaneseq
    %v2850 = vshrl.u32 %v2849, 7
    %v2851 = vsub.s32 1, %v2850
    %v2852 = vrot.slane %v2843, %v2851
    %v2853 = vlaneseq
    %v2854 = vshrl.u32 %v2853, 7
    %v2855 = vsub.s32 2, %v2854
    %v2856 = vrot.slane %v2843, %v2855
    %v2857 = vlaneseq
    %v2858 = vshrl.u32 %v2857, 7
    %v2859 = vsub.s32 3, %v2858
    %v2860 = vrot.slane %v2843, %v2859
    %2861 = vrot.lane.b32.xlu0 %v2848, 71
    %v2862 = vpop.permute.xlu0 %2861
    %2863 = vrot.lane.b32.xlu0 %v2852, 71
    %v2864 = vpop.permute.xlu0 %2863
    %2865 = vrot.lane.b32.xlu0 %v2856, 71
    %v2866 = vpop.permute.xlu0 %2865
    %2867 = vrot.lane.b32.xlu0 %v2860, 71
    %v2868 = vpop.permute.xlu0 %2867
    %v2869 = vsel %vm399, %v2862, %v2864
    %v2870 = vsel %vm399, %v2864, %v2866
    %v2871 = vsel %vm399, %v2866, %v2868
    %v2877 = vmul.f32 %v2838, %v2862
    %v2878 = vmul.f32 %v2839, %v2869
    %v2879 = vmul.f32 %v2840, %v2870
    %v2880 = vmul.f32 %v2841, %v2871
    %v2881 = vmul.f32 %v2842, %v2868
    %2887 = vrot.lane.b32.xlu0 %v2877, 57
    %v2888 = vpop.permute.xlu0 %2887
    %2889 = vrot.lane.b32.xlu0 %v2878, 57
    %v2890 = vpop.permute.xlu0 %2889
    %2891 = vrot.lane.b32.xlu0 %v2879, 57
    %v2892 = vpop.permute.xlu0 %2891
    %2893 = vrot.lane.b32.xlu0 %v2880, 57
    %v2894 = vpop.permute.xlu0 %2893
    %2895 = vrot.lane.b32.xlu0 %v2881, 57
    %v2896 = vpop.permute.xlu0 %2895
    %v2897 = vsel %vm370, %v2888, %v2890
    %v2898 = vsel %vm370, %v2890, %v2892
    %v2899 = vsel %vm370, %v2892, %v2894
    %v2900 = vsel %vm370, %v2894, %v2896
    %2905 = vst [vmem:[#allocation3 + $0xc0] sm:$0xff] %v2897
    %2906 = vst [vmem:[#allocation3 + $0xc8] sm:$0xff] %v2898
    %2907 = vst [vmem:[#allocation3 + $0xd0] sm:$0xff] %v2899
    %2908 = vst [vmem:[#allocation3 + $0xd8] sm:$0xff] %v2900
    %v2909 = vld [vmem:[#allocation2] sm:$0xff]
    %v2910 = vld [vmem:[#allocation2 + $0x8] sm:$0xff]
    %v2911 = vld [vmem:[#allocation2 + $0x10] sm:$0xff]
    %v2912 = vld [vmem:[#allocation2 + $0x18] sm:$0xff]
    %v2913 = vld [vmem:[#allocation2 + $0x20] sm:$0xff]
    %v2914 = vld [vmem:[%s708] ss:$8 sm:$0xf]
    %v2916 = vlaneseq
    %v2917 = vshrl.u32 %v2916, 7
    %v2918 = vsub.s32 0, %v2917
    %v2919 = vrot.slane %v2914, %v2918
    %v2920 = vlaneseq
    %v2921 = vshrl.u32 %v2920, 7
    %v2922 = vsub.s32 1, %v2921
    %v2923 = vrot.slane %v2914, %v2922
    %v2924 = vlaneseq
    %v2925 = vshrl.u32 %v2924, 7
    %v2926 = vsub.s32 2, %v2925
    %v2927 = vrot.slane %v2914, %v2926
    %v2928 = vlaneseq
    %v2929 = vshrl.u32 %v2928, 7
    %v2930 = vsub.s32 3, %v2929
    %v2931 = vrot.slane %v2914, %v2930
    %2932 = vrot.lane.b32.xlu0 %v2919, 72
    %v2933 = vpop.permute.xlu0 %2932
    %2934 = vrot.lane.b32.xlu0 %v2923, 72
    %v2935 = vpop.permute.xlu0 %2934
    %2936 = vrot.lane.b32.xlu0 %v2927, 72
    %v2937 = vpop.permute.xlu0 %2936
    %2938 = vrot.lane.b32.xlu0 %v2931, 72
    %v2939 = vpop.permute.xlu0 %2938
    %v2940 = vsel %vm325, %v2933, %v2935
    %v2941 = vsel %vm325, %v2935, %v2937
    %v2942 = vsel %vm325, %v2937, %v2939
    %v2948 = vmul.f32 %v2909, %v2933
    %v2949 = vmul.f32 %v2910, %v2940
    %v2950 = vmul.f32 %v2911, %v2941
    %v2951 = vmul.f32 %v2912, %v2942
    %v2952 = vmul.f32 %v2913, %v2939
    %2958 = vrot.lane.b32.xlu0 %v2948, 56
    %v2959 = vpop.permute.xlu0 %2958
    %2960 = vrot.lane.b32.xlu0 %v2949, 56
    %v2961 = vpop.permute.xlu0 %2960
    %2962 = vrot.lane.b32.xlu0 %v2950, 56
    %v2963 = vpop.permute.xlu0 %2962
    %2964 = vrot.lane.b32.xlu0 %v2951, 56
    %v2965 = vpop.permute.xlu0 %2964
    %2966 = vrot.lane.b32.xlu0 %v2952, 56
    %v2967 = vpop.permute.xlu0 %2966
    %v2968 = vsel %vm296, %v2959, %v2961
    %v2969 = vsel %vm296, %v2961, %v2963
    %v2970 = vsel %vm296, %v2963, %v2965
    %v2971 = vsel %vm296, %v2965, %v2967
    %2976 = vst [vmem:[#allocation3 + $0xe0] sm:$0xff] %v2968
    %2977 = vst [vmem:[#allocation3 + $0xe8] sm:$0xff] %v2969
    %2978 = vst [vmem:[#allocation3 + $0xf0] sm:$0xff] %v2970
    %2979 = vst [vmem:[#allocation3 + $0xf8] sm:$0xff] %v2971
    %v2980 = vld [vmem:[#allocation2] sm:$0xff]
    %v2981 = vld [vmem:[#allocation2 + $0x8] sm:$0xff]
    %v2982 = vld [vmem:[#allocation2 + $0x10] sm:$0xff]
    %v2983 = vld [vmem:[#allocation2 + $0x18] sm:$0xff]
    %v2984 = vld [vmem:[#allocation2 + $0x20] sm:$0xff]
    %v2985 = vld [vmem:[%s780] ss:$8 sm:$0xf]
    %v2987 = vlaneseq
    %v2988 = vshrl.u32 %v2987, 7
    %v2989 = vsub.s32 0, %v2988
    %v2990 = vrot.slane %v2985, %v2989
    %v2991 = vlaneseq
    %v2992 = vshrl.u32 %v2991, 7
    %v2993 = vsub.s32 1, %v2992
    %v2994 = vrot.slane %v2985, %v2993
    %v2995 = vlaneseq
    %v2996 = vshrl.u32 %v2995, 7
    %v2997 = vsub.s32 2, %v2996
    %v2998 = vrot.slane %v2985, %v2997
    %v2999 = vlaneseq
    %v3000 = vshrl.u32 %v2999, 7
    %v3001 = vsub.s32 3, %v3000
    %v3002 = vrot.slane %v2985, %v3001
    %3003 = vrot.lane.b32.xlu0 %v2990, 73
    %v3004 = vpop.permute.xlu0 %3003
    %3005 = vrot.lane.b32.xlu0 %v2994, 73
    %v3006 = vpop.permute.xlu0 %3005
    %3007 = vrot.lane.b32.xlu0 %v2998, 73
    %v3008 = vpop.permute.xlu0 %3007
    %3009 = vrot.lane.b32.xlu0 %v3002, 73
    %v3010 = vpop.permute.xlu0 %3009
    %v3011 = vsel %vm251, %v3004, %v3006
    %v3012 = vsel %vm251, %v3006, %v3008
    %v3013 = vsel %vm251, %v3008, %v3010
    %v3019 = vmul.f32 %v2980, %v3004
    %v3020 = vmul.f32 %v2981, %v3011
    %v3021 = vmul.f32 %v2982, %v3012
    %v3022 = vmul.f32 %v2983, %v3013
    %v3023 = vmul.f32 %v2984, %v3010
    %3029 = vrot.lane.b32.xlu0 %v3019, 55
    %v3030 = vpop.permute.xlu0 %3029
    %3031 = vrot.lane.b32.xlu0 %v3020, 55
    %v3032 = vpop.permute.xlu0 %3031
    %3033 = vrot.lane.b32.xlu0 %v3021, 55
    %v3034 = vpop.permute.xlu0 %3033
    %3035 = vrot.lane.b32.xlu0 %v3022, 55
    %v3036 = vpop.permute.xlu0 %3035
    %3037 = vrot.lane.b32.xlu0 %v3023, 55
    %v3038 = vpop.permute.xlu0 %3037
    %v3039 = vsel %vm222, %v3030, %v3032
    %v3040 = vsel %vm222, %v3032, %v3034
    %v3041 = vsel %vm222, %v3034, %v3036
    %v3042 = vsel %vm222, %v3036, %v3038
    %3047 = vst [vmem:[#allocation3 + $0x100] sm:$0xff] %v3039
    %3048 = vst [vmem:[#allocation3 + $0x108] sm:$0xff] %v3040
    %3049 = vst [vmem:[#allocation3 + $0x110] sm:$0xff] %v3041
    %3050 = vst [vmem:[#allocation3 + $0x118] sm:$0xff] %v3042
    %v3051 = vld [vmem:[#allocation2] sm:$0xff]
    %v3052 = vld [vmem:[#allocation2 + $0x8] sm:$0xff]
    %v3053 = vld [vmem:[#allocation2 + $0x10] sm:$0xff]
    %v3054 = vld [vmem:[#allocation2 + $0x18] sm:$0xff]
    %v3055 = vld [vmem:[#allocation2 + $0x20] sm:$0xff]
    %v3056 = vld [vmem:[%s852] ss:$8 sm:$0xf]
    %v3058 = vlaneseq
    %v3059 = vshrl.u32 %v3058, 7
    %v3060 = vsub.s32 0, %v3059
    %v3061 = vrot.slane %v3056, %v3060
    %v3062 = vlaneseq
    %v3063 = vshrl.u32 %v3062, 7
    %v3064 = vsub.s32 1, %v3063
    %v3065 = vrot.slane %v3056, %v3064
    %v3066 = vlaneseq
    %v3067 = vshrl.u32 %v3066, 7
    %v3068 = vsub.s32 2, %v3067
    %v3069 = vrot.slane %v3056, %v3068
    %v3070 = vlaneseq
    %v3071 = vshrl.u32 %v3070, 7
    %v3072 = vsub.s32 3, %v3071
    %v3073 = vrot.slane %v3056, %v3072
    %3074 = vrot.lane.b32.xlu0 %v3061, 119
    %v3075 = vpop.permute.xlu0 %3074
    %3076 = vrot.lane.b32.xlu0 %v3065, 119
    %v3077 = vpop.permute.xlu0 %3076
    %3078 = vrot.lane.b32.xlu0 %v3069, 119
    %v3079 = vpop.permute.xlu0 %3078
    %3080 = vrot.lane.b32.xlu0 %v3073, 119
    %v3081 = vpop.permute.xlu0 %3080
    %v3082 = vsel %vm879, %v3075, %v3077
    %v3083 = vsel %vm879, %v3077, %v3079
    %v3084 = vsel %vm879, %v3079, %v3081
    %v3090 = vmul.f32 %v3051, %v3075
    %v3091 = vmul.f32 %v3052, %v3082
    %v3092 = vmul.f32 %v3053, %v3083
    %v3093 = vmul.f32 %v3054, %v3084
    %v3094 = vmul.f32 %v3055, %v3081
    %3100 = vrot.lane.b32.xlu0 %v3090, 9
    %v3101 = vpop.permute.xlu0 %3100
    %3102 = vrot.lane.b32.xlu0 %v3091, 9
    %v3103 = vpop.permute.xlu0 %3102
    %3104 = vrot.lane.b32.xlu0 %v3092, 9
    %v3105 = vpop.permute.xlu0 %3104
    %3106 = vrot.lane.b32.xlu0 %v3093, 9
    %v3107 = vpop.permute.xlu0 %3106
    %3108 = vrot.lane.b32.xlu0 %v3094, 9
    %v3109 = vpop.permute.xlu0 %3108
    %v3110 = vsel %vm908, %v3101, %v3103
    %v3111 = vsel %vm908, %v3103, %v3105
    %v3112 = vsel %vm908, %v3105, %v3107
    %v3113 = vsel %vm908, %v3107, %v3109
    %3118 = vst [vmem:[#allocation3 + $0x120] sm:$0xff] %v3110
    %3119 = vst [vmem:[#allocation3 + $0x128] sm:$0xff] %v3111
    %3120 = vst [vmem:[#allocation3 + $0x130] sm:$0xff] %v3112
    %3121 = vst [vmem:[#allocation3 + $0x138] sm:$0xff] %v3113
    %v3122 = vld [vmem:[#allocation2] sm:$0xff]
    %v3123 = vld [vmem:[#allocation2 + $0x8] sm:$0xff]
    %v3124 = vld [vmem:[#allocation2 + $0x10] sm:$0xff]
    %v3125 = vld [vmem:[#allocation2 + $0x18] sm:$0xff]
    %v3126 = vld [vmem:[#allocation2 + $0x20] sm:$0xff]
    %v3127 = vld [vmem:[%s926] ss:$8 sm:$0xf]
    %v3129 = vlaneseq
    %v3130 = vshrl.u32 %v3129, 7
    %v3131 = vsub.s32 0, %v3130
    %v3132 = vrot.slane %v3127, %v3131
    %v3133 = vlaneseq
    %v3134 = vshrl.u32 %v3133, 7
    %v3135 = vsub.s32 1, %v3134
    %v3136 = vrot.slane %v3127, %v3135
    %v3137 = vlaneseq
    %v3138 = vshrl.u32 %v3137, 7
    %v3139 = vsub.s32 2, %v3138
    %v3140 = vrot.slane %v3127, %v3139
    %v3141 = vlaneseq
    %v3142 = vshrl.u32 %v3141, 7
    %v3143 = vsub.s32 3, %v3142
    %v3144 = vrot.slane %v3127, %v3143
    %3145 = vrot.lane.b32.xlu0 %v3132, 120
    %v3146 = vpop.permute.xlu0 %3145
    %3147 = vrot.lane.b32.xlu0 %v3136, 120
    %v3148 = vpop.permute.xlu0 %3147
    %3149 = vrot.lane.b32.xlu0 %v3140, 120
    %v3150 = vpop.permute.xlu0 %3149
    %3151 = vrot.lane.b32.xlu0 %v3144, 120
    %v3152 = vpop.permute.xlu0 %3151
    %v3153 = vsel %vm953, %v3146, %v3148
    %v3154 = vsel %vm953, %v3148, %v3150
    %v3155 = vsel %vm953, %v3150, %v3152
    %v3161 = vmul.f32 %v3122, %v3146
    %v3162 = vmul.f32 %v3123, %v3153
    %v3163 = vmul.f32 %v3124, %v3154
    %v3164 = vmul.f32 %v3125, %v3155
    %v3165 = vmul.f32 %v3126, %v3152
    %3171 = vrot.lane.b32.xlu0 %v3161, 8
    %v3172 = vpop.permute.xlu0 %3171
    %3173 = vrot.lane.b32.xlu0 %v3162, 8
    %v3174 = vpop.permute.xlu0 %3173
    %3175 = vrot.lane.b32.xlu0 %v3163, 8
    %v3176 = vpop.permute.xlu0 %3175
    %3177 = vrot.lane.b32.xlu0 %v3164, 8
    %v3178 = vpop.permute.xlu0 %3177
    %3179 = vrot.lane.b32.xlu0 %v3165, 8
    %v3180 = vpop.permute.xlu0 %3179
    %v3181 = vsel %vm982, %v3172, %v3174
    %v3182 = vsel %vm982, %v3174, %v3176
    %v3183 = vsel %vm982, %v3176, %v3178
    %v3184 = vsel %vm982, %v3178, %v3180
    %3189 = vst [vmem:[#allocation3 + $0x140] sm:$0xff] %v3181
    %3190 = vst [vmem:[#allocation3 + $0x148] sm:$0xff] %v3182
    %3191 = vst [vmem:[#allocation3 + $0x150] sm:$0xff] %v3183
    %3192 = vst [vmem:[#allocation3 + $0x158] sm:$0xff] %v3184
    %v3193 = vld [vmem:[#allocation2] sm:$0xff]
    %v3194 = vld [vmem:[#allocation2 + $0x8] sm:$0xff]
    %v3195 = vld [vmem:[#allocation2 + $0x10] sm:$0xff]
    %v3196 = vld [vmem:[#allocation2 + $0x18] sm:$0xff]
    %v3197 = vld [vmem:[#allocation2 + $0x20] sm:$0xff]
    %v3198 = vld [vmem:[%s1000] ss:$8 sm:$0xf]
    %v3200 = vlaneseq
    %v3201 = vshrl.u32 %v3200, 7
    %v3202 = vsub.s32 0, %v3201
    %v3203 = vrot.slane %v3198, %v3202
    %v3204 = vlaneseq
    %v3205 = vshrl.u32 %v3204, 7
    %v3206 = vsub.s32 1, %v3205
    %v3207 = vrot.slane %v3198, %v3206
    %v3208 = vlaneseq
    %v3209 = vshrl.u32 %v3208, 7
    %v3210 = vsub.s32 2, %v3209
    %v3211 = vrot.slane %v3198, %v3210
    %v3212 = vlaneseq
    %v3213 = vshrl.u32 %v3212, 7
    %v3214 = vsub.s32 3, %v3213
    %v3215 = vrot.slane %v3198, %v3214
    %3216 = vrot.lane.b32.xlu0 %v3203, 121
    %v3217 = vpop.permute.xlu0 %3216
    %3218 = vrot.lane.b32.xlu0 %v3207, 121
    %v3219 = vpop.permute.xlu0 %3218
    %3220 = vrot.lane.b32.xlu0 %v3211, 121
    %v3221 = vpop.permute.xlu0 %3220
    %3222 = vrot.lane.b32.xlu0 %v3215, 121
    %v3223 = vpop.permute.xlu0 %3222
    %v3224 = vsel %vm1027, %v3217, %v3219
    %v3225 = vsel %vm1027, %v3219, %v3221
    %v3226 = vsel %vm1027, %v3221, %v3223
    %v3232 = vmul.f32 %v3193, %v3217
    %v3233 = vmul.f32 %v3194, %v3224
    %v3234 = vmul.f32 %v3195, %v3225
    %v3235 = vmul.f32 %v3196, %v3226
    %v3236 = vmul.f32 %v3197, %v3223
    %3242 = vrot.lane.b32.xlu0 %v3232, 7
    %v3243 = vpop.permute.xlu0 %3242
    %3244 = vrot.lane.b32.xlu0 %v3233, 7
    %v3245 = vpop.permute.xlu0 %3244
    %3246 = vrot.lane.b32.xlu0 %v3234, 7
    %v3247 = vpop.permute.xlu0 %3246
    %3248 = vrot.lane.b32.xlu0 %v3235, 7
    %v3249 = vpop.permute.xlu0 %3248
    %3250 = vrot.lane.b32.xlu0 %v3236, 7
    %v3251 = vpop.permute.xlu0 %3250
    %v3252 = vsel %vm1056, %v3243, %v3245
    %v3253 = vsel %vm1056, %v3245, %v3247
    %v3254 = vsel %vm1056, %v3247, %v3249
    %v3255 = vsel %vm1056, %v3249, %v3251
    %3260 = vst [vmem:[#allocation3 + $0x160] sm:$0xff] %v3252
    %3261 = vst [vmem:[#allocation3 + $0x168] sm:$0xff] %v3253
    %3262 = vst [vmem:[#allocation3 + $0x170] sm:$0xff] %v3254
    %3263 = vst [vmem:[#allocation3 + $0x178] sm:$0xff] %v3255
    %v3264 = vld [vmem:[#allocation2] sm:$0xff]
    %v3265 = vld [vmem:[#allocation2 + $0x8] sm:$0xff]
    %v3266 = vld [vmem:[#allocation2 + $0x10] sm:$0xff]
    %v3267 = vld [vmem:[#allocation2 + $0x18] sm:$0xff]
    %v3268 = vld [vmem:[#allocation2 + $0x20] sm:$0xff]
    %v3269 = vld [vmem:[%s1074] ss:$8 sm:$0xf]
    %v3271 = vlaneseq
    %v3272 = vshrl.u32 %v3271, 7
    %v3273 = vsub.s32 0, %v3272
    %v3274 = vrot.slane %v3269, %v3273
    %v3275 = vlaneseq
    %v3276 = vshrl.u32 %v3275, 7
    %v3277 = vsub.s32 1, %v3276
    %v3278 = vrot.slane %v3269, %v3277
    %v3279 = vlaneseq
    %v3280 = vshrl.u32 %v3279, 7
    %v3281 = vsub.s32 2, %v3280
    %v3282 = vrot.slane %v3269, %v3281
    %v3283 = vlaneseq
    %v3284 = vshrl.u32 %v3283, 7
    %v3285 = vsub.s32 3, %v3284
    %v3286 = vrot.slane %v3269, %v3285
    %3287 = vrot.lane.b32.xlu0 %v3274, 127
    %v3288 = vpop.permute.xlu0 %3287
    %3289 = vrot.lane.b32.xlu0 %v3278, 127
    %v3290 = vpop.permute.xlu0 %3289
    %3291 = vrot.lane.b32.xlu0 %v3282, 127
    %v3292 = vpop.permute.xlu0 %3291
    %3293 = vrot.lane.b32.xlu0 %v3286, 127
    %v3294 = vpop.permute.xlu0 %3293
    %v3295 = vsel %vm1101, %v3288, %v3290
    %v3296 = vsel %vm1101, %v3290, %v3292
    %v3297 = vsel %vm1101, %v3292, %v3294
    %v3303 = vmul.f32 %v3264, %v3288
    %v3304 = vmul.f32 %v3265, %v3295
    %v3305 = vmul.f32 %v3266, %v3296
    %v3306 = vmul.f32 %v3267, %v3297
    %v3307 = vmul.f32 %v3268, %v3294
    %3313 = vrot.lane.b32.xlu0 %v3303, 1
    %v3314 = vpop.permute.xlu0 %3313
    %3315 = vrot.lane.b32.xlu0 %v3304, 1
    %v3316 = vpop.permute.xlu0 %3315
    %3317 = vrot.lane.b32.xlu0 %v3305, 1
    %v3318 = vpop.permute.xlu0 %3317
    %3319 = vrot.lane.b32.xlu0 %v3306, 1
    %v3320 = vpop.permute.xlu0 %3319
    %3321 = vrot.lane.b32.xlu0 %v3307, 1
    %v3322 = vpop.permute.xlu0 %3321
    %v3323 = vsel %vm1130, %v3314, %v3316
    %v3324 = vsel %vm1130, %v3316, %v3318
    %v3325 = vsel %vm1130, %v3318, %v3320
    %v3326 = vsel %vm1130, %v3320, %v3322
    %3331 = vst [vmem:[#allocation3 + $0x180] sm:$0xff] %v3323
    %3332 = vst [vmem:[#allocation3 + $0x188] sm:$0xff] %v3324
    %3333 = vst [vmem:[#allocation3 + $0x190] sm:$0xff] %v3325
    %3334 = vst [vmem:[#allocation3 + $0x198] sm:$0xff] %v3326
    %v3335 = vld [vmem:[#allocation2 + $0x8] sm:$0xff]
    %v3336 = vld [vmem:[#allocation2 + $0x10] sm:$0xff]
    %v3337 = vld [vmem:[#allocation2 + $0x18] sm:$0xff]
    %v3338 = vld [vmem:[#allocation2 + $0x20] sm:$0xff]
    %v3339 = vld [vmem:[%s1147] ss:$8 sm:$0xf]
    %v3341 = vlaneseq
    %v3342 = vshrl.u32 %v3341, 7
    %v3343 = vsub.s32 0, %v3342
    %v3344 = vrot.slane %v3339, %v3343
    %v3345 = vlaneseq
    %v3346 = vshrl.u32 %v3345, 7
    %v3347 = vsub.s32 1, %v3346
    %v3348 = vrot.slane %v3339, %v3347
    %v3349 = vlaneseq
    %v3350 = vshrl.u32 %v3349, 7
    %v3351 = vsub.s32 2, %v3350
    %v3352 = vrot.slane %v3339, %v3351
    %v3353 = vlaneseq
    %v3354 = vshrl.u32 %v3353, 7
    %v3355 = vsub.s32 3, %v3354
    %v3356 = vrot.slane %v3339, %v3355
    %v3361 = vmul.f32 %v3335, %v3344
    %v3362 = vmul.f32 %v3336, %v3348
    %v3363 = vmul.f32 %v3337, %v3352
    %v3364 = vmul.f32 %v3338, %v3356
    %3365 = vst [vmem:[#allocation3 + $0x1a0] sm:$0xff] %v3361
    %3366 = vst [vmem:[#allocation3 + $0x1a8] sm:$0xff] %v3362
    %3367 = vst [vmem:[#allocation3 + $0x1b0] sm:$0xff] %v3363
    %3368 = vst [vmem:[#allocation3 + $0x1b8] sm:$0xff] %v3364
    %v3369 = vld [vmem:[#allocation2 + $0x8] sm:$0xff]
    %v3370 = vld [vmem:[#allocation2 + $0x10] sm:$0xff]
    %v3371 = vld [vmem:[#allocation2 + $0x18] sm:$0xff]
    %v3372 = vld [vmem:[#allocation2 + $0x20] sm:$0xff]
    %v3373 = vld [vmem:[#allocation2 + $0x28] sm:$0xff]
    %v3374 = vld [vmem:[%s1183] ss:$8 sm:$0xf]
    %v3376 = vlaneseq
    %v3377 = vshrl.u32 %v3376, 7
    %v3378 = vsub.s32 0, %v3377
    %v3379 = vrot.slane %v3374, %v3378
    %v3380 = vlaneseq
    %v3381 = vshrl.u32 %v3380, 7
    %v3382 = vsub.s32 1, %v3381
    %v3383 = vrot.slane %v3374, %v3382
    %v3384 = vlaneseq
    %v3385 = vshrl.u32 %v3384, 7
    %v3386 = vsub.s32 2, %v3385
    %v3387 = vrot.slane %v3374, %v3386
    %v3388 = vlaneseq
    %v3389 = vshrl.u32 %v3388, 7
    %v3390 = vsub.s32 3, %v3389
    %v3391 = vrot.slane %v3374, %v3390
    %3392 = vrot.lane.b32.xlu0 %v3379, 1
    %v3393 = vpop.permute.xlu0 %3392
    %3394 = vrot.lane.b32.xlu0 %v3383, 1
    %v3395 = vpop.permute.xlu0 %3394
    %3396 = vrot.lane.b32.xlu0 %v3387, 1
    %v3397 = vpop.permute.xlu0 %3396
    %3398 = vrot.lane.b32.xlu0 %v3391, 1
    %v3399 = vpop.permute.xlu0 %3398
    %v3400 = vsel %vm1130, %v3393, %v3395
    %v3401 = vsel %vm1130, %v3395, %v3397
    %v3402 = vsel %vm1130, %v3397, %v3399
    %v3408 = vmul.f32 %v3369, %v3393
    %v3409 = vmul.f32 %v3370, %v3400
    %v3410 = vmul.f32 %v3371, %v3401
    %v3411 = vmul.f32 %v3372, %v3402
    %v3412 = vmul.f32 %v3373, %v3399
    %3418 = vrot.lane.b32.xlu0 %v3408, 127
    %v3419 = vpop.permute.xlu0 %3418
    %3420 = vrot.lane.b32.xlu0 %v3409, 127
    %v3421 = vpop.permute.xlu0 %3420
    %3422 = vrot.lane.b32.xlu0 %v3410, 127
    %v3423 = vpop.permute.xlu0 %3422
    %3424 = vrot.lane.b32.xlu0 %v3411, 127
    %v3425 = vpop.permute.xlu0 %3424
    %3426 = vrot.lane.b32.xlu0 %v3412, 127
    %v3427 = vpop.permute.xlu0 %3426
    %v3428 = vsel %vm1101, %v3419, %v3421
    %v3429 = vsel %vm1101, %v3421, %v3423
    %v3430 = vsel %vm1101, %v3423, %v3425
    %v3431 = vsel %vm1101, %v3425, %v3427
    %3436 = vst [vmem:[#allocation3 + $0x1c0] sm:$0xff] %v3428
    %3437 = vst [vmem:[#allocation3 + $0x1c8] sm:$0xff] %v3429
    %3438 = vst [vmem:[#allocation3 + $0x1d0] sm:$0xff] %v3430
    %3439 = vst [vmem:[#allocation3 + $0x1d8] sm:$0xff] %v3431
    %v3440 = vld [vmem:[#allocation2 + $0x8] sm:$0xff]
    %v3441 = vld [vmem:[#allocation2 + $0x10] sm:$0xff]
    %v3442 = vld [vmem:[#allocation2 + $0x18] sm:$0xff]
    %v3443 = vld [vmem:[#allocation2 + $0x20] sm:$0xff]
    %v3444 = vld [vmem:[#allocation2 + $0x28] sm:$0xff]
    %v3445 = vld [vmem:[%s1255] ss:$8 sm:$0xf]
    %v3447 = vlaneseq
    %v3448 = vshrl.u32 %v3447, 7
    %v3449 = vsub.s32 0, %v3448
    %v3450 = vrot.slane %v3445, %v3449
    %v3451 = vlaneseq
    %v3452 = vshrl.u32 %v3451, 7
    %v3453 = vsub.s32 1, %v3452
    %v3454 = vrot.slane %v3445, %v3453
    %v3455 = vlaneseq
    %v3456 = vshrl.u32 %v3455, 7
    %v3457 = vsub.s32 2, %v3456
    %v3458 = vrot.slane %v3445, %v3457
    %v3459 = vlaneseq
    %v3460 = vshrl.u32 %v3459, 7
    %v3461 = vsub.s32 3, %v3460
    %v3462 = vrot.slane %v3445, %v3461
    %3463 = vrot.lane.b32.xlu0 %v3450, 7
    %v3464 = vpop.permute.xlu0 %3463
    %3465 = vrot.lane.b32.xlu0 %v3454, 7
    %v3466 = vpop.permute.xlu0 %3465
    %3467 = vrot.lane.b32.xlu0 %v3458, 7
    %v3468 = vpop.permute.xlu0 %3467
    %3469 = vrot.lane.b32.xlu0 %v3462, 7
    %v3470 = vpop.permute.xlu0 %3469
    %v3471 = vsel %vm1056, %v3464, %v3466
    %v3472 = vsel %vm1056, %v3466, %v3468
    %v3473 = vsel %vm1056, %v3468, %v3470
    %v3479 = vmul.f32 %v3440, %v3464
    %v3480 = vmul.f32 %v3441, %v3471
    %v3481 = vmul.f32 %v3442, %v3472
    %v3482 = vmul.f32 %v3443, %v3473
    %v3483 = vmul.f32 %v3444, %v3470
    %3489 = vrot.lane.b32.xlu0 %v3479, 121
    %v3490 = vpop.permute.xlu0 %3489
    %3491 = vrot.lane.b32.xlu0 %v3480, 121
    %v3492 = vpop.permute.xlu0 %3491
    %3493 = vrot.lane.b32.xlu0 %v3481, 121
    %v3494 = vpop.permute.xlu0 %3493
    %3495 = vrot.lane.b32.xlu0 %v3482, 121
    %v3496 = vpop.permute.xlu0 %3495
    %3497 = vrot.lane.b32.xlu0 %v3483, 121
    %v3498 = vpop.permute.xlu0 %3497
    %v3499 = vsel %vm1027, %v3490, %v3492
    %v3500 = vsel %vm1027, %v3492, %v3494
    %v3501 = vsel %vm1027, %v3494, %v3496
    %v3502 = vsel %vm1027, %v3496, %v3498
    %3507 = vst [vmem:[#allocation3 + $0x1e0] sm:$0xff] %v3499
    %3508 = vst [vmem:[#allocation3 + $0x1e8] sm:$0xff] %v3500
    %3509 = vst [vmem:[#allocation3 + $0x1f0] sm:$0xff] %v3501
    %3510 = vst [vmem:[#allocation3 + $0x1f8] sm:$0xff] %v3502
    %v3511 = vld [vmem:[#allocation2 + $0x8] sm:$0xff]
    %v3512 = vld [vmem:[#allocation2 + $0x10] sm:$0xff]
    %v3513 = vld [vmem:[#allocation2 + $0x18] sm:$0xff]
    %v3514 = vld [vmem:[#allocation2 + $0x20] sm:$0xff]
    %v3515 = vld [vmem:[#allocation2 + $0x28] sm:$0xff]
    %v3516 = vld [vmem:[%s1327] ss:$8 sm:$0xf]
    %v3518 = vlaneseq
    %v3519 = vshrl.u32 %v3518, 7
    %v3520 = vsub.s32 0, %v3519
    %v3521 = vrot.slane %v3516, %v3520
    %v3522 = vlaneseq
    %v3523 = vshrl.u32 %v3522, 7
    %v3524 = vsub.s32 1, %v3523
    %v3525 = vrot.slane %v3516, %v3524
    %v3526 = vlaneseq
    %v3527 = vshrl.u32 %v3526, 7
    %v3528 = vsub.s32 2, %v3527
    %v3529 = vrot.slane %v3516, %v3528
    %v3530 = vlaneseq
    %v3531 = vshrl.u32 %v3530, 7
    %v3532 = vsub.s32 3, %v3531
    %v3533 = vrot.slane %v3516, %v3532
    %3534 = vrot.lane.b32.xlu0 %v3521, 8
    %v3535 = vpop.permute.xlu0 %3534
    %3536 = vrot.lane.b32.xlu0 %v3525, 8
    %v3537 = vpop.permute.xlu0 %3536
    %3538 = vrot.lane.b32.xlu0 %v3529, 8
    %v3539 = vpop.permute.xlu0 %3538
    %3540 = vrot.lane.b32.xlu0 %v3533, 8
    %v3541 = vpop.permute.xlu0 %3540
    %v3542 = vsel %vm982, %v3535, %v3537
    %v3543 = vsel %vm982, %v3537, %v3539
    %v3544 = vsel %vm982, %v3539, %v3541
    %v3550 = vmul.f32 %v3511, %v3535
    %v3551 = vmul.f32 %v3512, %v3542
    %v3552 = vmul.f32 %v3513, %v3543
    %v3553 = vmul.f32 %v3514, %v3544
    %v3554 = vmul.f32 %v3515, %v3541
    %3560 = vrot.lane.b32.xlu0 %v3550, 120
    %v3561 = vpop.permute.xlu0 %3560
    %3562 = vrot.lane.b32.xlu0 %v3551, 120
    %v3563 = vpop.permute.xlu0 %3562
    %3564 = vrot.lane.b32.xlu0 %v3552, 120
    %v3565 = vpop.permute.xlu0 %3564
    %3566 = vrot.lane.b32.xlu0 %v3553, 120
    %v3567 = vpop.permute.xlu0 %3566
    %3568 = vrot.lane.b32.xlu0 %v3554, 120
    %v3569 = vpop.permute.xlu0 %3568
    %v3570 = vsel %vm953, %v3561, %v3563
    %v3571 = vsel %vm953, %v3563, %v3565
    %v3572 = vsel %vm953, %v3565, %v3567
    %v3573 = vsel %vm953, %v3567, %v3569
    %3578 = vst [vmem:[#allocation3 + $0x200] sm:$0xff] %v3570
    %3579 = vst [vmem:[#allocation3 + $0x208] sm:$0xff] %v3571
    %3580 = vst [vmem:[#allocation3 + $0x210] sm:$0xff] %v3572
    %3581 = vst [vmem:[#allocation3 + $0x218] sm:$0xff] %v3573
    %v3582 = vld [vmem:[#allocation2 + $0x8] sm:$0xff]
    %v3583 = vld [vmem:[#allocation2 + $0x10] sm:$0xff]
    %v3584 = vld [vmem:[#allocation2 + $0x18] sm:$0xff]
    %v3585 = vld [vmem:[#allocation2 + $0x20] sm:$0xff]
    %v3586 = vld [vmem:[#allocation2 + $0x28] sm:$0xff]
    %v3587 = vld [vmem:[%s1399] ss:$8 sm:$0xf]
    %v3589 = vlaneseq
    %v3590 = vshrl.u32 %v3589, 7
    %v3591 = vsub.s32 0, %v3590
    %v3592 = vrot.slane %v3587, %v3591
    %v3593 = vlaneseq
    %v3594 = vshrl.u32 %v3593, 7
    %v3595 = vsub.s32 1, %v3594
    %v3596 = vrot.slane %v3587, %v3595
    %v3597 = vlaneseq
    %v3598 = vshrl.u32 %v3597, 7
    %v3599 = vsub.s32 2, %v3598
    %v3600 = vrot.slane %v3587, %v3599
    %v3601 = vlaneseq
    %v3602 = vshrl.u32 %v3601, 7
    %v3603 = vsub.s32 3, %v3602
    %v3604 = vrot.slane %v3587, %v3603
    %3605 = vrot.lane.b32.xlu0 %v3592, 9
    %v3606 = vpop.permute.xlu0 %3605
    %3607 = vrot.lane.b32.xlu0 %v3596, 9
    %v3608 = vpop.permute.xlu0 %3607
    %3609 = vrot.lane.b32.xlu0 %v3600, 9
    %v3610 = vpop.permute.xlu0 %3609
    %3611 = vrot.lane.b32.xlu0 %v3604, 9
    %v3612 = vpop.permute.xlu0 %3611
    %v3613 = vsel %vm908, %v3606, %v3608
    %v3614 = vsel %vm908, %v3608, %v3610
    %v3615 = vsel %vm908, %v3610, %v3612
    %v3621 = vmul.f32 %v3582, %v3606
    %v3622 = vmul.f32 %v3583, %v3613
    %v3623 = vmul.f32 %v3584, %v3614
    %v3624 = vmul.f32 %v3585, %v3615
    %v3625 = vmul.f32 %v3586, %v3612
    %3631 = vrot.lane.b32.xlu0 %v3621, 119
    %v3632 = vpop.permute.xlu0 %3631
    %3633 = vrot.lane.b32.xlu0 %v3622, 119
    %v3634 = vpop.permute.xlu0 %3633
    %3635 = vrot.lane.b32.xlu0 %v3623, 119
    %v3636 = vpop.permute.xlu0 %3635
    %3637 = vrot.lane.b32.xlu0 %v3624, 119
    %v3638 = vpop.permute.xlu0 %3637
    %3639 = vrot.lane.b32.xlu0 %v3625, 119
    %v3640 = vpop.permute.xlu0 %3639
    %v3641 = vsel %vm879, %v3632, %v3634
    %v3642 = vsel %vm879, %v3634, %v3636
    %v3643 = vsel %vm879, %v3636, %v3638
    %v3644 = vsel %vm879, %v3638, %v3640
    %3649 = vst [vmem:[#allocation3 + $0x220] sm:$0xff] %v3641
    %3650 = vst [vmem:[#allocation3 + $0x228] sm:$0xff] %v3642
    %3651 = vst [vmem:[#allocation3 + $0x230] sm:$0xff] %v3643
    %3652 = vst [vmem:[#allocation3 + $0x238] sm:$0xff] %v3644
    %v3653 = vld [vmem:[#allocation2 + $0x8] sm:$0xff]
    %v3654 = vld [vmem:[#allocation2 + $0x10] sm:$0xff]
    %v3655 = vld [vmem:[#allocation2 + $0x18] sm:$0xff]
    %v3656 = vld [vmem:[#allocation2 + $0x20] sm:$0xff]
    %v3657 = vld [vmem:[#allocation2 + $0x28] sm:$0xff]
    %v3658 = vld [vmem:[%s1471] ss:$8 sm:$0xf]
    %v3660 = vlaneseq
    %v3661 = vshrl.u32 %v3660, 7
    %v3662 = vsub.s32 0, %v3661
    %v3663 = vrot.slane %v3658, %v3662
    %v3664 = vlaneseq
    %v3665 = vshrl.u32 %v3664, 7
    %v3666 = vsub.s32 1, %v3665
    %v3667 = vrot.slane %v3658, %v3666
    %v3668 = vlaneseq
    %v3669 = vshrl.u32 %v3668, 7
    %v3670 = vsub.s32 2, %v3669
    %v3671 = vrot.slane %v3658, %v3670
    %v3672 = vlaneseq
    %v3673 = vshrl.u32 %v3672, 7
    %v3674 = vsub.s32 3, %v3673
    %v3675 = vrot.slane %v3658, %v3674
    %3676 = vrot.lane.b32.xlu0 %v3663, 55
    %v3677 = vpop.permute.xlu0 %3676
    %3678 = vrot.lane.b32.xlu0 %v3667, 55
    %v3679 = vpop.permute.xlu0 %3678
    %3680 = vrot.lane.b32.xlu0 %v3671, 55
    %v3681 = vpop.permute.xlu0 %3680
    %3682 = vrot.lane.b32.xlu0 %v3675, 55
    %v3683 = vpop.permute.xlu0 %3682
    %v3684 = vsel %vm222, %v3677, %v3679
    %v3685 = vsel %vm222, %v3679, %v3681
    %v3686 = vsel %vm222, %v3681, %v3683
    %v3692 = vmul.f32 %v3653, %v3677
    %v3693 = vmul.f32 %v3654, %v3684
    %v3694 = vmul.f32 %v3655, %v3685
    %v3695 = vmul.f32 %v3656, %v3686
    %v3696 = vmul.f32 %v3657, %v3683
    %3702 = vrot.lane.b32.xlu0 %v3692, 73
    %v3703 = vpop.permute.xlu0 %3702
    %3704 = vrot.lane.b32.xlu0 %v3693, 73
    %v3705 = vpop.permute.xlu0 %3704
    %3706 = vrot.lane.b32.xlu0 %v3694, 73
    %v3707 = vpop.permute.xlu0 %3706
    %3708 = vrot.lane.b32.xlu0 %v3695, 73
    %v3709 = vpop.permute.xlu0 %3708
    %3710 = vrot.lane.b32.xlu0 %v3696, 73
    %v3711 = vpop.permute.xlu0 %3710
    %v3712 = vsel %vm251, %v3703, %v3705
    %v3713 = vsel %vm251, %v3705, %v3707
    %v3714 = vsel %vm251, %v3707, %v3709
    %v3715 = vsel %vm251, %v3709, %v3711
    %3720 = vst [vmem:[#allocation3 + $0x240] sm:$0xff] %v3712
    %3721 = vst [vmem:[#allocation3 + $0x248] sm:$0xff] %v3713
    %3722 = vst [vmem:[#allocation3 + $0x250] sm:$0xff] %v3714
    %3723 = vst [vmem:[#allocation3 + $0x258] sm:$0xff] %v3715
    %v3724 = vld [vmem:[#allocation2 + $0x8] sm:$0xff]
    %v3725 = vld [vmem:[#allocation2 + $0x10] sm:$0xff]
    %v3726 = vld [vmem:[#allocation2 + $0x18] sm:$0xff]
    %v3727 = vld [vmem:[#allocation2 + $0x20] sm:$0xff]
    %v3728 = vld [vmem:[#allocation2 + $0x28] sm:$0xff]
    %v3729 = vld [vmem:[%s1543] ss:$8 sm:$0xf]
    %v3731 = vlaneseq
    %v3732 = vshrl.u32 %v3731, 7
    %v3733 = vsub.s32 0, %v3732
    %v3734 = vrot.slane %v3729, %v3733
    %v3735 = vlaneseq
    %v3736 = vshrl.u32 %v3735, 7
    %v3737 = vsub.s32 1, %v3736
    %v3738 = vrot.slane %v3729, %v3737
    %v3739 = vlaneseq
    %v3740 = vshrl.u32 %v3739, 7
    %v3741 = vsub.s32 2, %v3740
    %v3742 = vrot.slane %v3729, %v3741
    %v3743 = vlaneseq
    %v3744 = vshrl.u32 %v3743, 7
    %v3745 = vsub.s32 3, %v3744
    %v3746 = vrot.slane %v3729, %v3745
    %3747 = vrot.lane.b32.xlu0 %v3734, 56
    %v3748 = vpop.permute.xlu0 %3747
    %3749 = vrot.lane.b32.xlu0 %v3738, 56
    %v3750 = vpop.permute.xlu0 %3749
    %3751 = vrot.lane.b32.xlu0 %v3742, 56
    %v3752 = vpop.permute.xlu0 %3751
    %3753 = vrot.lane.b32.xlu0 %v3746, 56
    %v3754 = vpop.permute.xlu0 %3753
    %v3755 = vsel %vm296, %v3748, %v3750
    %v3756 = vsel %vm296, %v3750, %v3752
    %v3757 = vsel %vm296, %v3752, %v3754
    %v3763 = vmul.f32 %v3724, %v3748
    %v3764 = vmul.f32 %v3725, %v3755
    %v3765 = vmul.f32 %v3726, %v3756
    %v3766 = vmul.f32 %v3727, %v3757
    %v3767 = vmul.f32 %v3728, %v3754
    %3773 = vrot.lane.b32.xlu0 %v3763, 72
    %v3774 = vpop.permute.xlu0 %3773
    %3775 = vrot.lane.b32.xlu0 %v3764, 72
    %v3776 = vpop.permute.xlu0 %3775
    %3777 = vrot.lane.b32.xlu0 %v3765, 72
    %v3778 = vpop.permute.xlu0 %3777
    %3779 = vrot.lane.b32.xlu0 %v3766, 72
    %v3780 = vpop.permute.xlu0 %3779
    %3781 = vrot.lane.b32.xlu0 %v3767, 72
    %v3782 = vpop.permute.xlu0 %3781
    %v3783 = vsel %vm325, %v3774, %v3776
    %v3784 = vsel %vm325, %v3776, %v3778
    %v3785 = vsel %vm325, %v3778, %v3780
    %v3786 = vsel %vm325, %v3780, %v3782
    %3791 = vst [vmem:[#allocation3 + $0x260] sm:$0xff] %v3783
    %3792 = vst [vmem:[#allocation3 + $0x268] sm:$0xff] %v3784
    %3793 = vst [vmem:[#allocation3 + $0x270] sm:$0xff] %v3785
    %3794 = vst [vmem:[#allocation3 + $0x278] sm:$0xff] %v3786
    %v3795 = vld [vmem:[#allocation2 + $0x8] sm:$0xff]
    %v3796 = vld [vmem:[#allocation2 + $0x10] sm:$0xff]
    %v3797 = vld [vmem:[#allocation2 + $0x18] sm:$0xff]
    %v3798 = vld [vmem:[#allocation2 + $0x20] sm:$0xff]
    %v3799 = vld [vmem:[#allocation2 + $0x28] sm:$0xff]
    %v3800 = vld [vmem:[%s1615] ss:$8 sm:$0xf]
    %v3802 = vlaneseq
    %v3803 = vshrl.u32 %v3802, 7
    %v3804 = vsub.s32 0, %v3803
    %v3805 = vrot.slane %v3800, %v3804
    %v3806 = vlaneseq
    %v3807 = vshrl.u32 %v3806, 7
    %v3808 = vsub.s32 1, %v3807
    %v3809 = vrot.slane %v3800, %v3808
    %v3810 = vlaneseq
    %v3811 = vshrl.u32 %v3810, 7
    %v3812 = vsub.s32 2, %v3811
    %v3813 = vrot.slane %v3800, %v3812
    %v3814 = vlaneseq
    %v3815 = vshrl.u32 %v3814, 7
    %v3816 = vsub.s32 3, %v3815
    %v3817 = vrot.slane %v3800, %v3816
    %3818 = vrot.lane.b32.xlu0 %v3805, 57
    %v3819 = vpop.permute.xlu0 %3818
    %3820 = vrot.lane.b32.xlu0 %v3809, 57
    %v3821 = vpop.permute.xlu0 %3820
    %3822 = vrot.lane.b32.xlu0 %v3813, 57
    %v3823 = vpop.permute.xlu0 %3822
    %3824 = vrot.lane.b32.xlu0 %v3817, 57
    %v3825 = vpop.permute.xlu0 %3824
    %v3826 = vsel %vm370, %v3819, %v3821
    %v3827 = vsel %vm370, %v3821, %v3823
    %v3828 = vsel %vm370, %v3823, %v3825
    %v3834 = vmul.f32 %v3795, %v3819
    %v3835 = vmul.f32 %v3796, %v3826
    %v3836 = vmul.f32 %v3797, %v3827
    %v3837 = vmul.f32 %v3798, %v3828
    %v3838 = vmul.f32 %v3799, %v3825
    %3844 = vrot.lane.b32.xlu0 %v3834, 71
    %v3845 = vpop.permute.xlu0 %3844
    %3846 = vrot.lane.b32.xlu0 %v3835, 71
    %v3847 = vpop.permute.xlu0 %3846
    %3848 = vrot.lane.b32.xlu0 %v3836, 71
    %v3849 = vpop.permute.xlu0 %3848
    %3850 = vrot.lane.b32.xlu0 %v3837, 71
    %v3851 = vpop.permute.xlu0 %3850
    %3852 = vrot.lane.b32.xlu0 %v3838, 71
    %v3853 = vpop.permute.xlu0 %3852
    %v3854 = vsel %vm399, %v3845, %v3847
    %v3855 = vsel %vm399, %v3847, %v3849
    %v3856 = vsel %vm399, %v3849, %v3851
    %v3857 = vsel %vm399, %v3851, %v3853
    %3862 = vst [vmem:[#allocation3 + $0x280] sm:$0xff] %v3854
    %3863 = vst [vmem:[#allocation3 + $0x288] sm:$0xff] %v3855
    %3864 = vst [vmem:[#allocation3 + $0x290] sm:$0xff] %v3856
    %3865 = vst [vmem:[#allocation3 + $0x298] sm:$0xff] %v3857
    %v3866 = vld [vmem:[#allocation2 + $0x8] sm:$0xff]
    %v3867 = vld [vmem:[#allocation2 + $0x10] sm:$0xff]
    %v3868 = vld [vmem:[#allocation2 + $0x18] sm:$0xff]
    %v3869 = vld [vmem:[#allocation2 + $0x20] sm:$0xff]
    %v3870 = vld [vmem:[#allocation2 + $0x28] sm:$0xff]
    %v3871 = vld [vmem:[%s1687] ss:$8 sm:$0xf]
    %v3873 = vlaneseq
    %v3874 = vshrl.u32 %v3873, 7
    %v3875 = vsub.s32 0, %v3874
    %v3876 = vrot.slane %v3871, %v3875
    %v3877 = vlaneseq
    %v3878 = vshrl.u32 %v3877, 7
    %v3879 = vsub.s32 1, %v3878
    %v3880 = vrot.slane %v3871, %v3879
    %v3881 = vlaneseq
    %v3882 = vshrl.u32 %v3881, 7
    %v3883 = vsub.s32 2, %v3882
    %v3884 = vrot.slane %v3871, %v3883
    %v3885 = vlaneseq
    %v3886 = vshrl.u32 %v3885, 7
    %v3887 = vsub.s32 3, %v3886
    %v3888 = vrot.slane %v3871, %v3887
    %3889 = vrot.lane.b32.xlu0 %v3876, 63
    %v3890 = vpop.permute.xlu0 %3889
    %3891 = vrot.lane.b32.xlu0 %v3880, 63
    %v3892 = vpop.permute.xlu0 %3891
    %3893 = vrot.lane.b32.xlu0 %v3884, 63
    %v3894 = vpop.permute.xlu0 %3893
    %3895 = vrot.lane.b32.xlu0 %v3888, 63
    %v3896 = vpop.permute.xlu0 %3895
    %v3897 = vsel %vm444, %v3890, %v3892
    %v3898 = vsel %vm444, %v3892, %v3894
    %v3899 = vsel %vm444, %v3894, %v3896
    %v3905 = vmul.f32 %v3866, %v3890
    %v3906 = vmul.f32 %v3867, %v3897
    %v3907 = vmul.f32 %v3868, %v3898
    %v3908 = vmul.f32 %v3869, %v3899
    %v3909 = vmul.f32 %v3870, %v3896
    %3915 = vrot.lane.b32.xlu0 %v3905, 65
    %v3916 = vpop.permute.xlu0 %3915
    %3917 = vrot.lane.b32.xlu0 %v3906, 65
    %v3918 = vpop.permute.xlu0 %3917
    %3919 = vrot.lane.b32.xlu0 %v3907, 65
    %v3920 = vpop.permute.xlu0 %3919
    %3921 = vrot.lane.b32.xlu0 %v3908, 65
    %v3922 = vpop.permute.xlu0 %3921
    %3923 = vrot.lane.b32.xlu0 %v3909, 65
    %v3924 = vpop.permute.xlu0 %3923
    %v3925 = vsel %vm473, %v3916, %v3918
    %v3926 = vsel %vm473, %v3918, %v3920
    %v3927 = vsel %vm473, %v3920, %v3922
    %v3928 = vsel %vm473, %v3922, %v3924
    %3933 = vst [vmem:[#allocation3 + $0x2a0] sm:$0xff] %v3925
    %3934 = vst [vmem:[#allocation3 + $0x2a8] sm:$0xff] %v3926
    %3935 = vst [vmem:[#allocation3 + $0x2b0] sm:$0xff] %v3927
    %3936 = vst [vmem:[#allocation3 + $0x2b8] sm:$0xff] %v3928
    %v3937 = vld [vmem:[#allocation2 + $0x8] sm:$0xff]
    %v3938 = vld [vmem:[#allocation2 + $0x10] sm:$0xff]
    %v3939 = vld [vmem:[#allocation2 + $0x18] sm:$0xff]
    %v3940 = vld [vmem:[#allocation2 + $0x20] sm:$0xff]
    %v3941 = vld [vmem:[#allocation2 + $0x28] sm:$0xff]
    %v3942 = vld [vmem:[%s1759] ss:$8 sm:$0xf]
    %v3944 = vlaneseq
    %v3945 = vshrl.u32 %v3944, 7
    %v3946 = vsub.s32 0, %v3945
    %v3947 = vrot.slane %v3942, %v3946
    %v3948 = vlaneseq
    %v3949 = vshrl.u32 %v3948, 7
    %v3950 = vsub.s32 1, %v3949
    %v3951 = vrot.slane %v3942, %v3950
    %v3952 = vlaneseq
    %v3953 = vshrl.u32 %v3952, 7
    %v3954 = vsub.s32 2, %v3953
    %v3955 = vrot.slane %v3942, %v3954
    %v3956 = vlaneseq
    %v3957 = vshrl.u32 %v3956, 7
    %v3958 = vsub.s32 3, %v3957
    %v3959 = vrot.slane %v3942, %v3958
    %3960 = vrot.lane.b32.xlu0 %v3947, 64
    %v3961 = vpop.permute.xlu0 %3960
    %3962 = vrot.lane.b32.xlu0 %v3951, 64
    %v3963 = vpop.permute.xlu0 %3962
    %3964 = vrot.lane.b32.xlu0 %v3955, 64
    %v3965 = vpop.permute.xlu0 %3964
    %3966 = vrot.lane.b32.xlu0 %v3959, 64
    %v3967 = vpop.permute.xlu0 %3966
    %v3968 = vsel %vm518, %v3961, %v3963
    %v3969 = vsel %vm518, %v3963, %v3965
    %v3970 = vsel %vm518, %v3965, %v3967
    %v3976 = vmul.f32 %v3937, %v3961
    %v3977 = vmul.f32 %v3938, %v3968
    %v3978 = vmul.f32 %v3939, %v3969
    %v3979 = vmul.f32 %v3940, %v3970
    %v3980 = vmul.f32 %v3941, %v3967
    %3986 = vrot.lane.b32.xlu0 %v3976, 64
    %v3987 = vpop.permute.xlu0 %3986
    %3988 = vrot.lane.b32.xlu0 %v3977, 64
    %v3989 = vpop.permute.xlu0 %3988
    %3990 = vrot.lane.b32.xlu0 %v3978, 64
    %v3991 = vpop.permute.xlu0 %3990
    %3992 = vrot.lane.b32.xlu0 %v3979, 64
    %v3993 = vpop.permute.xlu0 %3992
    %3994 = vrot.lane.b32.xlu0 %v3980, 64
    %v3995 = vpop.permute.xlu0 %3994
    %v3996 = vsel %vm518, %v3987, %v3989
    %v3997 = vsel %vm518, %v3989, %v3991
    %v3998 = vsel %vm518, %v3991, %v3993
    %v3999 = vsel %vm518, %v3993, %v3995
    %4004 = vst [vmem:[#allocation3 + $0x2c0] sm:$0xff] %v3996
    %4005 = vst [vmem:[#allocation3 + $0x2c8] sm:$0xff] %v3997
    %4006 = vst [vmem:[#allocation3 + $0x2d0] sm:$0xff] %v3998
    %4007 = vst [vmem:[#allocation3 + $0x2d8] sm:$0xff] %v3999
    %v4008 = vld [vmem:[#allocation2 + $0x8] sm:$0xff]
    %v4009 = vld [vmem:[#allocation2 + $0x10] sm:$0xff]
    %v4010 = vld [vmem:[#allocation2 + $0x18] sm:$0xff]
    %v4011 = vld [vmem:[#allocation2 + $0x20] sm:$0xff]
    %v4012 = vld [vmem:[#allocation2 + $0x28] sm:$0xff]
    %v4013 = vld [vmem:[%s1831] ss:$8 sm:$0xf]
    %v4015 = vlaneseq
    %v4016 = vshrl.u32 %v4015, 7
    %v4017 = vsub.s32 0, %v4016
    %v4018 = vrot.slane %v4013, %v4017
    %v4019 = vlaneseq
    %v4020 = vshrl.u32 %v4019, 7
    %v4021 = vsub.s32 1, %v4020
    %v4022 = vrot.slane %v4013, %v4021
    %v4023 = vlaneseq
    %v4024 = vshrl.u32 %v4023, 7
    %v4025 = vsub.s32 2, %v4024
    %v4026 = vrot.slane %v4013, %v4025
    %v4027 = vlaneseq
    %v4028 = vshrl.u32 %v4027, 7
    %v4029 = vsub.s32 3, %v4028
    %v4030 = vrot.slane %v4013, %v4029
    %4031 = vrot.lane.b32.xlu0 %v4018, 65
    %v4032 = vpop.permute.xlu0 %4031
    %4033 = vrot.lane.b32.xlu0 %v4022, 65
    %v4034 = vpop.permute.xlu0 %4033
    %4035 = vrot.lane.b32.xlu0 %v4026, 65
    %v4036 = vpop.permute.xlu0 %4035
    %4037 = vrot.lane.b32.xlu0 %v4030, 65
    %v4038 = vpop.permute.xlu0 %4037
    %v4039 = vsel %vm473, %v4032, %v4034
    %v4040 = vsel %vm473, %v4034, %v4036
    %v4041 = vsel %vm473, %v4036, %v4038
    %v4047 = vmul.f32 %v4008, %v4032
    %v4048 = vmul.f32 %v4009, %v4039
    %v4049 = vmul.f32 %v4010, %v4040
    %v4050 = vmul.f32 %v4011, %v4041
    %v4051 = vmul.f32 %v4012, %v4038
    %4057 = vrot.lane.b32.xlu0 %v4047, 63
    %v4058 = vpop.permute.xlu0 %4057
    %4059 = vrot.lane.b32.xlu0 %v4048, 63
    %v4060 = vpop.permute.xlu0 %4059
    %4061 = vrot.lane.b32.xlu0 %v4049, 63
    %v4062 = vpop.permute.xlu0 %4061
    %4063 = vrot.lane.b32.xlu0 %v4050, 63
    %v4064 = vpop.permute.xlu0 %4063
    %4065 = vrot.lane.b32.xlu0 %v4051, 63
    %v4066 = vpop.permute.xlu0 %4065
    %v4067 = vsel %vm444, %v4058, %v4060
    %v4068 = vsel %vm444, %v4060, %v4062
    %v4069 = vsel %vm444, %v4062, %v4064
    %v4070 = vsel %vm444, %v4064, %v4066
    %4075 = vst [vmem:[#allocation3 + $0x2e0] sm:$0xff] %v4067
    %4076 = vst [vmem:[#allocation3 + $0x2e8] sm:$0xff] %v4068
    %4077 = vst [vmem:[#allocation3 + $0x2f0] sm:$0xff] %v4069
    %4078 = vst [vmem:[#allocation3 + $0x2f8] sm:$0xff] %v4070
    %v4079 = vld [vmem:[#allocation2 + $0x8] sm:$0xff]
    %v4080 = vld [vmem:[#allocation2 + $0x10] sm:$0xff]
    %v4081 = vld [vmem:[#allocation2 + $0x18] sm:$0xff]
    %v4082 = vld [vmem:[#allocation2 + $0x20] sm:$0xff]
    %v4083 = vld [vmem:[#allocation2 + $0x28] sm:$0xff]
    %v4084 = vld [vmem:[%s1903] ss:$8 sm:$0xf]
    %v4086 = vlaneseq
    %v4087 = vshrl.u32 %v4086, 7
    %v4088 = vsub.s32 0, %v4087
    %v4089 = vrot.slane %v4084, %v4088
    %v4090 = vlaneseq
    %v4091 = vshrl.u32 %v4090, 7
    %v4092 = vsub.s32 1, %v4091
    %v4093 = vrot.slane %v4084, %v4092
    %v4094 = vlaneseq
    %v4095 = vshrl.u32 %v4094, 7
    %v4096 = vsub.s32 2, %v4095
    %v4097 = vrot.slane %v4084, %v4096
    %v4098 = vlaneseq
    %v4099 = vshrl.u32 %v4098, 7
    %v4100 = vsub.s32 3, %v4099
    %v4101 = vrot.slane %v4084, %v4100
    %4102 = vrot.lane.b32.xlu0 %v4089, 71
    %v4103 = vpop.permute.xlu0 %4102
    %4104 = vrot.lane.b32.xlu0 %v4093, 71
    %v4105 = vpop.permute.xlu0 %4104
    %4106 = vrot.lane.b32.xlu0 %v4097, 71
    %v4107 = vpop.permute.xlu0 %4106
    %4108 = vrot.lane.b32.xlu0 %v4101, 71
    %v4109 = vpop.permute.xlu0 %4108
    %v4110 = vsel %vm399, %v4103, %v4105
    %v4111 = vsel %vm399, %v4105, %v4107
    %v4112 = vsel %vm399, %v4107, %v4109
    %v4118 = vmul.f32 %v4079, %v4103
    %v4119 = vmul.f32 %v4080, %v4110
    %v4120 = vmul.f32 %v4081, %v4111
    %v4121 = vmul.f32 %v4082, %v4112
    %v4122 = vmul.f32 %v4083, %v4109
    %4128 = vrot.lane.b32.xlu0 %v4118, 57
    %v4129 = vpop.permute.xlu0 %4128
    %4130 = vrot.lane.b32.xlu0 %v4119, 57
    %v4131 = vpop.permute.xlu0 %4130
    %4132 = vrot.lane.b32.xlu0 %v4120, 57
    %v4133 = vpop.permute.xlu0 %4132
    %4134 = vrot.lane.b32.xlu0 %v4121, 57
    %v4135 = vpop.permute.xlu0 %4134
    %4136 = vrot.lane.b32.xlu0 %v4122, 57
    %v4137 = vpop.permute.xlu0 %4136
    %v4138 = vsel %vm370, %v4129, %v4131
    %v4139 = vsel %vm370, %v4131, %v4133
    %v4140 = vsel %vm370, %v4133, %v4135
    %v4141 = vsel %vm370, %v4135, %v4137
    %4146 = vst [vmem:[#allocation3 + $0x300] sm:$0xff] %v4138
    %4147 = vst [vmem:[#allocation3 + $0x308] sm:$0xff] %v4139
    %4148 = vst [vmem:[#allocation3 + $0x310] sm:$0xff] %v4140
    %4149 = vst [vmem:[#allocation3 + $0x318] sm:$0xff] %v4141
    %v4150 = vld [vmem:[#allocation2 + $0x8] sm:$0xff]
    %v4151 = vld [vmem:[#allocation2 + $0x10] sm:$0xff]
    %v4152 = vld [vmem:[#allocation2 + $0x18] sm:$0xff]
    %v4153 = vld [vmem:[#allocation2 + $0x20] sm:$0xff]
    %v4154 = vld [vmem:[#allocation2 + $0x28] sm:$0xff]
    %v4155 = vld [vmem:[%s1975] ss:$8 sm:$0xf]
    %v4157 = vlaneseq
    %v4158 = vshrl.u32 %v4157, 7
    %v4159 = vsub.s32 0, %v4158
    %v4160 = vrot.slane %v4155, %v4159
    %v4161 = vlaneseq
    %v4162 = vshrl.u32 %v4161, 7
    %v4163 = vsub.s32 1, %v4162
    %v4164 = vrot.slane %v4155, %v4163
    %v4165 = vlaneseq
    %v4166 = vshrl.u32 %v4165, 7
    %v4167 = vsub.s32 2, %v4166
    %v4168 = vrot.slane %v4155, %v4167
    %v4169 = vlaneseq
    %v4170 = vshrl.u32 %v4169, 7
    %v4171 = vsub.s32 3, %v4170
    %v4172 = vrot.slane %v4155, %v4171
    %4173 = vrot.lane.b32.xlu0 %v4160, 72
    %v4174 = vpop.permute.xlu0 %4173
    %4175 = vrot.lane.b32.xlu0 %v4164, 72
    %v4176 = vpop.permute.xlu0 %4175
    %4177 = vrot.lane.b32.xlu0 %v4168, 72
    %v4178 = vpop.permute.xlu0 %4177
    %4179 = vrot.lane.b32.xlu0 %v4172, 72
    %v4180 = vpop.permute.xlu0 %4179
    %v4181 = vsel %vm325, %v4174, %v4176
    %v4182 = vsel %vm325, %v4176, %v4178
    %v4183 = vsel %vm325, %v4178, %v4180
    %v4189 = vmul.f32 %v4150, %v4174
    %v4190 = vmul.f32 %v4151, %v4181
    %v4191 = vmul.f32 %v4152, %v4182
    %v4192 = vmul.f32 %v4153, %v4183
    %v4193 = vmul.f32 %v4154, %v4180
    %4199 = vrot.lane.b32.xlu0 %v4189, 56
    %v4200 = vpop.permute.xlu0 %4199
    %4201 = vrot.lane.b32.xlu0 %v4190, 56
    %v4202 = vpop.permute.xlu0 %4201
    %4203 = vrot.lane.b32.xlu0 %v4191, 56
    %v4204 = vpop.permute.xlu0 %4203
    %4205 = vrot.lane.b32.xlu0 %v4192, 56
    %v4206 = vpop.permute.xlu0 %4205
    %4207 = vrot.lane.b32.xlu0 %v4193, 56
    %v4208 = vpop.permute.xlu0 %4207
    %v4209 = vsel %vm296, %v4200, %v4202
    %v4210 = vsel %vm296, %v4202, %v4204
    %v4211 = vsel %vm296, %v4204, %v4206
    %v4212 = vsel %vm296, %v4206, %v4208
    %4217 = vst [vmem:[#allocation3 + $0x320] sm:$0xff] %v4209
    %4218 = vst [vmem:[#allocation3 + $0x328] sm:$0xff] %v4210
    %4219 = vst [vmem:[#allocation3 + $0x330] sm:$0xff] %v4211
    %4220 = vst [vmem:[#allocation3 + $0x338] sm:$0xff] %v4212
    %v4221 = vld [vmem:[#allocation2 + $0x8] sm:$0xff]
    %v4222 = vld [vmem:[#allocation2 + $0x10] sm:$0xff]
    %v4223 = vld [vmem:[#allocation2 + $0x18] sm:$0xff]
    %v4224 = vld [vmem:[#allocation2 + $0x20] sm:$0xff]
    %v4225 = vld [vmem:[#allocation2 + $0x28] sm:$0xff]
    %v4226 = vld [vmem:[%s2047] ss:$8 sm:$0xf]
    %v4228 = vlaneseq
    %v4229 = vshrl.u32 %v4228, 7
    %v4230 = vsub.s32 0, %v4229
    %v4231 = vrot.slane %v4226, %v4230
    %v4232 = vlaneseq
    %v4233 = vshrl.u32 %v4232, 7
    %v4234 = vsub.s32 1, %v4233
    %v4235 = vrot.slane %v4226, %v4234
    %v4236 = vlaneseq
    %v4237 = vshrl.u32 %v4236, 7
    %v4238 = vsub.s32 2, %v4237
    %v4239 = vrot.slane %v4226, %v4238
    %v4240 = vlaneseq
    %v4241 = vshrl.u32 %v4240, 7
    %v4242 = vsub.s32 3, %v4241
    %v4243 = vrot.slane %v4226, %v4242
    %4244 = vrot.lane.b32.xlu0 %v4231, 73
    %v4245 = vpop.permute.xlu0 %4244
    %4246 = vrot.lane.b32.xlu0 %v4235, 73
    %v4247 = vpop.permute.xlu0 %4246
    %4248 = vrot.lane.b32.xlu0 %v4239, 73
    %v4249 = vpop.permute.xlu0 %4248
    %4250 = vrot.lane.b32.xlu0 %v4243, 73
    %v4251 = vpop.permute.xlu0 %4250
    %v4252 = vsel %vm251, %v4245, %v4247
    %v4253 = vsel %vm251, %v4247, %v4249
    %v4254 = vsel %vm251, %v4249, %v4251
    %v4260 = vmul.f32 %v4221, %v4245
    %v4261 = vmul.f32 %v4222, %v4252
    %v4262 = vmul.f32 %v4223, %v4253
    %v4263 = vmul.f32 %v4224, %v4254
    %v4264 = vmul.f32 %v4225, %v4251
    %4270 = vrot.lane.b32.xlu0 %v4260, 55
    %v4271 = vpop.permute.xlu0 %4270
    %4272 = vrot.lane.b32.xlu0 %v4261, 55
    %v4273 = vpop.permute.xlu0 %4272
    %4274 = vrot.lane.b32.xlu0 %v4262, 55
    %v4275 = vpop.permute.xlu0 %4274
    %4276 = vrot.lane.b32.xlu0 %v4263, 55
    %v4277 = vpop.permute.xlu0 %4276
    %4278 = vrot.lane.b32.xlu0 %v4264, 55
    %v4279 = vpop.permute.xlu0 %4278
    %v4280 = vsel %vm222, %v4271, %v4273
    %v4281 = vsel %vm222, %v4273, %v4275
    %v4282 = vsel %vm222, %v4275, %v4277
    %v4283 = vsel %vm222, %v4277, %v4279
    %4288 = vst [vmem:[#allocation3 + $0x340] sm:$0xff] %v4280
    %4289 = vst [vmem:[#allocation3 + $0x348] sm:$0xff] %v4281
    %4290 = vst [vmem:[#allocation3 + $0x350] sm:$0xff] %v4282
    %4291 = vst [vmem:[#allocation3 + $0x358] sm:$0xff] %v4283
    %v4292 = vld [vmem:[#allocation5] sm:$0xff]
    %v4293 = vld [vmem:[#allocation5 + $0x8] sm:$0xff]
    %v4294 = vld [vmem:[#allocation5 + $0x10] sm:$0x1]
    %v4295 = vld [vmem:[#allocation5 + $0x18] sm:$0x1]
    %v4296 = vld [vmem:[#allocation3] sm:$0xff]
    %v4297 = vld [vmem:[#allocation3 + $0x8] sm:$0xff]
    %v4298 = vld [vmem:[#allocation3 + $0x10] sm:$0xff]
    %v4299 = vld [vmem:[#allocation3 + $0x18] sm:$0xff]
    %v4300 = vld [vmem:[#allocation3 + $0x20] sm:$0xff]
    %v4301 = vld [vmem:[#allocation3 + $0x28] sm:$0xff]
    %v4302 = vld [vmem:[#allocation3 + $0x30] sm:$0xff]
    %v4303 = vld [vmem:[#allocation3 + $0x38] sm:$0xff]
    %v4304 = vld [vmem:[#allocation3 + $0x40] sm:$0xff]
    %v4305 = vld [vmem:[#allocation3 + $0x48] sm:$0xff]
    %v4306 = vld [vmem:[#allocation3 + $0x50] sm:$0xff]
    %v4307 = vld [vmem:[#allocation3 + $0x58] sm:$0xff]
    %v4308 = vld [vmem:[#allocation3 + $0x60] sm:$0xff]
    %v4309 = vld [vmem:[#allocation3 + $0x68] sm:$0xff]
    %v4310 = vld [vmem:[#allocation3 + $0x70] sm:$0xff]
    %v4311 = vld [vmem:[#allocation3 + $0x78] sm:$0xff]
    %v4312 = vld [vmem:[#allocation3 + $0x80] sm:$0xff]
    %v4313 = vld [vmem:[#allocation3 + $0x88] sm:$0xff]
    %v4314 = vld [vmem:[#allocation3 + $0x90] sm:$0xff]
    %v4315 = vld [vmem:[#allocation3 + $0x98] sm:$0xff]
    %v4316 = vld [vmem:[#allocation3 + $0xa0] sm:$0xff]
    %v4317 = vld [vmem:[#allocation3 + $0xa8] sm:$0xff]
    %v4318 = vld [vmem:[#allocation3 + $0xb0] sm:$0xff]
    %v4319 = vld [vmem:[#allocation3 + $0xb8] sm:$0xff]
    %v4320 = vld [vmem:[#allocation3 + $0xc0] sm:$0xff]
    %v4321 = vld [vmem:[#allocation3 + $0xc8] sm:$0xff]
    %v4322 = vld [vmem:[#allocation3 + $0xd0] sm:$0xff]
    %v4323 = vld [vmem:[#allocation3 + $0xd8] sm:$0xff]
    %v4324 = vld [vmem:[#allocation3 + $0xe0] sm:$0xff]
    %v4325 = vld [vmem:[#allocation3 + $0xe8] sm:$0xff]
    %v4326 = vld [vmem:[#allocation3 + $0xf0] sm:$0xff]
    %v4327 = vld [vmem:[#allocation3 + $0xf8] sm:$0xff]
    %v4328 = vld [vmem:[#allocation3 + $0x100] sm:$0xff]
    %v4329 = vld [vmem:[#allocation3 + $0x108] sm:$0xff]
    %v4330 = vld [vmem:[#allocation3 + $0x110] sm:$0xff]
    %v4331 = vld [vmem:[#allocation3 + $0x118] sm:$0xff]
    %v4332 = vld [vmem:[#allocation3 + $0x120] sm:$0xff]
    %v4333 = vld [vmem:[#allocation3 + $0x128] sm:$0xff]
    %v4334 = vld [vmem:[#allocation3 + $0x130] sm:$0xff]
    %v4335 = vld [vmem:[#allocation3 + $0x138] sm:$0xff]
    %v4336 = vld [vmem:[#allocation3 + $0x140] sm:$0xff]
    %v4337 = vld [vmem:[#allocation3 + $0x148] sm:$0xff]
    %v4338 = vld [vmem:[#allocation3 + $0x150] sm:$0xff]
    %v4339 = vld [vmem:[#allocation3 + $0x158] sm:$0xff]
    %v4340 = vld [vmem:[#allocation3 + $0x160] sm:$0xff]
    %v4341 = vld [vmem:[#allocation3 + $0x168] sm:$0xff]
    %v4342 = vld [vmem:[#allocation3 + $0x170] sm:$0xff]
    %v4343 = vld [vmem:[#allocation3 + $0x178] sm:$0xff]
    %v4344 = vld [vmem:[#allocation3 + $0x180] sm:$0xff]
    %v4345 = vld [vmem:[#allocation3 + $0x188] sm:$0xff]
    %v4346 = vld [vmem:[#allocation3 + $0x190] sm:$0xff]
    %v4347 = vld [vmem:[#allocation3 + $0x198] sm:$0xff]
    %v4348 = vld [vmem:[#allocation3 + $0x1a0] sm:$0xff]
    %v4349 = vld [vmem:[#allocation3 + $0x1a8] sm:$0xff]
    %v4350 = vld [vmem:[#allocation3 + $0x1b0] sm:$0xff]
    %v4351 = vld [vmem:[#allocation3 + $0x1b8] sm:$0xff]
    %v4352 = vld [vmem:[#allocation3 + $0x1c0] sm:$0xff]
    %v4353 = vld [vmem:[#allocation3 + $0x1c8] sm:$0xff]
    %v4354 = vld [vmem:[#allocation3 + $0x1d0] sm:$0xff]
    %v4355 = vld [vmem:[#allocation3 + $0x1d8] sm:$0xff]
    %v4356 = vld [vmem:[#allocation3 + $0x1e0] sm:$0xff]
    %v4357 = vld [vmem:[#allocation3 + $0x1e8] sm:$0xff]
    %v4358 = vld [vmem:[#allocation3 + $0x1f0] sm:$0xff]
    %v4359 = vld [vmem:[#allocation3 + $0x1f8] sm:$0xff]
    %v4360 = vld [vmem:[#allocation3 + $0x200] sm:$0xff]
    %v4361 = vld [vmem:[#allocation3 + $0x208] sm:$0xff]
    %v4362 = vld [vmem:[#allocation3 + $0x210] sm:$0xff]
    %v4363 = vld [vmem:[#allocation3 + $0x218] sm:$0xff]
    %v4364 = vld [vmem:[#allocation3 + $0x220] sm:$0xff]
    %v4365 = vld [vmem:[#allocation3 + $0x228] sm:$0xff]
    %v4366 = vld [vmem:[#allocation3 + $0x230] sm:$0xff]
    %v4367 = vld [vmem:[#allocation3 + $0x238] sm:$0xff]
    %v4368 = vld [vmem:[#allocation3 + $0x240] sm:$0xff]
    %v4369 = vld [vmem:[#allocation3 + $0x248] sm:$0xff]
    %v4370 = vld [vmem:[#allocation3 + $0x250] sm:$0xff]
    %v4371 = vld [vmem:[#allocation3 + $0x258] sm:$0xff]
    %v4372 = vld [vmem:[#allocation3 + $0x260] sm:$0xff]
    %v4373 = vld [vmem:[#allocation3 + $0x268] sm:$0xff]
    %v4374 = vld [vmem:[#allocation3 + $0x270] sm:$0xff]
    %v4375 = vld [vmem:[#allocation3 + $0x278] sm:$0xff]
    %v4376 = vld [vmem:[#allocation3 + $0x280] sm:$0xff]
    %v4377 = vld [vmem:[#allocation3 + $0x288] sm:$0xff]
    %v4378 = vld [vmem:[#allocation3 + $0x290] sm:$0xff]
    %v4379 = vld [vmem:[#allocation3 + $0x298] sm:$0xff]
    %v4380 = vld [vmem:[#allocation3 + $0x2a0] sm:$0xff]
    %v4381 = vld [vmem:[#allocation3 + $0x2a8] sm:$0xff]
    %v4382 = vld [vmem:[#allocation3 + $0x2b0] sm:$0xff]
    %v4383 = vld [vmem:[#allocation3 + $0x2b8] sm:$0xff]
    %v4384 = vld [vmem:[#allocation3 + $0x2c0] sm:$0xff]
    %v4385 = vld [vmem:[#allocation3 + $0x2c8] sm:$0xff]
    %v4386 = vld [vmem:[#allocation3 + $0x2d0] sm:$0xff]
    %v4387 = vld [vmem:[#allocation3 + $0x2d8] sm:$0xff]
    %v4388 = vld [vmem:[#allocation3 + $0x2e0] sm:$0xff]
    %v4389 = vld [vmem:[#allocation3 + $0x2e8] sm:$0xff]
    %v4390 = vld [vmem:[#allocation3 + $0x2f0] sm:$0xff]
    %v4391 = vld [vmem:[#allocation3 + $0x2f8] sm:$0xff]
    %v4392 = vld [vmem:[#allocation3 + $0x300] sm:$0xff]
    %v4393 = vld [vmem:[#allocation3 + $0x308] sm:$0xff]
    %v4394 = vld [vmem:[#allocation3 + $0x310] sm:$0xff]
    %v4395 = vld [vmem:[#allocation3 + $0x318] sm:$0xff]
    %v4396 = vld [vmem:[#allocation3 + $0x320] sm:$0xff]
    %v4397 = vld [vmem:[#allocation3 + $0x328] sm:$0xff]
    %v4398 = vld [vmem:[#allocation3 + $0x330] sm:$0xff]
    %v4399 = vld [vmem:[#allocation3 + $0x338] sm:$0xff]
    %v4400 = vld [vmem:[#allocation3 + $0x340] sm:$0xff]
    %v4401 = vld [vmem:[#allocation3 + $0x348] sm:$0xff]
    %v4402 = vld [vmem:[#allocation3 + $0x350] sm:$0xff]
    %v4403 = vld [vmem:[#allocation3 + $0x358] sm:$0xff]
    %v4404 = vld [vmem:[#allocation3 + $0x360] sm:$0xff]
    %v4405 = vld [vmem:[#allocation3 + $0x368] sm:$0xff]
    %v4406 = vld [vmem:[#allocation3 + $0x370] sm:$0xff]
    %v4407 = vld [vmem:[#allocation3 + $0x378] sm:$0xff]
    %v4409 = vsel %vm2230, %v4293, 0
    %v4412 = vsel %vm2230, %v4295, 0
    %4414 = vmatprep.subr.mxu0 %v4297
    %4415 = vmatpush1.msra.mxu0 %v4296
    %4416 = vmatprep.subr.mxu0 %v4301
    %4417 = vmatpush1.msra.mxu0 %v4300
    %4418 = vmatprep.subr.mxu0 %v4305
    %4419 = vmatpush1.msra.mxu0 %v4304
    %4420 = vmatprep.subr.mxu0 %v4309
    %4421 = vmatpush1.msra.mxu0 %v4308
    %4422 = vmatprep.subr.mxu0 %v4313
    %4423 = vmatpush1.msra.mxu0 %v4312
    %4424 = vmatprep.subr.mxu0 %v4317
    %4425 = vmatpush1.msra.mxu0 %v4316
    %4426 = vmatprep.subr.mxu0 %v4321
    %4427 = vmatpush1.msra.mxu0 %v4320
    %4428 = vmatprep.subr.mxu0 %v4325
    %4429 = vmatpush1.msra.mxu0 %v4324
    %4430 = vmatprep.subr.mxu0 %v4329
    %4431 = vmatpush1.msra.mxu0 %v4328
    %4432 = vmatprep.subr.mxu0 %v4333
    %4433 = vmatpush1.msra.mxu0 %v4332
    %4434 = vmatprep.subr.mxu0 %v4337
    %4435 = vmatpush1.msra.mxu0 %v4336
    %4436 = vmatprep.subr.mxu0 %v4341
    %4437 = vmatpush1.msra.mxu0 %v4340
    %4438 = vmatprep.subr.mxu0 %v4345
    %4439 = vmatpush1.msra.mxu0 %v4344
    %4440 = vmatprep.subr.mxu0 %v4349
    %4441 = vmatpush1.msra.mxu0 %v4348
    %4442 = vmatprep.subr.mxu0 %v4353
    %4443 = vmatpush1.msra.mxu0 %v4352
    %4444 = vmatprep.subr.mxu0 %v4357
    %4445 = vmatpush1.msra.mxu0 %v4356
    %4446 = vmatprep.subr.mxu0 %v4361
    %4447 = vmatpush1.msra.mxu0 %v4360
    %4448 = vmatprep.subr.mxu0 %v4365
    %4449 = vmatpush1.msra.mxu0 %v4364
    %4450 = vmatprep.subr.mxu0 %v4369
    %4451 = vmatpush1.msra.mxu0 %v4368
    %4452 = vmatprep.subr.mxu0 %v4373
    %4453 = vmatpush1.msra.mxu0 %v4372
    %4454 = vmatprep.subr.mxu0 %v4377
    %4455 = vmatpush1.msra.mxu0 %v4376
    %4456 = vmatprep.subr.mxu0 %v4381
    %4457 = vmatpush1.msra.mxu0 %v4380
    %4458 = vmatprep.subr.mxu0 %v4385
    %4459 = vmatpush1.msra.mxu0 %v4384
    %4460 = vmatprep.subr.mxu0 %v4389
    %4461 = vmatpush1.msra.mxu0 %v4388
    %4462 = vmatprep.subr.mxu0 %v4393
    %4463 = vmatpush1.msra.mxu0 %v4392
    %4464 = vmatprep.subr.mxu0 %v4397
    %4465 = vmatpush1.msra.mxu0 %v4396
    %4466 = vmatprep.subr.mxu0 %v4401
    %4467 = vmatpush1.msra.mxu0 %v4400
    %4468 = vmatprep.subr.mxu0 %v4405
    %4469 = vmatpush1.msra.mxu0 %v4404
    %4470 = vmatprep.subr.mxu0 0.0
    %4471 = vmatpush1.msra.mxu0 0.0
    %4472 = vmatprep.subr.mxu0 0.0
    %4473 = vmatpush1.msra.mxu0 0.0
    %4474 = vmatprep.subr.mxu0 0.0
    %4475 = vmatpush1.msra.mxu0 0.0
    %4476 = vmatprep.subr.mxu0 0.0
    %4477 = vmatpush1.msra.mxu0 0.0
    %4478 = vmatprep.mubr.f32.mxu0 %v4409
    %4479 = vmatmul.mubr.f32.gmra.mrb[0].mxu0 %v4292
    %v4480 = vpop.f32.mrb[0].mxu0
    %v4481 = vadd.f32 0.0, %v4480
    %v4482 = vpop.f32.mrb[0].mxu0
    %v4483 = vadd.f32 0.0, %v4482
    %4484 = vmatprep.mubr.f32.mxu0 %v4412
    %4485 = vmatmul.mubr.f32.gmra.mrb[0].mxu0 %v4294
    %v4486 = vpop.f32.mrb[0].mxu0
    %v4487 = vadd.f32 0.0, %v4486
    %v4488 = vpop.f32.mrb[0].mxu0
    %v4489 = vadd.f32 0.0, %v4488
    %4490 = vdwg.mxu0
    %4491 = vmatprep.subr.mxu0 %v4299
    %4492 = vmatpush1.msra.mxu0 %v4298
    %4493 = vmatprep.subr.mxu0 %v4303
    %4494 = vmatpush1.msra.mxu0 %v4302
    %4495 = vmatprep.subr.mxu0 %v4307
    %4496 = vmatpush1.msra.mxu0 %v4306
    %4497 = vmatprep.subr.mxu0 %v4311
    %4498 = vmatpush1.msra.mxu0 %v4310
    %4499 = vmatprep.subr.mxu0 %v4315
    %4500 = vmatpush1.msra.mxu0 %v4314
    %4501 = vmatprep.subr.mxu0 %v4319
    %4502 = vmatpush1.msra.mxu0 %v4318
    %4503 = vmatprep.subr.mxu0 %v4323
    %4504 = vmatpush1.msra.mxu0 %v4322
    %4505 = vmatprep.subr.mxu0 %v4327
    %4506 = vmatpush1.msra.mxu0 %v4326
    %4507 = vmatprep.subr.mxu0 %v4331
    %4508 = vmatpush1.msra.mxu0 %v4330
    %4509 = vmatprep.subr.mxu0 %v4335
    %4510 = vmatpush1.msra.mxu0 %v4334
    %4511 = vmatprep.subr.mxu0 %v4339
    %4512 = vmatpush1.msra.mxu0 %v4338
    %4513 = vmatprep.subr.mxu0 %v4343
    %4514 = vmatpush1.msra.mxu0 %v4342
    %4515 = vmatprep.subr.mxu0 %v4347
    %4516 = vmatpush1.msra.mxu0 %v4346
    %4517 = vmatprep.subr.mxu0 %v4351
    %4518 = vmatpush1.msra.mxu0 %v4350
    %4519 = vmatprep.subr.mxu0 %v4355
    %4520 = vmatpush1.msra.mxu0 %v4354
    %4521 = vmatprep.subr.mxu0 %v4359
    %4522 = vmatpush1.msra.mxu0 %v4358
    %4523 = vmatprep.subr.mxu0 %v4363
    %4524 = vmatpush1.msra.mxu0 %v4362
    %4525 = vmatprep.subr.mxu0 %v4367
    %4526 = vmatpush1.msra.mxu0 %v4366
    %4527 = vmatprep.subr.mxu0 %v4371
    %4528 = vmatpush1.msra.mxu0 %v4370
    %4529 = vmatprep.subr.mxu0 %v4375
    %4530 = vmatpush1.msra.mxu0 %v4374
    %4531 = vmatprep.subr.mxu0 %v4379
    %4532 = vmatpush1.msra.mxu0 %v4378
    %4533 = vmatprep.subr.mxu0 %v4383
    %4534 = vmatpush1.msra.mxu0 %v4382
    %4535 = vmatprep.subr.mxu0 %v4387
    %4536 = vmatpush1.msra.mxu0 %v4386
    %4537 = vmatprep.subr.mxu0 %v4391
    %4538 = vmatpush1.msra.mxu0 %v4390
    %4539 = vmatprep.subr.mxu0 %v4395
    %4540 = vmatpush1.msra.mxu0 %v4394
    %4541 = vmatprep.subr.mxu0 %v4399
    %4542 = vmatpush1.msra.mxu0 %v4398
    %4543 = vmatprep.subr.mxu0 %v4403
    %4544 = vmatpush1.msra.mxu0 %v4402
    %4545 = vmatprep.subr.mxu0 %v4407
    %4546 = vmatpush1.msra.mxu0 %v4406
    %4547 = vmatprep.subr.mxu0 0.0
    %4548 = vmatpush1.msra.mxu0 0.0
    %4549 = vmatprep.subr.mxu0 0.0
    %4550 = vmatpush1.msra.mxu0 0.0
    %4551 = vmatprep.subr.mxu0 0.0
    %4552 = vmatpush1.msra.mxu0 0.0
    %4553 = vmatprep.subr.mxu0 0.0
    %4554 = vmatpush1.msra.mxu0 0.0
    %4555 = vmatprep.mubr.f32.mxu0 %v4409
    %4556 = vmatmul.mubr.f32.gmra.mrb[0].mxu0 %v4292
    %v4557 = vpop.f32.mrb[0].mxu0
    %v4558 = vadd.f32 0.0, %v4557
    %v4559 = vpop.f32.mrb[0].mxu0
    %v4560 = vadd.f32 0.0, %v4559
    %4561 = vmatprep.mubr.f32.mxu0 %v4412
    %4562 = vmatmul.mubr.f32.gmra.mrb[0].mxu0 %v4294
    %v4563 = vpop.f32.mrb[0].mxu0
    %v4564 = vadd.f32 0.0, %v4563
    %v4565 = vpop.f32.mrb[0].mxu0
    %v4566 = vadd.f32 0.0, %v4565
    %4567 = vdwg.mxu0
    %4568 = vst [vmem:[#allocation4 + $0x20] sm:$0xff] %v4481
    %4569 = vst [vmem:[#allocation4 + $0x28] sm:$0xff] %v4483
    %4570 = vst [vmem:[#allocation4 + $0x30] sm:$0xff] %v4558
    %4571 = vst [vmem:[#allocation4 + $0x38] sm:$0xff] %v4560
    %4572 = vst [vmem:[#allocation4 + $0x60] sm:$0x1] %v4487
    %4573 = vst [vmem:[#allocation4 + $0x68] sm:$0x1] %v4489
    %4574 = vst [vmem:[#allocation4 + $0x70] sm:$0x1] %v4564
    %4575 = vst [vmem:[#allocation4 + $0x78] sm:$0x1] %v4566
    %v4576 = vld [vmem:[#allocation4] sm:$0xff]
    %v4577 = vld [vmem:[#allocation4 + $0x8] sm:$0xff]
    %v4578 = vld [vmem:[#allocation4 + $0x10] sm:$0xff]
    %v4579 = vld [vmem:[#allocation4 + $0x18] sm:$0xff]
    %v4580 = vld [vmem:[#allocation4 + $0x20] sm:$0xff]
    %v4581 = vld [vmem:[#allocation4 + $0x28] sm:$0xff]
    %v4582 = vld [vmem:[#allocation4 + $0x30] sm:$0xff]
    %v4583 = vld [vmem:[#allocation4 + $0x38] sm:$0xff]
    %v4584 = vld [vmem:[#allocation4 + $0x40] sm:$0x1]
    %v4585 = vld [vmem:[#allocation4 + $0x48] sm:$0x1]
    %v4586 = vld [vmem:[#allocation4 + $0x50] sm:$0x1]
    %v4587 = vld [vmem:[#allocation4 + $0x58] sm:$0x1]
    %v4588 = vld [vmem:[#allocation4 + $0x60] sm:$0x1]
    %v4589 = vld [vmem:[#allocation4 + $0x68] sm:$0x1]
    %v4590 = vld [vmem:[#allocation4 + $0x70] sm:$0x1]
    %v4591 = vld [vmem:[#allocation4 + $0x78] sm:$0x1]
    %v4592 = vadd.f32 %v4576, %v4577
    %v4593 = vadd.f32 %v4592, %v4578
    %v4594 = vadd.f32 %v4593, %v4579
    %v4595 = vadd.f32 %v4594, %v4580
    %v4596 = vadd.f32 %v4595, %v4581
    %v4597 = vadd.f32 %v4596, %v4582
    %v4598 = vadd.f32 %v4597, %v4583
    %4599 = vadd.xlane.f32.xlu0 %v4598
    %v4600 = vpop.xlane.xlu0 %4599
    %vm4601 = vcmask 1040384
    %v4602 = vsel %vm4601, %v4584, 0.0
    %v4603 = vsel %vm4601, %v4585, 0.0
    %v4604 = vadd.f32 %v4602, %v4603
    %v4605 = vsel %vm4601, %v4586, 0.0
    %v4606 = vadd.f32 %v4604, %v4605
    %v4607 = vsel %vm4601, %v4587, 0.0
    %v4608 = vadd.f32 %v4606, %v4607
    %v4609 = vsel %vm4601, %v4588, 0.0
    %v4610 = vadd.f32 %v4608, %v4609
    %v4611 = vsel %vm4601, %v4589, 0.0
    %v4612 = vadd.f32 %v4610, %v4611
    %v4613 = vsel %vm4601, %v4590, 0.0
    %v4614 = vadd.f32 %v4612, %v4613
    %v4615 = vsel %vm4601, %v4591, 0.0
    %v4616 = vadd.f32 %v4614, %v4615
    %4617 = vadd.xlane.f32.xlu0 %v4616
    %v4618 = vpop.xlane.xlu0 %4617
    %v4619 = vmul.f32 %v4600, 0.0009765625
    %v4620 = vmul.f32 %v4618, 0.0009765625
    %v4621 = vsub.f32 %v4576, %v4619
    %v4622 = vsub.f32 %v4577, %v4619
    %v4623 = vsub.f32 %v4578, %v4619
    %v4624 = vsub.f32 %v4579, %v4619
    %v4625 = vsub.f32 %v4580, %v4619
    %v4626 = vsub.f32 %v4581, %v4619
    %v4627 = vsub.f32 %v4582, %v4619
    %v4628 = vsub.f32 %v4583, %v4619
    %v4629 = vsub.f32 %v4584, %v4620
    %v4630 = vsub.f32 %v4585, %v4620
    %v4631 = vsub.f32 %v4586, %v4620
    %v4632 = vsub.f32 %v4587, %v4620
    %v4633 = vsub.f32 %v4588, %v4620
    %v4634 = vsub.f32 %v4589, %v4620
    %v4635 = vsub.f32 %v4590, %v4620
    %v4636 = vsub.f32 %v4591, %v4620
    %v4637 = vmul.f32 %v4621, %v4621
    %v4638 = vmul.f32 %v4622, %v4622
    %v4639 = vmul.f32 %v4623, %v4623
    %v4640 = vmul.f32 %v4624, %v4624
    %v4641 = vmul.f32 %v4625, %v4625
    %v4642 = vmul.f32 %v4626, %v4626
    %v4643 = vmul.f32 %v4627, %v4627
    %v4644 = vmul.f32 %v4628, %v4628
    %v4645 = vmul.f32 %v4629, %v4629
    %v4646 = vmul.f32 %v4630, %v4630
    %v4647 = vmul.f32 %v4631, %v4631
    %v4648 = vmul.f32 %v4632, %v4632
    %v4649 = vmul.f32 %v4633, %v4633
    %v4650 = vmul.f32 %v4634, %v4634
    %v4651 = vmul.f32 %v4635, %v4635
    %v4652 = vmul.f32 %v4636, %v4636
    %v4653 = vadd.f32 %v4637, %v4638
    %v4654 = vadd.f32 %v4653, %v4639
    %v4655 = vadd.f32 %v4654, %v4640
    %v4656 = vadd.f32 %v4655, %v4641
    %v4657 = vadd.f32 %v4656, %v4642
    %v4658 = vadd.f32 %v4657, %v4643
    %v4659 = vadd.f32 %v4658, %v4644
    %4660 = vadd.xlane.f32.xlu0 %v4659
    %v4661 = vpop.xlane.xlu0 %4660
    %v4662 = vsel %vm4601, %v4645, 0.0
    %v4663 = vsel %vm4601, %v4646, 0.0
    %v4664 = vadd.f32 %v4662, %v4663
    %v4665 = vsel %vm4601, %v4647, 0.0
    %v4666 = vadd.f32 %v4664, %v4665
    %v4667 = vsel %vm4601, %v4648, 0.0
    %v4668 = vadd.f32 %v4666, %v4667
    %v4669 = vsel %vm4601, %v4649, 0.0
    %v4670 = vadd.f32 %v4668, %v4669
    %v4671 = vsel %vm4601, %v4650, 0.0
    %v4672 = vadd.f32 %v4670, %v4671
    %v4673 = vsel %vm4601, %v4651, 0.0
    %v4674 = vadd.f32 %v4672, %v4673
    %v4675 = vsel %vm4601, %v4652, 0.0
    %v4676 = vadd.f32 %v4674, %v4675
    %4677 = vadd.xlane.f32.xlu0 %v4676
    %v4678 = vpop.xlane.xlu0 %4677
    %v4679 = vmul.f32 %v4661, 0.0009765625
    %v4680 = vmul.f32 %v4678, 0.0009765625
    %v4681 = vld [vmem:[%s3] sm:$0xff]
    %v4682 = vld [vmem:[%s3 + $0x8] sm:$0x1]
    %v4683 = vadd.f32 %v4679, 1e-05
    %v4684 = vadd.f32 %v4680, 1e-05
    %v4685 = vrsqrt.pop %v4683
    %v4686 = vrsqrt.pop %v4684
    %v4687 = vmul.f32 %v4681, %v4685
    %v4688 = vmul.f32 %v4682, %v4686
    %v4689 = vld [vmem:[%s4] sm:$0xff]
    %v4690 = vld [vmem:[%s4 + $0x8] sm:$0x1]
    %v4691 = vmul.f32 %v4619, %v4687
    %v4692 = vmul.f32 %v4620, %v4688
    %v4693 = vsub.f32 %v4689, %v4691
    %v4694 = vsub.f32 %v4690, %v4692
    %4696 = vset.pattern.permute.xlu0 0
    %4697 = vperm.xlu0 %4696, %v4687
    %v4698 = vpop.permute.xlu0 %4697
    %4701 = vset.pattern.permute.xlu0 0
    %4702 = vperm.xlu0 %4701, %v4688
    %v4703 = vpop.permute.xlu0 %4702
    %v4705 = vmul.f32 %v4576, %v4698
    %v4706 = vmul.f32 %v4577, %v4698
    %v4707 = vmul.f32 %v4578, %v4698
    %v4708 = vmul.f32 %v4579, %v4698
    %v4709 = vmul.f32 %v4580, %v4698
    %v4710 = vmul.f32 %v4581, %v4698
    %v4711 = vmul.f32 %v4582, %v4698
    %v4712 = vmul.f32 %v4583, %v4698
    %v4713 = vmul.f32 %v4584, %v4703
    %v4714 = vmul.f32 %v4585, %v4703
    %v4715 = vmul.f32 %v4586, %v4703
    %v4716 = vmul.f32 %v4587, %v4703
    %v4717 = vmul.f32 %v4588, %v4703
    %v4718 = vmul.f32 %v4589, %v4703
    %v4719 = vmul.f32 %v4590, %v4703
    %v4720 = vmul.f32 %v4591, %v4703
    %4722 = vset.pattern.permute.xlu0 0
    %4723 = vperm.xlu0 %4722, %v4693
    %v4724 = vpop.permute.xlu0 %4723
    %4727 = vset.pattern.permute.xlu0 0
    %4728 = vperm.xlu0 %4727, %v4694
    %v4729 = vpop.permute.xlu0 %4728
    %v4731 = vadd.f32 %v4705, %v4724
    %v4732 = vadd.f32 %v4706, %v4724
    %v4733 = vadd.f32 %v4707, %v4724
    %v4734 = vadd.f32 %v4708, %v4724
    %v4735 = vadd.f32 %v4709, %v4724
    %v4736 = vadd.f32 %v4710, %v4724
    %v4737 = vadd.f32 %v4711, %v4724
    %v4738 = vadd.f32 %v4712, %v4724
    %v4739 = vadd.f32 %v4713, %v4729
    %v4740 = vadd.f32 %v4714, %v4729
    %v4741 = vadd.f32 %v4715, %v4729
    %v4742 = vadd.f32 %v4716, %v4729
    %v4743 = vadd.f32 %v4717, %v4729
    %v4744 = vadd.f32 %v4718, %v4729
    %v4745 = vadd.f32 %v4719, %v4729
    %v4746 = vadd.f32 %v4720, %v4729
    %v4747 = vmax.f32 %v4731, 0.0
    %v4748 = vmax.f32 %v4732, 0.0
    %v4749 = vmax.f32 %v4733, 0.0
    %v4750 = vmax.f32 %v4734, 0.0
    %v4751 = vmax.f32 %v4735, 0.0
    %v4752 = vmax.f32 %v4736, 0.0
    %v4753 = vmax.f32 %v4737, 0.0
    %v4754 = vmax.f32 %v4738, 0.0
    %v4755 = vmax.f32 %v4739, 0.0
    %v4756 = vmax.f32 %v4740, 0.0
    %v4757 = vmax.f32 %v4741, 0.0
    %v4758 = vmax.f32 %v4742, 0.0
    %v4759 = vmax.f32 %v4743, 0.0
    %v4760 = vmax.f32 %v4744, 0.0
    %v4761 = vmax.f32 %v4745, 0.0
    %v4762 = vmax.f32 %v4746, 0.0
    %v4763 = vld [vmem:[%s5] sm:$0xff]
    %v4764 = vld [vmem:[%s5 + $0x8] sm:$0x1]
    %v4765 = vld [vmem:[%s6] sm:$0xff]
    %v4766 = vld [vmem:[%s6 + $0x8] sm:$0x1]
    %4768 = vset.pattern.permute.xlu0 0
    %4769 = vperm.xlu0 %4768, %v4765
    %v4770 = vpop.permute.xlu0 %4769
    %4773 = vset.pattern.permute.xlu0 0
    %4774 = vperm.xlu0 %4773, %v4766
    %v4775 = vpop.permute.xlu0 %4774
    %v4778 = vsel %vm908, %v4763, 0
    %v4781 = vsel %vm908, %v4764, 0
    %v4784 = vsel %vm4601, %v4755, 0
    %v4787 = vsel %vm4601, %v4756, 0
    %v4790 = vsel %vm4601, %v4757, 0
    %v4793 = vsel %vm4601, %v4758, 0
    %v4796 = vsel %vm4601, %v4759, 0
    %v4799 = vsel %vm4601, %v4760, 0
    %v4802 = vsel %vm4601, %v4761, 0
    %v4805 = vsel %vm4601, %v4762, 0
    %4807 = vmatprep.subr.mxu0 %v4748
    %4808 = vmatpush1.msra.mxu0 %v4747
    %4809 = vmatprep.subr.mxu0 %v4787
    %4810 = vmatpush1.msra.mxu0 %v4784
    %4811 = vmatprep.subr.mxu0 0.0
    %4812 = vmatpush1.msra.mxu0 0.0
    %4813 = vmatprep.subr.mxu0 0.0
    %4814 = vmatpush1.msra.mxu0 0.0
    %4815 = vmatprep.subr.mxu0 0.0
    %4816 = vmatpush1.msra.mxu0 0.0
    %4817 = vmatprep.subr.mxu0 0.0
    %4818 = vmatpush1.msra.mxu0 0.0
    %4819 = vmatprep.subr.mxu0 0.0
    %4820 = vmatpush1.msra.mxu0 0.0
    %4821 = vmatprep.subr.mxu0 0.0
    %4822 = vmatpush1.msra.mxu0 0.0
    %4823 = vmatprep.subr.mxu0 0.0
    %4824 = vmatpush1.msra.mxu0 0.0
    %4825 = vmatprep.subr.mxu0 0.0
    %4826 = vmatpush1.msra.mxu0 0.0
    %4827 = vmatprep.subr.mxu0 0.0
    %4828 = vmatpush1.msra.mxu0 0.0
    %4829 = vmatprep.subr.mxu0 0.0
    %4830 = vmatpush1.msra.mxu0 0.0
    %4831 = vmatprep.subr.mxu0 0.0
    %4832 = vmatpush1.msra.mxu0 0.0
    %4833 = vmatprep.subr.mxu0 0.0
    %4834 = vmatpush1.msra.mxu0 0.0
    %4835 = vmatprep.subr.mxu0 0.0
    %4836 = vmatpush1.msra.mxu0 0.0
    %4837 = vmatprep.subr.mxu0 0.0
    %4838 = vmatpush1.msra.mxu0 0.0
    %4839 = vmatprep.subr.mxu0 0.0
    %4840 = vmatpush1.msra.mxu0 0.0
    %4841 = vmatprep.subr.mxu0 0.0
    %4842 = vmatpush1.msra.mxu0 0.0
    %4843 = vmatprep.subr.mxu0 0.0
    %4844 = vmatpush1.msra.mxu0 0.0
    %4845 = vmatprep.subr.mxu0 0.0
    %4846 = vmatpush1.msra.mxu0 0.0
    %4847 = vmatprep.subr.mxu0 0.0
    %4848 = vmatpush1.msra.mxu0 0.0
    %4849 = vmatprep.subr.mxu0 0.0
    %4850 = vmatpush1.msra.mxu0 0.0
    %4851 = vmatprep.subr.mxu0 0.0
    %4852 = vmatpush1.msra.mxu0 0.0
    %4853 = vmatprep.subr.mxu0 0.0
    %4854 = vmatpush1.msra.mxu0 0.0
    %4855 = vmatprep.subr.mxu0 0.0
    %4856 = vmatpush1.msra.mxu0 0.0
    %4857 = vmatprep.subr.mxu0 0.0
    %4858 = vmatpush1.msra.mxu0 0.0
    %4859 = vmatprep.subr.mxu0 0.0
    %4860 = vmatpush1.msra.mxu0 0.0
    %4861 = vmatprep.subr.mxu0 0.0
    %4862 = vmatpush1.msra.mxu0 0.0
    %4863 = vmatprep.subr.mxu0 0.0
    %4864 = vmatpush1.msra.mxu0 0.0
    %4865 = vmatprep.subr.mxu0 0.0
    %4866 = vmatpush1.msra.mxu0 0.0
    %4867 = vmatprep.subr.mxu0 0.0
    %4868 = vmatpush1.msra.mxu0 0.0
    %4869 = vmatprep.subr.mxu0 0.0
    %4870 = vmatpush1.msra.mxu0 0.0
    %4871 = vmatprep.mubr.f32.mxu0 0.0
    %4872 = vmatmul.mubr.f32.gmra.mrb[0].mxu0 %v4778
    %v4873 = vpop.f32.mrb[0].mxu0
    %v4874 = vadd.f32 %v4770, %v4873
    %v4875 = vpop.f32.mrb[0].mxu0
    %v4876 = vadd.f32 %v4770, %v4875
    %4877 = vmatprep.mubr.f32.mxu0 0.0
    %4878 = vmatmul.mubr.f32.gmra.mrb[0].mxu0 %v4781
    %v4879 = vpop.f32.mrb[0].mxu0
    %v4880 = vadd.f32 %v4775, %v4879
    %v4881 = vpop.f32.mrb[0].mxu0
    %v4882 = vadd.f32 %v4775, %v4881
    %4883 = vdwg.mxu0
    %4884 = vmatprep.subr.mxu0 %v4750
    %4885 = vmatpush1.msra.mxu0 %v4749
    %4886 = vmatprep.subr.mxu0 %v4793
    %4887 = vmatpush1.msra.mxu0 %v4790
    %4888 = vmatprep.subr.mxu0 0.0
    %4889 = vmatpush1.msra.mxu0 0.0
    %4890 = vmatprep.subr.mxu0 0.0
    %4891 = vmatpush1.msra.mxu0 0.0
    %4892 = vmatprep.subr.mxu0 0.0
    %4893 = vmatpush1.msra.mxu0 0.0
    %4894 = vmatprep.subr.mxu0 0.0
    %4895 = vmatpush1.msra.mxu0 0.0
    %4896 = vmatprep.subr.mxu0 0.0
    %4897 = vmatpush1.msra.mxu0 0.0
    %4898 = vmatprep.subr.mxu0 0.0
    %4899 = vmatpush1.msra.mxu0 0.0
    %4900 = vmatprep.subr.mxu0 0.0
    %4901 = vmatpush1.msra.mxu0 0.0
    %4902 = vmatprep.subr.mxu0 0.0
    %4903 = vmatpush1.msra.mxu0 0.0
    %4904 = vmatprep.subr.mxu0 0.0
    %4905 = vmatpush1.msra.mxu0 0.0
    %4906 = vmatprep.subr.mxu0 0.0
    %4907 = vmatpush1.msra.mxu0 0.0
    %4908 = vmatprep.subr.mxu0 0.0
    %4909 = vmatpush1.msra.mxu0 0.0
    %4910 = vmatprep.subr.mxu0 0.0
    %4911 = vmatpush1.msra.mxu0 0.0
    %4912 = vmatprep.subr.mxu0 0.0
    %4913 = vmatpush1.msra.mxu0 0.0
    %4914 = vmatprep.subr.mxu0 0.0
    %4915 = vmatpush1.msra.mxu0 0.0
    %4916 = vmatprep.subr.mxu0 0.0
    %4917 = vmatpush1.msra.mxu0 0.0
    %4918 = vmatprep.subr.mxu0 0.0
    %4919 = vmatpush1.msra.mxu0 0.0
    %4920 = vmatprep.subr.mxu0 0.0
    %4921 = vmatpush1.msra.mxu0 0.0
    %4922 = vmatprep.subr.mxu0 0.0
    %4923 = vmatpush1.msra.mxu0 0.0
    %4924 = vmatprep.subr.mxu0 0.0
    %4925 = vmatpush1.msra.mxu0 0.0
    %4926 = vmatprep.subr.mxu0 0.0
    %4927 = vmatpush1.msra.mxu0 0.0
    %4928 = vmatprep.subr.mxu0 0.0
    %4929 = vmatpush1.msra.mxu0 0.0
    %4930 = vmatprep.subr.mxu0 0.0
    %4931 = vmatpush1.msra.mxu0 0.0
    %4932 = vmatprep.subr.mxu0 0.0
    %4933 = vmatpush1.msra.mxu0 0.0
    %4934 = vmatprep.subr.mxu0 0.0
    %4935 = vmatpush1.msra.mxu0 0.0
    %4936 = vmatprep.subr.mxu0 0.0
    %4937 = vmatpush1.msra.mxu0 0.0
    %4938 = vmatprep.subr.mxu0 0.0
    %4939 = vmatpush1.msra.mxu0 0.0
    %4940 = vmatprep.subr.mxu0 0.0
    %4941 = vmatpush1.msra.mxu0 0.0
    %4942 = vmatprep.subr.mxu0 0.0
    %4943 = vmatpush1.msra.mxu0 0.0
    %4944 = vmatprep.subr.mxu0 0.0
    %4945 = vmatpush1.msra.mxu0 0.0
    %4946 = vmatprep.subr.mxu0 0.0
    %4947 = vmatpush1.msra.mxu0 0.0
    %4948 = vmatprep.mubr.f32.mxu0 0.0
    %4949 = vmatmul.mubr.f32.gmra.mrb[0].mxu0 %v4778
    %v4950 = vpop.f32.mrb[0].mxu0
    %v4951 = vadd.f32 %v4770, %v4950
    %v4952 = vpop.f32.mrb[0].mxu0
    %v4953 = vadd.f32 %v4770, %v4952
    %4954 = vmatprep.mubr.f32.mxu0 0.0
    %4955 = vmatmul.mubr.f32.gmra.mrb[0].mxu0 %v4781
    %v4956 = vpop.f32.mrb[0].mxu0
    %v4957 = vadd.f32 %v4775, %v4956
    %v4958 = vpop.f32.mrb[0].mxu0
    %v4959 = vadd.f32 %v4775, %v4958
    %4960 = vdwg.mxu0
    %4961 = vmatprep.subr.mxu0 %v4752
    %4962 = vmatpush1.msra.mxu0 %v4751
    %4963 = vmatprep.subr.mxu0 %v4799
    %4964 = vmatpush1.msra.mxu0 %v4796
    %4965 = vmatprep.subr.mxu0 0.0
    %4966 = vmatpush1.msra.mxu0 0.0
    %4967 = vmatprep.subr.mxu0 0.0
    %4968 = vmatpush1.msra.mxu0 0.0
    %4969 = vmatprep.subr.mxu0 0.0
    %4970 = vmatpush1.msra.mxu0 0.0
    %4971 = vmatprep.subr.mxu0 0.0
    %4972 = vmatpush1.msra.mxu0 0.0
    %4973 = vmatprep.subr.mxu0 0.0
    %4974 = vmatpush1.msra.mxu0 0.0
    %4975 = vmatprep.subr.mxu0 0.0
    %4976 = vmatpush1.msra.mxu0 0.0
    %4977 = vmatprep.subr.mxu0 0.0
    %4978 = vmatpush1.msra.mxu0 0.0
    %4979 = vmatprep.subr.mxu0 0.0
    %4980 = vmatpush1.msra.mxu0 0.0
    %4981 = vmatprep.subr.mxu0 0.0
    %4982 = vmatpush1.msra.mxu0 0.0
    %4983 = vmatprep.subr.mxu0 0.0
    %4984 = vmatpush1.msra.mxu0 0.0
    %4985 = vmatprep.subr.mxu0 0.0
    %4986 = vmatpush1.msra.mxu0 0.0
    %4987 = vmatprep.subr.mxu0 0.0
    %4988 = vmatpush1.msra.mxu0 0.0
    %4989 = vmatprep.subr.mxu0 0.0
    %4990 = vmatpush1.msra.mxu0 0.0
    %4991 = vmatprep.subr.mxu0 0.0
    %4992 = vmatpush1.msra.mxu0 0.0
    %4993 = vmatprep.subr.mxu0 0.0
    %4994 = vmatpush1.msra.mxu0 0.0
    %4995 = vmatprep.subr.mxu0 0.0
    %4996 = vmatpush1.msra.mxu0 0.0
    %4997 = vmatprep.subr.mxu0 0.0
    %4998 = vmatpush1.msra.mxu0 0.0
    %4999 = vmatprep.subr.mxu0 0.0
    %5000 = vmatpush1.msra.mxu0 0.0
    %5001 = vmatprep.subr.mxu0 0.0
    %5002 = vmatpush1.msra.mxu0 0.0
    %5003 = vmatprep.subr.mxu0 0.0
    %5004 = vmatpush1.msra.mxu0 0.0
    %5005 = vmatprep.subr.mxu0 0.0
    %5006 = vmatpush1.msra.mxu0 0.0
    %5007 = vmatprep.subr.mxu0 0.0
    %5008 = vmatpush1.msra.mxu0 0.0
    %5009 = vmatprep.subr.mxu0 0.0
    %5010 = vmatpush1.msra.mxu0 0.0
    %5011 = vmatprep.subr.mxu0 0.0
    %5012 = vmatpush1.msra.mxu0 0.0
    %5013 = vmatprep.subr.mxu0 0.0
    %5014 = vmatpush1.msra.mxu0 0.0
    %5015 = vmatprep.subr.mxu0 0.0
    %5016 = vmatpush1.msra.mxu0 0.0
    %5017 = vmatprep.subr.mxu0 0.0
    %5018 = vmatpush1.msra.mxu0 0.0
    %5019 = vmatprep.subr.mxu0 0.0
    %5020 = vmatpush1.msra.mxu0 0.0
    %5021 = vmatprep.subr.mxu0 0.0
    %5022 = vmatpush1.msra.mxu0 0.0
    %5023 = vmatprep.subr.mxu0 0.0
    %5024 = vmatpush1.msra.mxu0 0.0
    %5025 = vmatprep.mubr.f32.mxu0 0.0
    %5026 = vmatmul.mubr.f32.gmra.mrb[0].mxu0 %v4778
    %v5027 = vpop.f32.mrb[0].mxu0
    %v5028 = vadd.f32 %v4770, %v5027
    %v5029 = vpop.f32.mrb[0].mxu0
    %v5030 = vadd.f32 %v4770, %v5029
    %5031 = vmatprep.mubr.f32.mxu0 0.0
    %5032 = vmatmul.mubr.f32.gmra.mrb[0].mxu0 %v4781
    %v5033 = vpop.f32.mrb[0].mxu0
    %v5034 = vadd.f32 %v4775, %v5033
    %v5035 = vpop.f32.mrb[0].mxu0
    %v5036 = vadd.f32 %v4775, %v5035
    %5037 = vdwg.mxu0
    %5038 = vmatprep.subr.mxu0 %v4754
    %5039 = vmatpush1.msra.mxu0 %v4753
    %5040 = vmatprep.subr.mxu0 %v4805
    %5041 = vmatpush1.msra.mxu0 %v4802
    %5042 = vmatprep.subr.mxu0 0.0
    %5043 = vmatpush1.msra.mxu0 0.0
    %5044 = vmatprep.subr.mxu0 0.0
    %5045 = vmatpush1.msra.mxu0 0.0
    %5046 = vmatprep.subr.mxu0 0.0
    %5047 = vmatpush1.msra.mxu0 0.0
    %5048 = vmatprep.subr.mxu0 0.0
    %5049 = vmatpush1.msra.mxu0 0.0
    %5050 = vmatprep.subr.mxu0 0.0
    %5051 = vmatpush1.msra.mxu0 0.0
    %5052 = vmatprep.subr.mxu0 0.0
    %5053 = vmatpush1.msra.mxu0 0.0
    %5054 = vmatprep.subr.mxu0 0.0
    %5055 = vmatpush1.msra.mxu0 0.0
    %5056 = vmatprep.subr.mxu0 0.0
    %5057 = vmatpush1.msra.mxu0 0.0
    %5058 = vmatprep.subr.mxu0 0.0
    %5059 = vmatpush1.msra.mxu0 0.0
    %5060 = vmatprep.subr.mxu0 0.0
    %5061 = vmatpush1.msra.mxu0 0.0
    %5062 = vmatprep.subr.mxu0 0.0
    %5063 = vmatpush1.msra.mxu0 0.0
    %5064 = vmatprep.subr.mxu0 0.0
    %5065 = vmatpush1.msra.mxu0 0.0
    %5066 = vmatprep.subr.mxu0 0.0
    %5067 = vmatpush1.msra.mxu0 0.0
    %5068 = vmatprep.subr.mxu0 0.0
    %5069 = vmatpush1.msra.mxu0 0.0
    %5070 = vmatprep.subr.mxu0 0.0
    %5071 = vmatpush1.msra.mxu0 0.0
    %5072 = vmatprep.subr.mxu0 0.0
    %5073 = vmatpush1.msra.mxu0 0.0
    %5074 = vmatprep.subr.mxu0 0.0
    %5075 = vmatpush1.msra.mxu0 0.0
    %5076 = vmatprep.subr.mxu0 0.0
    %5077 = vmatpush1.msra.mxu0 0.0
    %5078 = vmatprep.subr.mxu0 0.0
    %5079 = vmatpush1.msra.mxu0 0.0
    %5080 = vmatprep.subr.mxu0 0.0
    %5081 = vmatpush1.msra.mxu0 0.0
    %5082 = vmatprep.subr.mxu0 0.0
    %5083 = vmatpush1.msra.mxu0 0.0
    %5084 = vmatprep.subr.mxu0 0.0
    %5085 = vmatpush1.msra.mxu0 0.0
    %5086 = vmatprep.subr.mxu0 0.0
    %5087 = vmatpush1.msra.mxu0 0.0
    %5088 = vmatprep.subr.mxu0 0.0
    %5089 = vmatpush1.msra.mxu0 0.0
    %5090 = vmatprep.subr.mxu0 0.0
    %5091 = vmatpush1.msra.mxu0 0.0
    %5092 = vmatprep.subr.mxu0 0.0
    %5093 = vmatpush1.msra.mxu0 0.0
    %5094 = vmatprep.subr.mxu0 0.0
    %5095 = vmatpush1.msra.mxu0 0.0
    %5096 = vmatprep.subr.mxu0 0.0
    %5097 = vmatpush1.msra.mxu0 0.0
    %5098 = vmatprep.subr.mxu0 0.0
    %5099 = vmatpush1.msra.mxu0 0.0
    %5100 = vmatprep.subr.mxu0 0.0
    %5101 = vmatpush1.msra.mxu0 0.0
    %5102 = vmatprep.mubr.f32.mxu0 0.0
    %5103 = vmatmul.mubr.f32.gmra.mrb[0].mxu0 %v4778
    %v5104 = vpop.f32.mrb[0].mxu0
    %v5105 = vadd.f32 %v4770, %v5104
    %v5106 = vpop.f32.mrb[0].mxu0
    %v5107 = vadd.f32 %v4770, %v5106
    %5108 = vmatprep.mubr.f32.mxu0 0.0
    %5109 = vmatmul.mubr.f32.gmra.mrb[0].mxu0 %v4781
    %v5110 = vpop.f32.mrb[0].mxu0
    %v5111 = vadd.f32 %v4775, %v5110
    %v5112 = vpop.f32.mrb[0].mxu0
    %v5113 = vadd.f32 %v4775, %v5112
    %5114 = vdwg.mxu0
    %5115 = vst [vmem:[%s7] sm:$0xff] %v4874
    %5116 = vst [vmem:[%s7 + $0x8] sm:$0xff] %v4876
    %5117 = vst [vmem:[%s7 + $0x10] sm:$0xff] %v4951
    %5118 = vst [vmem:[%s7 + $0x18] sm:$0xff] %v4953
    %5119 = vst [vmem:[%s7 + $0x20] sm:$0x1] %v4880
    %5120 = vst [vmem:[%s7 + $0x28] sm:$0x1] %v4882
    %5121 = vst [vmem:[%s7 + $0x30] sm:$0x1] %v4957
    %5122 = vst [vmem:[%s7 + $0x38] sm:$0x1] %v4959
    %s5123 = scalar_lea.vmem %s7, 64
    %5124 = vst [vmem:[%s5123] sm:$0xff] %v5028
    %5125 = vst [vmem:[%s5123 + $0x8] sm:$0xff] %v5030
    %5126 = vst [vmem:[%s5123 + $0x10] sm:$0xff] %v5105
    %5127 = vst [vmem:[%s5123 + $0x18] sm:$0xff] %v5107
    %5128 = vst [vmem:[%s5123 + $0x20] sm:$0x1] %v5034
    %5129 = vst [vmem:[%s5123 + $0x28] sm:$0x1] %v5036
    %5130 = vst [vmem:[%s5123 + $0x30] sm:$0x1] %v5111
    %5131 = vst [vmem:[%s5123 + $0x38] sm:$0x1] %v5113
    // Predicated region
    $region38: #{tpu_custom_call.1} parent=1 // pred_check
      _
    $region39: #{tpu_custom_call.1} parent=1 // pred_check_branch
      %5133 = sbr.rel (0) target = $region41
    $region40: #{tpu_custom_call.1} parent=1 // pred_region
      _
    $region41: #{tpu_custom_call.1} parent=1 // pred_fallthru
      _
    // Predicated region
    $region42: #{tpu_custom_call.1} parent=1 // pred_check
      _
    $region43: #{tpu_custom_call.1} parent=1 // pred_check_branch
      %5135 = sbr.rel (0) target = $region45
    $region44: #{tpu_custom_call.1} parent=1 // pred_region
      _
    $region45: #{tpu_custom_call.1} parent=1 // pred_fallthru
      _
    %5136 = vsyncpa [#allocation6], 1
    %5137 = vsyncpa [#allocation8], 1

</llo_original>
